<compile_context>
chip_gen: v6e
topology: v6e:2x2x1
jax: 0.10.0
libtpu: 0.0.40
codegen_flags: <defaults>
</compile_context>

<pallas_src>
import functools
import math

import jax
import jax.numpy as jnp
from jax import lax
from jax.experimental import pallas as pl
from jax.experimental.pallas import tpu as pltpu

# ----------------------------- small GPT-2 config ---------------------------
VOCAB = 64
N_LAYER = 2
N_HEAD = 4
D_MODEL = 32
HEAD_DIM = D_MODEL // N_HEAD
CTX = 8            # context_size of the KV cache (past length, all zeros)
N_POS = 64         # max positions for wpe (must cover CTX + seq_len)
LN_EPS = 1e-5
NEG_INF = -1e30    # scores are fp32; use a dtype-aware constant if that changes

WEIGHTS_PER_LAYER = 12


# ------------------------------- fused kernel -------------------------------
def _fused_gpt2_kernel(ids_ref, wte_ref, wpe_ref, *rest, batch, seq, past_len):
    """Entire forward in a single program.

    rest = (12 weight refs per layer) * N_LAYER, lnf_g, lnf_b, out_ref.
    The fp16 zero KV cache of length `past_len` is modeled exactly: its keys
    contribute logit 0 to every query (softmax denominator only) and its zero
    values contribute nothing to the numerator.
    """
    out_ref = rest[-1]
    lnf_g_ref, lnf_b_ref = rest[-3], rest[-2]
    layer_refs = rest[:-3]

    bt = batch * seq

    def layernorm(x, g_ref, b_ref):
        mu = jnp.mean(x, axis=-1, keepdims=True)
        xc = x - mu
        var = jnp.mean(xc * xc, axis=-1, keepdims=True)
        return xc * lax.rsqrt(var + LN_EPS) * g_ref[...] + b_ref[...]

    def gelu(x):  # gpt2 "gelu_new" (tanh approximation)
        return 0.5 * x * (1.0 + jnp.tanh(0.7978845608028654 * (x + 0.044715 * x * x * x)))

    # --- embeddings: one-hot matmul gather, fully in VMEM ---
    ids = ids_ref[...]                                              # (BT, 1) int32
    vocab_iota = lax.broadcasted_iota(jnp.int32, (bt, VOCAB), 1)
    onehot = (vocab_iota == ids).astype(jnp.float32)                # (BT, VOCAB)
    x = jnp.dot(onehot, wte_ref[...], preferred_element_type=jnp.float32)   # (BT, D)
    pos_emb = wpe_ref[past_len:past_len + seq, :]                   # (T, D) static slice
    x = x + jnp.concatenate([pos_emb] * batch, axis=0)              # rows are b-major

    scale = 1.0 / math.sqrt(HEAD_DIM)
    for li in range(N_LAYER):
        (ln1_g, ln1_b, attn_w, attn_b, proj_w, proj_b,
         ln2_g, ln2_b, fc_w, fc_b, fc2_w, fc2_b) = layer_refs[
            li * WEIGHTS_PER_LAYER:(li + 1) * WEIGHTS_PER_LAYER]

        # ---- attention block ----
        a_in = layernorm(x, ln1_g, ln1_b)
        qkv = jnp.dot(a_in, attn_w[...], preferred_element_type=jnp.float32) + attn_b[...]

        head_outs = []
        for h in range(N_HEAD):
            lo = h * HEAD_DIM
            qh = qkv[:, lo:lo + HEAD_DIM].reshape(batch, seq, HEAD_DIM)
            kh = qkv[:, D_MODEL + lo:D_MODEL + lo + HEAD_DIM].reshape(batch, seq, HEAD_DIM)
            vh = qkv[:, 2 * D_MODEL + lo:2 * D_MODEL + lo + HEAD_DIM].reshape(batch, seq, HEAD_DIM)
            s = jnp.einsum("bqd,bkd->bqk", qh, kh,
                           preferred_element_type=jnp.float32) * scale      # (B, T, T)
            qi = lax.broadcasted_iota(jnp.int32, s.shape, 1)
            ki = lax.broadcasted_iota(jnp.int32, s.shape, 2)
            s = jnp.where(ki <= qi, s, NEG_INF)                    # causal mask, current block
            # `past_len` cached keys are zeros -> logit exactly 0, visible to every
            # query: they only add past_len * exp(-m) to the softmax denominator.
            m = jnp.maximum(jnp.max(s, axis=-1, keepdims=True), 0.0)
            p = jnp.exp(s - m)
            denom = jnp.sum(p, axis=-1, keepdims=True) + float(past_len) * jnp.exp(-m)
            oh = jnp.einsum("bqk,bkd->bqd", p, vh,
                            preferred_element_type=jnp.float32) / denom
            head_outs.append(oh.reshape(bt, HEAD_DIM))
        a = jnp.concatenate(head_outs, axis=-1)                     # (BT, D)
        a = jnp.dot(a, proj_w[...], preferred_element_type=jnp.float32) + proj_b[...]
        x = x + a

        # ---- MLP block ----
        m_in = layernorm(x, ln2_g, ln2_b)
        hmid = gelu(jnp.dot(m_in, fc_w[...], preferred_element_type=jnp.float32) + fc_b[...])
        mo = jnp.dot(hmid, fc2_w[...], preferred_element_type=jnp.float32) + fc2_b[...]
        x = x + mo

    # ---- final LN + tied lm head: logits = xf @ wte^T (no bias, in-kernel transpose) ----
    xf = layernorm(x, lnf_g_ref, lnf_b_ref)
    out_ref[...] = lax.dot_general(
        xf, wte_ref[...],
        dimension_numbers=(((1,), (1,)), ((), ())),
        preferred_element_type=jnp.float32)


# ------------------------------ model forward -------------------------------
def gpt2_forward(params, input_ids, past_len=CTX):
    """Equivalent of StatefulModel.forward: returns logits (B, T, VOCAB)."""
    B, T = input_ids.shape
    ids = input_ids.reshape(B * T, 1).astype(jnp.int32)

    inputs = [ids, params["wte"], params["wpe"]]
    for layer in params["layers"]:
        inputs += [
            layer["ln1_g"], layer["ln1_b"],
            layer["attn_w"], layer["attn_b"],
            layer["proj_w"], layer["proj_b"],
            layer["ln2_g"], layer["ln2_b"],
            layer["fc_w"], layer["fc_b"],
            layer["fc2_w"], layer["fc2_b"],
        ]
    inputs += [params["lnf_g"], params["lnf_b"]]

    in_specs = [pl.BlockSpec(a.shape, lambda i: (0, 0)) for a in inputs]
    kern = functools.partial(_fused_gpt2_kernel, batch=B, seq=T, past_len=past_len)
    logits = pl.pallas_call(
        kern,
        out_shape=jax.ShapeDtypeStruct((B * T, VOCAB), jnp.float32),
        grid=(1,),
        in_specs=in_specs,
        out_specs=pl.BlockSpec((B * T, VOCAB), lambda i: (0, 0)),
        compiler_params=pltpu.CompilerParams(
            dimension_semantics=("arbitrary",)),   # single program, keep on one TC
    )(*inputs)
    return logits.reshape(B, T, VOCAB)


# --------------------------- pure-JAX reference ------------------------------
def reference_forward(params, input_ids, past_len=CTX):
    B, T = input_ids.shape
    pos = past_len + jnp.arange(T)
    x = params["wte"][input_ids] + params["wpe"][pos]                # (B, T, D)

    def ln(x, g, b):
        mu = x.mean(-1, keepdims=True)
        var = ((x - mu) ** 2).mean(-1, keepdims=True)
        return (x - mu) / jnp.sqrt(var + LN_EPS) * g.reshape(-1) + b.reshape(-1)

    def split_heads(t):
        return t.reshape(B, T, N_HEAD, HEAD_DIM).transpose(0, 2, 1, 3)

    for layer in params["layers"]:
        a_in = ln(x, layer["ln1_g"], layer["ln1_b"])
        qkv = a_in @ layer["attn_w"] + layer["attn_b"].reshape(-1)
        q, k, v = map(split_heads, jnp.split(qkv, 3, axis=-1))
        zeros = jnp.zeros((B, N_HEAD, past_len, HEAD_DIM), jnp.float32)   # fp16 zero cache
        k = jnp.concatenate([zeros, k], axis=2)
        v = jnp.concatenate([zeros, v], axis=2)
        s = jnp.einsum("bhqd,bhkd->bhqk", q, k) / math.sqrt(HEAD_DIM)
        qpos = past_len + jnp.arange(T)[:, None]
        kpos = jnp.arange(past_len + T)[None, :]
        s = jnp.where(kpos <= qpos, s, NEG_INF)
        p = jax.nn.softmax(s, axis=-1)
        o = jnp.einsum("bhqk,bhkd->bhqd", p, v).transpose(0, 2, 1, 3).reshape(B, T, D_MODEL)
        x = x + o @ layer["proj_w"] + layer["proj_b"].reshape(-1)
        m_in = ln(x, layer["ln2_g"], layer["ln2_b"])
        h = m_in @ layer["fc_w"] + layer["fc_b"].reshape(-1)
        h = 0.5 * h * (1.0 + jnp.tanh(0.7978845608028654 * (h + 0.044715 * h ** 3)))
        x = x + h @ layer["fc2_w"] + layer["fc2_b"].reshape(-1)
    x = ln(x, params["lnf_g"], params["lnf_b"])
    return x @ params["wte"].T


# ------------------------------ param init ----------------------------------
def init_params(key):
    std = 0.02
    keys = iter(jax.random.split(key, 2 + 4 * N_LAYER))
    params = {
        "wte": std * jax.random.normal(next(keys), (VOCAB, D_MODEL), jnp.float32),
        "wpe": std * jax.random.normal(next(keys), (N_POS, D_MODEL), jnp.float32),
        "lnf_g": jnp.ones((1, D_MODEL), jnp.float32),
        "lnf_b": jnp.zeros((1, D_MODEL), jnp.float32),
        "layers": [],
    }
    for _ in range(N_LAYER):
        params["layers"].append({
            "ln1_g": jnp.ones((1, D_MODEL), jnp.float32),
            "ln1_b": jnp.zeros((1, D_MODEL), jnp.float32),
            "attn_w": std * jax.random.normal(next(keys), (D_MODEL, 3 * D_MODEL), jnp.float32),
            "attn_b": jnp.zeros((1, 3 * D_MODEL), jnp.float32),
            "proj_w": std * jax.random.normal(next(keys), (D_MODEL, D_MODEL), jnp.float32),
            "proj_b": jnp.zeros((1, D_MODEL), jnp.float32),
            "ln2_g": jnp.ones((1, D_MODEL), jnp.float32),
            "ln2_b": jnp.zeros((1, D_MODEL), jnp.float32),
            "fc_w": std * jax.random.normal(next(keys), (D_MODEL, 4 * D_MODEL), jnp.float32),
            "fc_b": jnp.zeros((1, 4 * D_MODEL), jnp.float32),
            "fc2_w": std * jax.random.normal(next(keys), (4 * D_MODEL, D_MODEL), jnp.float32),
            "fc2_b": jnp.zeros((1, D_MODEL), jnp.float32),
        })
    return params


# --------------------------------- main --------------------------------------
if __name__ == "__main__":
    key = jax.random.PRNGKey(0)
    pkey, ikey = jax.random.split(key)
    params = init_params(pkey)

    batch, seq = 2, CTX  # seq == context_size, so the cache is not "reset" (it is zeros either way)
    input_ids = jax.random.randint(ikey, (batch, seq), 0, VOCAB, dtype=jnp.int32)

    logits = jax.block_until_ready(gpt2_forward(params, input_ids, past_len=CTX))
    assert logits.shape == (batch, seq, VOCAB)
    assert bool(jnp.all(jnp.isfinite(logits)))

    ref = reference_forward(params, input_ids, past_len=CTX)
    err = float(jnp.max(jnp.abs(logits - ref)))
    assert err < 2e-3, f"mismatch vs pure-JAX reference: {err}"

    # TODO(synk): the updated past_key_values (KV cache write-back) is held by the
    # PyTorch module as internal state and not returned from forward, so it is not
    # materialized here.
    print("KERNEL_OK")
</pallas_src>

<mosaic_0001>
module attributes {stable_mosaic.version = 11 : i64} {
  func.func @_fused_gpt2_kernel(%arg0: i32, %arg1: memref<16x1xi32, #tpu.memory_space<vmem>>, %arg2: memref<64x32xf32, #tpu.memory_space<vmem>>, %arg3: memref<64x32xf32, #tpu.memory_space<vmem>>, %arg4: memref<1x32xf32, #tpu.memory_space<vmem>>, %arg5: memref<1x32xf32, #tpu.memory_space<vmem>>, %arg6: memref<32x96xf32, #tpu.memory_space<vmem>>, %arg7: memref<1x96xf32, #tpu.memory_space<vmem>>, %arg8: memref<32x32xf32, #tpu.memory_space<vmem>>, %arg9: memref<1x32xf32, #tpu.memory_space<vmem>>, %arg10: memref<1x32xf32, #tpu.memory_space<vmem>>, %arg11: memref<1x32xf32, #tpu.memory_space<vmem>>, %arg12: memref<32x128xf32, #tpu.memory_space<vmem>>, %arg13: memref<1x128xf32, #tpu.memory_space<vmem>>, %arg14: memref<128x32xf32, #tpu.memory_space<vmem>>, %arg15: memref<1x32xf32, #tpu.memory_space<vmem>>, %arg16: memref<1x32xf32, #tpu.memory_space<vmem>>, %arg17: memref<1x32xf32, #tpu.memory_space<vmem>>, %arg18: memref<32x96xf32, #tpu.memory_space<vmem>>, %arg19: memref<1x96xf32, #tpu.memory_space<vmem>>, %arg20: memref<32x32xf32, #tpu.memory_space<vmem>>, %arg21: memref<1x32xf32, #tpu.memory_space<vmem>>, %arg22: memref<1x32xf32, #tpu.memory_space<vmem>>, %arg23: memref<1x32xf32, #tpu.memory_space<vmem>>, %arg24: memref<32x128xf32, #tpu.memory_space<vmem>>, %arg25: memref<1x128xf32, #tpu.memory_space<vmem>>, %arg26: memref<128x32xf32, #tpu.memory_space<vmem>>, %arg27: memref<1x32xf32, #tpu.memory_space<vmem>>, %arg28: memref<1x32xf32, #tpu.memory_space<vmem>>, %arg29: memref<1x32xf32, #tpu.memory_space<vmem>>, %arg30: memref<16x64xf32, #tpu.memory_space<vmem>>) attributes {dimension_semantics = [#tpu.dimension_semantics<arbitrary>], iteration_bounds = array<i64: 1>, scalar_prefetch = 0 : i64, scratch_operands = 0 : i64, tpu.core_type = #tpu.core_type<tc>, window_params = [{pipeline_mode = #tpu.pipeline_mode<synchronous>, transform_indices = @transform_0, window_bounds = array<i64: 16, 1>}, {pipeline_mode = #tpu.pipeline_mode<synchronous>, transform_indices = @transform_1, window_bounds = array<i64: 64, 32>}, {pipeline_mode = #tpu.pipeline_mode<synchronous>, transform_indices = @transform_2, window_bounds = array<i64: 64, 32>}, {pipeline_mode = #tpu.pipeline_mode<synchronous>, transform_indices = @transform_3, window_bounds = array<i64: 1, 32>}, {pipeline_mode = #tpu.pipeline_mode<synchronous>, transform_indices = @transform_4, window_bounds = array<i64: 1, 32>}, {pipeline_mode = #tpu.pipeline_mode<synchronous>, transform_indices = @transform_5, window_bounds = array<i64: 32, 96>}, {pipeline_mode = #tpu.pipeline_mode<synchronous>, transform_indices = @transform_6, window_bounds = array<i64: 1, 96>}, {pipeline_mode = #tpu.pipeline_mode<synchronous>, transform_indices = @transform_7, window_bounds = array<i64: 32, 32>}, {pipeline_mode = #tpu.pipeline_mode<synchronous>, transform_indices = @transform_8, window_bounds = array<i64: 1, 32>}, {pipeline_mode = #tpu.pipeline_mode<synchronous>, transform_indices = @transform_9, window_bounds = array<i64: 1, 32>}, {pipeline_mode = #tpu.pipeline_mode<synchronous>, transform_indices = @transform_10, window_bounds = array<i64: 1, 32>}, {pipeline_mode = #tpu.pipeline_mode<synchronous>, transform_indices = @transform_11, window_bounds = array<i64: 32, 128>}, {pipeline_mode = #tpu.pipeline_mode<synchronous>, transform_indices = @transform_12, window_bounds = array<i64: 1, 128>}, {pipeline_mode = #tpu.pipeline_mode<synchronous>, transform_indices = @transform_13, window_bounds = array<i64: 128, 32>}, {pipeline_mode = #tpu.pipeline_mode<synchronous>, transform_indices = @transform_14, window_bounds = array<i64: 1, 32>}, {pipeline_mode = #tpu.pipeline_mode<synchronous>, transform_indices = @transform_15, window_bounds = array<i64: 1, 32>}, {pipeline_mode = #tpu.pipeline_mode<synchronous>, transform_indices = @transform_16, window_bounds = array<i64: 1, 32>}, {pipeline_mode = #tpu.pipeline_mode<synchronous>, transform_indices = @transform_17, window_bounds = array<i64: 32, 96>}, {pipeline_mode = #tpu.pipeline_mode<synchronous>, transform_indices = @transform_18, window_bounds = array<i64: 1, 96>}, {pipeline_mode = #tpu.pipeline_mode<synchronous>, transform_indices = @transform_19, window_bounds = array<i64: 32, 32>}, {pipeline_mode = #tpu.pipeline_mode<synchronous>, transform_indices = @transform_20, window_bounds = array<i64: 1, 32>}, {pipeline_mode = #tpu.pipeline_mode<synchronous>, transform_indices = @transform_21, window_bounds = array<i64: 1, 32>}, {pipeline_mode = #tpu.pipeline_mode<synchronous>, transform_indices = @transform_22, window_bounds = array<i64: 1, 32>}, {pipeline_mode = #tpu.pipeline_mode<synchronous>, transform_indices = @transform_23, window_bounds = array<i64: 32, 128>}, {pipeline_mode = #tpu.pipeline_mode<synchronous>, transform_indices = @transform_24, window_bounds = array<i64: 1, 128>}, {pipeline_mode = #tpu.pipeline_mode<synchronous>, transform_indices = @transform_25, window_bounds = array<i64: 128, 32>}, {pipeline_mode = #tpu.pipeline_mode<synchronous>, transform_indices = @transform_26, window_bounds = array<i64: 1, 32>}, {pipeline_mode = #tpu.pipeline_mode<synchronous>, transform_indices = @transform_27, window_bounds = array<i64: 1, 32>}, {pipeline_mode = #tpu.pipeline_mode<synchronous>, transform_indices = @transform_28, window_bounds = array<i64: 1, 32>}, {pipeline_mode = #tpu.pipeline_mode<synchronous>, transform_indices = @transform_29, window_bounds = array<i64: 16, 64>}]} {
    %c0 = arith.constant 0 : index
    %c0_0 = arith.constant 0 : index
    %0 = vector.load %arg1[%c0, %c0_0] : memref<16x1xi32, #tpu.memory_space<vmem>>, vector<16x1xi32>
    %1 = tpu.iota {dimensions = array<i32: 1>} : vector<16x64xi32>
    %2 = vector.broadcast %0 : vector<16x1xi32> to vector<16x64xi32>
    %3 = arith.cmpi eq, %1, %2 : vector<16x64xi32>
    %4 = arith.extui %3 : vector<16x64xi1> to vector<16x64xi32>
    %5 = arith.sitofp %4 : vector<16x64xi32> to vector<16x64xf32>
    %c0_1 = arith.constant 0 : index
    %c0_2 = arith.constant 0 : index
    %6 = vector.load %arg2[%c0_1, %c0_2] : memref<64x32xf32, #tpu.memory_space<vmem>>, vector<64x32xf32>
    %cst = arith.constant dense<0.000000e+00> : vector<16x32xf32>
    %7 = tpu.matmul %5, %6, %cst {dimension_numbers = #tpu.dot_dimension_numbers<[1], [0], [0], [1], [0, 0, 1, 1], [], []>} : vector<16x64xf32>, vector<64x32xf32>, vector<16x32xf32> -> vector<16x32xf32>
    %c8 = arith.constant 8 : index
    %c0_3 = arith.constant 0 : index
    %8 = vector.load %arg3[%c8, %c0_3] : memref<64x32xf32, #tpu.memory_space<vmem>>, vector<8x32xf32>
    %9 = tpu.concatenate %8, %8 in 0 : vector<8x32xf32>, vector<8x32xf32> -> vector<16x32xf32>
    %10 = arith.addf %7, %9 : vector<16x32xf32>
    %cst_4 = arith.constant dense<0.000000e+00> : vector<16xf32>
    %11 = vector.multi_reduction <add>, %10, %cst_4 [1] : vector<16x32xf32> to vector<16xf32>
    %12 = vector.shape_cast %11 : vector<16xf32> to vector<16x1xf32>
    %cst_5 = arith.constant 3.200000e+01 : f32
    %13 = vector.broadcast %cst_5 : f32 to vector<16x1xf32>
    %14 = arith.divf %12, %13 : vector<16x1xf32>
    %15 = vector.broadcast %14 : vector<16x1xf32> to vector<16x32xf32>
    %16 = arith.subf %10, %15 : vector<16x32xf32>
    %17 = arith.mulf %16, %16 : vector<16x32xf32>
    %cst_6 = arith.constant dense<0.000000e+00> : vector<16xf32>
    %18 = vector.multi_reduction <add>, %17, %cst_6 [1] : vector<16x32xf32> to vector<16xf32>
    %19 = vector.shape_cast %18 : vector<16xf32> to vector<16x1xf32>
    %cst_7 = arith.constant 3.200000e+01 : f32
    %20 = vector.broadcast %cst_7 : f32 to vector<16x1xf32>
    %21 = arith.divf %19, %20 : vector<16x1xf32>
    %cst_8 = arith.constant 9.99999974E-6 : f32
    %22 = vector.broadcast %cst_8 : f32 to vector<16x1xf32>
    %23 = arith.addf %21, %22 : vector<16x1xf32>
    %24 = math.rsqrt %23 : vector<16x1xf32>
    %25 = vector.broadcast %24 : vector<16x1xf32> to vector<16x32xf32>
    %26 = arith.mulf %16, %25 : vector<16x32xf32>
    %c0_9 = arith.constant 0 : index
    %c0_10 = arith.constant 0 : index
    %27 = vector.load %arg4[%c0_9, %c0_10] : memref<1x32xf32, #tpu.memory_space<vmem>>, vector<1x32xf32>
    %28 = vector.broadcast %27 : vector<1x32xf32> to vector<16x32xf32>
    %29 = arith.mulf %26, %28 : vector<16x32xf32>
    %c0_11 = arith.constant 0 : index
    %c0_12 = arith.constant 0 : index
    %30 = vector.load %arg5[%c0_11, %c0_12] : memref<1x32xf32, #tpu.memory_space<vmem>>, vector<1x32xf32>
    %31 = vector.broadcast %30 : vector<1x32xf32> to vector<16x32xf32>
    %32 = arith.addf %29, %31 : vector<16x32xf32>
    %c0_13 = arith.constant 0 : index
    %c0_14 = arith.constant 0 : index
    %33 = vector.load %arg6[%c0_13, %c0_14] : memref<32x96xf32, #tpu.memory_space<vmem>>, vector<32x96xf32>
    %cst_15 = arith.constant dense<0.000000e+00> : vector<16x96xf32>
    %34 = tpu.matmul %32, %33, %cst_15 {dimension_numbers = #tpu.dot_dimension_numbers<[1], [0], [0], [1], [0, 0, 1, 1], [], []>} : vector<16x32xf32>, vector<32x96xf32>, vector<16x96xf32> -> vector<16x96xf32>
    %c0_16 = arith.constant 0 : index
    %c0_17 = arith.constant 0 : index
    %35 = vector.load %arg7[%c0_16, %c0_17] : memref<1x96xf32, #tpu.memory_space<vmem>>, vector<1x96xf32>
    %36 = vector.broadcast %35 : vector<1x96xf32> to vector<16x96xf32>
    %37 = arith.addf %34, %36 : vector<16x96xf32>
    %38 = vector.extract_strided_slice %37 {offsets = [0, 0], sizes = [16, 8], strides = [1, 1]} : vector<16x96xf32> to vector<16x8xf32>
    %39 = vector.shape_cast %38 : vector<16x8xf32> to vector<2x8x8xf32>
    %40 = vector.extract_strided_slice %37 {offsets = [0, 32], sizes = [16, 8], strides = [1, 1]} : vector<16x96xf32> to vector<16x8xf32>
    %41 = vector.shape_cast %40 : vector<16x8xf32> to vector<2x8x8xf32>
    %42 = vector.extract_strided_slice %37 {offsets = [0, 64], sizes = [16, 8], strides = [1, 1]} : vector<16x96xf32> to vector<16x8xf32>
    %43 = vector.shape_cast %42 : vector<16x8xf32> to vector<2x8x8xf32>
    "tpu.trace_start"() <{level = 10 : i32, message = "bqd,bkd->bqk"}> : () -> ()
    %cst_18 = arith.constant dense<0.000000e+00> : vector<2x8x8xf32>
    %44 = tpu.matmul %39, %41, %cst_18 {dimension_numbers = #tpu.dot_dimension_numbers<[2], [2], [1], [1], [0, 0, 0, 1, 1, 1], [0], [0]>} : vector<2x8x8xf32>, vector<2x8x8xf32>, vector<2x8x8xf32> -> vector<2x8x8xf32>
    "tpu.trace_stop"() : () -> ()
    %cst_19 = arith.constant 0.353553385 : f32
    %45 = vector.broadcast %cst_19 : f32 to vector<2x8x8xf32>
    %46 = arith.mulf %44, %45 : vector<2x8x8xf32>
    %47 = tpu.iota {dimensions = array<i32: 1>} : vector<2x8x8xi32>
    %48 = tpu.iota {dimensions = array<i32: 2>} : vector<2x8x8xi32>
    %49 = arith.cmpi sle, %48, %47 : vector<2x8x8xi32>
    %cst_20 = arith.constant -1.000000e+30 : f32
    %50 = vector.broadcast %cst_20 : f32 to vector<2x8x8xf32>
    %51 = arith.select %49, %46, %50 : vector<2x8x8xi1>, vector<2x8x8xf32>
    %cst_21 = arith.constant dense<0xFF800000> : vector<2x8xf32>
    %52 = vector.multi_reduction <maximumf>, %51, %cst_21 [2] : vector<2x8x8xf32> to vector<2x8xf32>
    %53 = vector.shape_cast %52 : vector<2x8xf32> to vector<2x8x1xf32>
    %cst_22 = arith.constant 0.000000e+00 : f32
    %54 = vector.broadcast %cst_22 : f32 to vector<2x8x1xf32>
    %55 = arith.maximumf %53, %54 : vector<2x8x1xf32>
    %56 = vector.broadcast %55 : vector<2x8x1xf32> to vector<2x8x8xf32>
    %57 = arith.subf %51, %56 : vector<2x8x8xf32>
    %58 = math.exp %57 : vector<2x8x8xf32>
    %cst_23 = arith.constant dense<0.000000e+00> : vector<2x8xf32>
    %59 = vector.multi_reduction <add>, %58, %cst_23 [2] : vector<2x8x8xf32> to vector<2x8xf32>
    %60 = vector.shape_cast %59 : vector<2x8xf32> to vector<2x8x1xf32>
    %cst_24 = arith.constant 0.000000e+00 : f32
    %61 = vector.broadcast %cst_24 : f32 to vector<2x8x1xf32>
    %62 = arith.subf %61, %55 : vector<2x8x1xf32>
    %63 = math.exp %62 : vector<2x8x1xf32>
    %cst_25 = arith.constant 8.000000e+00 : f32
    %64 = vector.broadcast %cst_25 : f32 to vector<2x8x1xf32>
    %65 = arith.mulf %64, %63 : vector<2x8x1xf32>
    %66 = arith.addf %60, %65 : vector<2x8x1xf32>
    "tpu.trace_start"() <{level = 10 : i32, message = "bqk,bkd->bqd"}> : () -> ()
    %cst_26 = arith.constant dense<0.000000e+00> : vector<2x8x8xf32>
    %67 = tpu.matmul %58, %43, %cst_26 {dimension_numbers = #tpu.dot_dimension_numbers<[2], [1], [1], [2], [0, 0, 0, 1, 1, 2], [0], [0]>} : vector<2x8x8xf32>, vector<2x8x8xf32>, vector<2x8x8xf32> -> vector<2x8x8xf32>
    "tpu.trace_stop"() : () -> ()
    %68 = vector.broadcast %66 : vector<2x8x1xf32> to vector<2x8x8xf32>
    %69 = arith.divf %67, %68 : vector<2x8x8xf32>
    %70 = vector.shape_cast %69 : vector<2x8x8xf32> to vector<16x8xf32>
    %71 = vector.extract_strided_slice %37 {offsets = [0, 8], sizes = [16, 8], strides = [1, 1]} : vector<16x96xf32> to vector<16x8xf32>
    %72 = vector.shape_cast %71 : vector<16x8xf32> to vector<2x8x8xf32>
    %73 = vector.extract_strided_slice %37 {offsets = [0, 40], sizes = [16, 8], strides = [1, 1]} : vector<16x96xf32> to vector<16x8xf32>
    %74 = vector.shape_cast %73 : vector<16x8xf32> to vector<2x8x8xf32>
    %75 = vector.extract_strided_slice %37 {offsets = [0, 72], sizes = [16, 8], strides = [1, 1]} : vector<16x96xf32> to vector<16x8xf32>
    %76 = vector.shape_cast %75 : vector<16x8xf32> to vector<2x8x8xf32>
    "tpu.trace_start"() <{level = 10 : i32, message = "bqd,bkd->bqk"}> : () -> ()
    %cst_27 = arith.constant dense<0.000000e+00> : vector<2x8x8xf32>
    %77 = tpu.matmul %72, %74, %cst_27 {dimension_numbers = #tpu.dot_dimension_numbers<[2], [2], [1], [1], [0, 0, 0, 1, 1, 1], [0], [0]>} : vector<2x8x8xf32>, vector<2x8x8xf32>, vector<2x8x8xf32> -> vector<2x8x8xf32>
    "tpu.trace_stop"() : () -> ()
    %cst_28 = arith.constant 0.353553385 : f32
    %78 = vector.broadcast %cst_28 : f32 to vector<2x8x8xf32>
    %79 = arith.mulf %77, %78 : vector<2x8x8xf32>
    %80 = tpu.iota {dimensions = array<i32: 1>} : vector<2x8x8xi32>
    %81 = tpu.iota {dimensions = array<i32: 2>} : vector<2x8x8xi32>
    %82 = arith.cmpi sle, %81, %80 : vector<2x8x8xi32>
    %cst_29 = arith.constant -1.000000e+30 : f32
    %83 = vector.broadcast %cst_29 : f32 to vector<2x8x8xf32>
    %84 = arith.select %82, %79, %83 : vector<2x8x8xi1>, vector<2x8x8xf32>
    %cst_30 = arith.constant dense<0xFF800000> : vector<2x8xf32>
    %85 = vector.multi_reduction <maximumf>, %84, %cst_30 [2] : vector<2x8x8xf32> to vector<2x8xf32>
    %86 = vector.shape_cast %85 : vector<2x8xf32> to vector<2x8x1xf32>
    %cst_31 = arith.constant 0.000000e+00 : f32
    %87 = vector.broadcast %cst_31 : f32 to vector<2x8x1xf32>
    %88 = arith.maximumf %86, %87 : vector<2x8x1xf32>
    %89 = vector.broadcast %88 : vector<2x8x1xf32> to vector<2x8x8xf32>
    %90 = arith.subf %84, %89 : vector<2x8x8xf32>
    %91 = math.exp %90 : vector<2x8x8xf32>
    %cst_32 = arith.constant dense<0.000000e+00> : vector<2x8xf32>
    %92 = vector.multi_reduction <add>, %91, %cst_32 [2] : vector<2x8x8xf32> to vector<2x8xf32>
    %93 = vector.shape_cast %92 : vector<2x8xf32> to vector<2x8x1xf32>
    %cst_33 = arith.constant 0.000000e+00 : f32
    %94 = vector.broadcast %cst_33 : f32 to vector<2x8x1xf32>
    %95 = arith.subf %94, %88 : vector<2x8x1xf32>
    %96 = math.exp %95 : vector<2x8x1xf32>
    %cst_34 = arith.constant 8.000000e+00 : f32
    %97 = vector.broadcast %cst_34 : f32 to vector<2x8x1xf32>
    %98 = arith.mulf %97, %96 : vector<2x8x1xf32>
    %99 = arith.addf %93, %98 : vector<2x8x1xf32>
    "tpu.trace_start"() <{level = 10 : i32, message = "bqk,bkd->bqd"}> : () -> ()
    %cst_35 = arith.constant dense<0.000000e+00> : vector<2x8x8xf32>
    %100 = tpu.matmul %91, %76, %cst_35 {dimension_numbers = #tpu.dot_dimension_numbers<[2], [1], [1], [2], [0, 0, 0, 1, 1, 2], [0], [0]>} : vector<2x8x8xf32>, vector<2x8x8xf32>, vector<2x8x8xf32> -> vector<2x8x8xf32>
    "tpu.trace_stop"() : () -> ()
    %101 = vector.broadcast %99 : vector<2x8x1xf32> to vector<2x8x8xf32>
    %102 = arith.divf %100, %101 : vector<2x8x8xf32>
    %103 = vector.shape_cast %102 : vector<2x8x8xf32> to vector<16x8xf32>
    %104 = vector.extract_strided_slice %37 {offsets = [0, 16], sizes = [16, 8], strides = [1, 1]} : vector<16x96xf32> to vector<16x8xf32>
    %105 = vector.shape_cast %104 : vector<16x8xf32> to vector<2x8x8xf32>
    %106 = vector.extract_strided_slice %37 {offsets = [0, 48], sizes = [16, 8], strides = [1, 1]} : vector<16x96xf32> to vector<16x8xf32>
    %107 = vector.shape_cast %106 : vector<16x8xf32> to vector<2x8x8xf32>
    %108 = vector.extract_strided_slice %37 {offsets = [0, 80], sizes = [16, 8], strides = [1, 1]} : vector<16x96xf32> to vector<16x8xf32>
    %109 = vector.shape_cast %108 : vector<16x8xf32> to vector<2x8x8xf32>
    "tpu.trace_start"() <{level = 10 : i32, message = "bqd,bkd->bqk"}> : () -> ()
    %cst_36 = arith.constant dense<0.000000e+00> : vector<2x8x8xf32>
    %110 = tpu.matmul %105, %107, %cst_36 {dimension_numbers = #tpu.dot_dimension_numbers<[2], [2], [1], [1], [0, 0, 0, 1, 1, 1], [0], [0]>} : vector<2x8x8xf32>, vector<2x8x8xf32>, vector<2x8x8xf32> -> vector<2x8x8xf32>
    "tpu.trace_stop"() : () -> ()
    %cst_37 = arith.constant 0.353553385 : f32
    %111 = vector.broadcast %cst_37 : f32 to vector<2x8x8xf32>
    %112 = arith.mulf %110, %111 : vector<2x8x8xf32>
    %113 = tpu.iota {dimensions = array<i32: 1>} : vector<2x8x8xi32>
    %114 = tpu.iota {dimensions = array<i32: 2>} : vector<2x8x8xi32>
    %115 = arith.cmpi sle, %114, %113 : vector<2x8x8xi32>
    %cst_38 = arith.constant -1.000000e+30 : f32
    %116 = vector.broadcast %cst_38 : f32 to vector<2x8x8xf32>
    %117 = arith.select %115, %112, %116 : vector<2x8x8xi1>, vector<2x8x8xf32>
    %cst_39 = arith.constant dense<0xFF800000> : vector<2x8xf32>
    %118 = vector.multi_reduction <maximumf>, %117, %cst_39 [2] : vector<2x8x8xf32> to vector<2x8xf32>
    %119 = vector.shape_cast %118 : vector<2x8xf32> to vector<2x8x1xf32>
    %cst_40 = arith.constant 0.000000e+00 : f32
    %120 = vector.broadcast %cst_40 : f32 to vector<2x8x1xf32>
    %121 = arith.maximumf %119, %120 : vector<2x8x1xf32>
    %122 = vector.broadcast %121 : vector<2x8x1xf32> to vector<2x8x8xf32>
    %123 = arith.subf %117, %122 : vector<2x8x8xf32>
    %124 = math.exp %123 : vector<2x8x8xf32>
    %cst_41 = arith.constant dense<0.000000e+00> : vector<2x8xf32>
    %125 = vector.multi_reduction <add>, %124, %cst_41 [2] : vector<2x8x8xf32> to vector<2x8xf32>
    %126 = vector.shape_cast %125 : vector<2x8xf32> to vector<2x8x1xf32>
    %cst_42 = arith.constant 0.000000e+00 : f32
    %127 = vector.broadcast %cst_42 : f32 to vector<2x8x1xf32>
    %128 = arith.subf %127, %121 : vector<2x8x1xf32>
    %129 = math.exp %128 : vector<2x8x1xf32>
    %cst_43 = arith.constant 8.000000e+00 : f32
    %130 = vector.broadcast %cst_43 : f32 to vector<2x8x1xf32>
    %131 = arith.mulf %130, %129 : vector<2x8x1xf32>
    %132 = arith.addf %126, %131 : vector<2x8x1xf32>
    "tpu.trace_start"() <{level = 10 : i32, message = "bqk,bkd->bqd"}> : () -> ()
    %cst_44 = arith.constant dense<0.000000e+00> : vector<2x8x8xf32>
    %133 = tpu.matmul %124, %109, %cst_44 {dimension_numbers = #tpu.dot_dimension_numbers<[2], [1], [1], [2], [0, 0, 0, 1, 1, 2], [0], [0]>} : vector<2x8x8xf32>, vector<2x8x8xf32>, vector<2x8x8xf32> -> vector<2x8x8xf32>
    "tpu.trace_stop"() : () -> ()
    %134 = vector.broadcast %132 : vector<2x8x1xf32> to vector<2x8x8xf32>
    %135 = arith.divf %133, %134 : vector<2x8x8xf32>
    %136 = vector.shape_cast %135 : vector<2x8x8xf32> to vector<16x8xf32>
    %137 = vector.extract_strided_slice %37 {offsets = [0, 24], sizes = [16, 8], strides = [1, 1]} : vector<16x96xf32> to vector<16x8xf32>
    %138 = vector.shape_cast %137 : vector<16x8xf32> to vector<2x8x8xf32>
    %139 = vector.extract_strided_slice %37 {offsets = [0, 56], sizes = [16, 8], strides = [1, 1]} : vector<16x96xf32> to vector<16x8xf32>
    %140 = vector.shape_cast %139 : vector<16x8xf32> to vector<2x8x8xf32>
    %141 = vector.extract_strided_slice %37 {offsets = [0, 88], sizes = [16, 8], strides = [1, 1]} : vector<16x96xf32> to vector<16x8xf32>
    %142 = vector.shape_cast %141 : vector<16x8xf32> to vector<2x8x8xf32>
    "tpu.trace_start"() <{level = 10 : i32, message = "bqd,bkd->bqk"}> : () -> ()
    %cst_45 = arith.constant dense<0.000000e+00> : vector<2x8x8xf32>
    %143 = tpu.matmul %138, %140, %cst_45 {dimension_numbers = #tpu.dot_dimension_numbers<[2], [2], [1], [1], [0, 0, 0, 1, 1, 1], [0], [0]>} : vector<2x8x8xf32>, vector<2x8x8xf32>, vector<2x8x8xf32> -> vector<2x8x8xf32>
    "tpu.trace_stop"() : () -> ()
    %cst_46 = arith.constant 0.353553385 : f32
    %144 = vector.broadcast %cst_46 : f32 to vector<2x8x8xf32>
    %145 = arith.mulf %143, %144 : vector<2x8x8xf32>
    %146 = tpu.iota {dimensions = array<i32: 1>} : vector<2x8x8xi32>
    %147 = tpu.iota {dimensions = array<i32: 2>} : vector<2x8x8xi32>
    %148 = arith.cmpi sle, %147, %146 : vector<2x8x8xi32>
    %cst_47 = arith.constant -1.000000e+30 : f32
    %149 = vector.broadcast %cst_47 : f32 to vector<2x8x8xf32>
    %150 = arith.select %148, %145, %149 : vector<2x8x8xi1>, vector<2x8x8xf32>
    %cst_48 = arith.constant dense<0xFF800000> : vector<2x8xf32>
    %151 = vector.multi_reduction <maximumf>, %150, %cst_48 [2] : vector<2x8x8xf32> to vector<2x8xf32>
    %152 = vector.shape_cast %151 : vector<2x8xf32> to vector<2x8x1xf32>
    %cst_49 = arith.constant 0.000000e+00 : f32
    %153 = vector.broadcast %cst_49 : f32 to vector<2x8x1xf32>
    %154 = arith.maximumf %152, %153 : vector<2x8x1xf32>
    %155 = vector.broadcast %154 : vector<2x8x1xf32> to vector<2x8x8xf32>
    %156 = arith.subf %150, %155 : vector<2x8x8xf32>
    %157 = math.exp %156 : vector<2x8x8xf32>
    %cst_50 = arith.constant dense<0.000000e+00> : vector<2x8xf32>
    %158 = vector.multi_reduction <add>, %157, %cst_50 [2] : vector<2x8x8xf32> to vector<2x8xf32>
    %159 = vector.shape_cast %158 : vector<2x8xf32> to vector<2x8x1xf32>
    %cst_51 = arith.constant 0.000000e+00 : f32
    %160 = vector.broadcast %cst_51 : f32 to vector<2x8x1xf32>
    %161 = arith.subf %160, %154 : vector<2x8x1xf32>
    %162 = math.exp %161 : vector<2x8x1xf32>
    %cst_52 = arith.constant 8.000000e+00 : f32
    %163 = vector.broadcast %cst_52 : f32 to vector<2x8x1xf32>
    %164 = arith.mulf %163, %162 : vector<2x8x1xf32>
    %165 = arith.addf %159, %164 : vector<2x8x1xf32>
    "tpu.trace_start"() <{level = 10 : i32, message = "bqk,bkd->bqd"}> : () -> ()
    %cst_53 = arith.constant dense<0.000000e+00> : vector<2x8x8xf32>
    %166 = tpu.matmul %157, %142, %cst_53 {dimension_numbers = #tpu.dot_dimension_numbers<[2], [1], [1], [2], [0, 0, 0, 1, 1, 2], [0], [0]>} : vector<2x8x8xf32>, vector<2x8x8xf32>, vector<2x8x8xf32> -> vector<2x8x8xf32>
    "tpu.trace_stop"() : () -> ()
    %167 = vector.broadcast %165 : vector<2x8x1xf32> to vector<2x8x8xf32>
    %168 = arith.divf %166, %167 : vector<2x8x8xf32>
    %169 = vector.shape_cast %168 : vector<2x8x8xf32> to vector<16x8xf32>
    %170 = tpu.concatenate %70, %103, %136, %169 in 1 : vector<16x8xf32>, vector<16x8xf32>, vector<16x8xf32>, vector<16x8xf32> -> vector<16x32xf32>
    %c0_54 = arith.constant 0 : index
    %c0_55 = arith.constant 0 : index
    %171 = vector.load %arg8[%c0_54, %c0_55] : memref<32x32xf32, #tpu.memory_space<vmem>>, vector<32x32xf32>
    %cst_56 = arith.constant dense<0.000000e+00> : vector<16x32xf32>
    %172 = tpu.matmul %170, %171, %cst_56 {dimension_numbers = #tpu.dot_dimension_numbers<[1], [0], [0], [1], [0, 0, 1, 1], [], []>} : vector<16x32xf32>, vector<32x32xf32>, vector<16x32xf32> -> vector<16x32xf32>
    %c0_57 = arith.constant 0 : index
    %c0_58 = arith.constant 0 : index
    %173 = vector.load %arg9[%c0_57, %c0_58] : memref<1x32xf32, #tpu.memory_space<vmem>>, vector<1x32xf32>
    %174 = vector.broadcast %173 : vector<1x32xf32> to vector<16x32xf32>
    %175 = arith.addf %172, %174 : vector<16x32xf32>
    %176 = arith.addf %10, %175 : vector<16x32xf32>
    %cst_59 = arith.constant dense<0.000000e+00> : vector<16xf32>
    %177 = vector.multi_reduction <add>, %176, %cst_59 [1] : vector<16x32xf32> to vector<16xf32>
    %178 = vector.shape_cast %177 : vector<16xf32> to vector<16x1xf32>
    %cst_60 = arith.constant 3.200000e+01 : f32
    %179 = vector.broadcast %cst_60 : f32 to vector<16x1xf32>
    %180 = arith.divf %178, %179 : vector<16x1xf32>
    %181 = vector.broadcast %180 : vector<16x1xf32> to vector<16x32xf32>
    %182 = arith.subf %176, %181 : vector<16x32xf32>
    %183 = arith.mulf %182, %182 : vector<16x32xf32>
    %cst_61 = arith.constant dense<0.000000e+00> : vector<16xf32>
    %184 = vector.multi_reduction <add>, %183, %cst_61 [1] : vector<16x32xf32> to vector<16xf32>
    %185 = vector.shape_cast %184 : vector<16xf32> to vector<16x1xf32>
    %cst_62 = arith.constant 3.200000e+01 : f32
    %186 = vector.broadcast %cst_62 : f32 to vector<16x1xf32>
    %187 = arith.divf %185, %186 : vector<16x1xf32>
    %cst_63 = arith.constant 9.99999974E-6 : f32
    %188 = vector.broadcast %cst_63 : f32 to vector<16x1xf32>
    %189 = arith.addf %187, %188 : vector<16x1xf32>
    %190 = math.rsqrt %189 : vector<16x1xf32>
    %191 = vector.broadcast %190 : vector<16x1xf32> to vector<16x32xf32>
    %192 = arith.mulf %182, %191 : vector<16x32xf32>
    %c0_64 = arith.constant 0 : index
    %c0_65 = arith.constant 0 : index
    %193 = vector.load %arg10[%c0_64, %c0_65] : memref<1x32xf32, #tpu.memory_space<vmem>>, vector<1x32xf32>
    %194 = vector.broadcast %193 : vector<1x32xf32> to vector<16x32xf32>
    %195 = arith.mulf %192, %194 : vector<16x32xf32>
    %c0_66 = arith.constant 0 : index
    %c0_67 = arith.constant 0 : index
    %196 = vector.load %arg11[%c0_66, %c0_67] : memref<1x32xf32, #tpu.memory_space<vmem>>, vector<1x32xf32>
    %197 = vector.broadcast %196 : vector<1x32xf32> to vector<16x32xf32>
    %198 = arith.addf %195, %197 : vector<16x32xf32>
    %c0_68 = arith.constant 0 : index
    %c0_69 = arith.constant 0 : index
    %199 = vector.load %arg12[%c0_68, %c0_69] : memref<32x128xf32, #tpu.memory_space<vmem>>, vector<32x128xf32>
    %cst_70 = arith.constant dense<0.000000e+00> : vector<16x128xf32>
    %200 = tpu.matmul %198, %199, %cst_70 {dimension_numbers = #tpu.dot_dimension_numbers<[1], [0], [0], [1], [0, 0, 1, 1], [], []>} : vector<16x32xf32>, vector<32x128xf32>, vector<16x128xf32> -> vector<16x128xf32>
    %c0_71 = arith.constant 0 : index
    %c0_72 = arith.constant 0 : index
    %201 = vector.load %arg13[%c0_71, %c0_72] : memref<1x128xf32, #tpu.memory_space<vmem>>, vector<1x128xf32>
    %202 = vector.broadcast %201 : vector<1x128xf32> to vector<16x128xf32>
    %203 = arith.addf %200, %202 : vector<16x128xf32>
    %cst_73 = arith.constant 5.000000e-01 : f32
    %204 = vector.broadcast %cst_73 : f32 to vector<16x128xf32>
    %205 = arith.mulf %204, %203 : vector<16x128xf32>
    %cst_74 = arith.constant 4.471500e-02 : f32
    %206 = vector.broadcast %cst_74 : f32 to vector<16x128xf32>
    %207 = arith.mulf %206, %203 : vector<16x128xf32>
    %208 = arith.mulf %207, %203 : vector<16x128xf32>
    %209 = arith.mulf %208, %203 : vector<16x128xf32>
    %210 = arith.addf %203, %209 : vector<16x128xf32>
    %cst_75 = arith.constant 0.797884583 : f32
    %211 = vector.broadcast %cst_75 : f32 to vector<16x128xf32>
    %212 = arith.mulf %211, %210 : vector<16x128xf32>
    %213 = math.tanh %212 : vector<16x128xf32>
    %cst_76 = arith.constant 1.000000e+00 : f32
    %214 = vector.broadcast %cst_76 : f32 to vector<16x128xf32>
    %215 = arith.addf %214, %213 : vector<16x128xf32>
    %216 = arith.mulf %205, %215 : vector<16x128xf32>
    %c0_77 = arith.constant 0 : index
    %c0_78 = arith.constant 0 : index
    %217 = vector.load %arg14[%c0_77, %c0_78] : memref<128x32xf32, #tpu.memory_space<vmem>>, vector<128x32xf32>
    %cst_79 = arith.constant dense<0.000000e+00> : vector<16x32xf32>
    %218 = tpu.matmul %216, %217, %cst_79 {dimension_numbers = #tpu.dot_dimension_numbers<[1], [0], [0], [1], [0, 0, 1, 1], [], []>} : vector<16x128xf32>, vector<128x32xf32>, vector<16x32xf32> -> vector<16x32xf32>
    %c0_80 = arith.constant 0 : index
    %c0_81 = arith.constant 0 : index
    %219 = vector.load %arg15[%c0_80, %c0_81] : memref<1x32xf32, #tpu.memory_space<vmem>>, vector<1x32xf32>
    %220 = vector.broadcast %219 : vector<1x32xf32> to vector<16x32xf32>
    %221 = arith.addf %218, %220 : vector<16x32xf32>
    %222 = arith.addf %176, %221 : vector<16x32xf32>
    %cst_82 = arith.constant dense<0.000000e+00> : vector<16xf32>
    %223 = vector.multi_reduction <add>, %222, %cst_82 [1] : vector<16x32xf32> to vector<16xf32>
    %224 = vector.shape_cast %223 : vector<16xf32> to vector<16x1xf32>
    %cst_83 = arith.constant 3.200000e+01 : f32
    %225 = vector.broadcast %cst_83 : f32 to vector<16x1xf32>
    %226 = arith.divf %224, %225 : vector<16x1xf32>
    %227 = vector.broadcast %226 : vector<16x1xf32> to vector<16x32xf32>
    %228 = arith.subf %222, %227 : vector<16x32xf32>
    %229 = arith.mulf %228, %228 : vector<16x32xf32>
    %cst_84 = arith.constant dense<0.000000e+00> : vector<16xf32>
    %230 = vector.multi_reduction <add>, %229, %cst_84 [1] : vector<16x32xf32> to vector<16xf32>
    %231 = vector.shape_cast %230 : vector<16xf32> to vector<16x1xf32>
    %cst_85 = arith.constant 3.200000e+01 : f32
    %232 = vector.broadcast %cst_85 : f32 to vector<16x1xf32>
    %233 = arith.divf %231, %232 : vector<16x1xf32>
    %cst_86 = arith.constant 9.99999974E-6 : f32
    %234 = vector.broadcast %cst_86 : f32 to vector<16x1xf32>
    %235 = arith.addf %233, %234 : vector<16x1xf32>
    %236 = math.rsqrt %235 : vector<16x1xf32>
    %237 = vector.broadcast %236 : vector<16x1xf32> to vector<16x32xf32>
    %238 = arith.mulf %228, %237 : vector<16x32xf32>
    %c0_87 = arith.constant 0 : index
    %c0_88 = arith.constant 0 : index
    %239 = vector.load %arg16[%c0_87, %c0_88] : memref<1x32xf32, #tpu.memory_space<vmem>>, vector<1x32xf32>
    %240 = vector.broadcast %239 : vector<1x32xf32> to vector<16x32xf32>
    %241 = arith.mulf %238, %240 : vector<16x32xf32>
    %c0_89 = arith.constant 0 : index
    %c0_90 = arith.constant 0 : index
    %242 = vector.load %arg17[%c0_89, %c0_90] : memref<1x32xf32, #tpu.memory_space<vmem>>, vector<1x32xf32>
    %243 = vector.broadcast %242 : vector<1x32xf32> to vector<16x32xf32>
    %244 = arith.addf %241, %243 : vector<16x32xf32>
    %c0_91 = arith.constant 0 : index
    %c0_92 = arith.constant 0 : index
    %245 = vector.load %arg18[%c0_91, %c0_92] : memref<32x96xf32, #tpu.memory_space<vmem>>, vector<32x96xf32>
    %cst_93 = arith.constant dense<0.000000e+00> : vector<16x96xf32>
    %246 = tpu.matmul %244, %245, %cst_93 {dimension_numbers = #tpu.dot_dimension_numbers<[1], [0], [0], [1], [0, 0, 1, 1], [], []>} : vector<16x32xf32>, vector<32x96xf32>, vector<16x96xf32> -> vector<16x96xf32>
    %c0_94 = arith.constant 0 : index
    %c0_95 = arith.constant 0 : index
    %247 = vector.load %arg19[%c0_94, %c0_95] : memref<1x96xf32, #tpu.memory_space<vmem>>, vector<1x96xf32>
    %248 = vector.broadcast %247 : vector<1x96xf32> to vector<16x96xf32>
    %249 = arith.addf %246, %248 : vector<16x96xf32>
    %250 = vector.extract_strided_slice %249 {offsets = [0, 0], sizes = [16, 8], strides = [1, 1]} : vector<16x96xf32> to vector<16x8xf32>
    %251 = vector.shape_cast %250 : vector<16x8xf32> to vector<2x8x8xf32>
    %252 = vector.extract_strided_slice %249 {offsets = [0, 32], sizes = [16, 8], strides = [1, 1]} : vector<16x96xf32> to vector<16x8xf32>
    %253 = vector.shape_cast %252 : vector<16x8xf32> to vector<2x8x8xf32>
    %254 = vector.extract_strided_slice %249 {offsets = [0, 64], sizes = [16, 8], strides = [1, 1]} : vector<16x96xf32> to vector<16x8xf32>
    %255 = vector.shape_cast %254 : vector<16x8xf32> to vector<2x8x8xf32>
    "tpu.trace_start"() <{level = 10 : i32, message = "bqd,bkd->bqk"}> : () -> ()
    %cst_96 = arith.constant dense<0.000000e+00> : vector<2x8x8xf32>
    %256 = tpu.matmul %251, %253, %cst_96 {dimension_numbers = #tpu.dot_dimension_numbers<[2], [2], [1], [1], [0, 0, 0, 1, 1, 1], [0], [0]>} : vector<2x8x8xf32>, vector<2x8x8xf32>, vector<2x8x8xf32> -> vector<2x8x8xf32>
    "tpu.trace_stop"() : () -> ()
    %cst_97 = arith.constant 0.353553385 : f32
    %257 = vector.broadcast %cst_97 : f32 to vector<2x8x8xf32>
    %258 = arith.mulf %256, %257 : vector<2x8x8xf32>
    %259 = tpu.iota {dimensions = array<i32: 1>} : vector<2x8x8xi32>
    %260 = tpu.iota {dimensions = array<i32: 2>} : vector<2x8x8xi32>
    %261 = arith.cmpi sle, %260, %259 : vector<2x8x8xi32>
    %cst_98 = arith.constant -1.000000e+30 : f32
    %262 = vector.broadcast %cst_98 : f32 to vector<2x8x8xf32>
    %263 = arith.select %261, %258, %262 : vector<2x8x8xi1>, vector<2x8x8xf32>
    %cst_99 = arith.constant dense<0xFF800000> : vector<2x8xf32>
    %264 = vector.multi_reduction <maximumf>, %263, %cst_99 [2] : vector<2x8x8xf32> to vector<2x8xf32>
    %265 = vector.shape_cast %264 : vector<2x8xf32> to vector<2x8x1xf32>
    %cst_100 = arith.constant 0.000000e+00 : f32
    %266 = vector.broadcast %cst_100 : f32 to vector<2x8x1xf32>
    %267 = arith.maximumf %265, %266 : vector<2x8x1xf32>
    %268 = vector.broadcast %267 : vector<2x8x1xf32> to vector<2x8x8xf32>
    %269 = arith.subf %263, %268 : vector<2x8x8xf32>
    %270 = math.exp %269 : vector<2x8x8xf32>
    %cst_101 = arith.constant dense<0.000000e+00> : vector<2x8xf32>
    %271 = vector.multi_reduction <add>, %270, %cst_101 [2] : vector<2x8x8xf32> to vector<2x8xf32>
    %272 = vector.shape_cast %271 : vector<2x8xf32> to vector<2x8x1xf32>
    %cst_102 = arith.constant 0.000000e+00 : f32
    %273 = vector.broadcast %cst_102 : f32 to vector<2x8x1xf32>
    %274 = arith.subf %273, %267 : vector<2x8x1xf32>
    %275 = math.exp %274 : vector<2x8x1xf32>
    %cst_103 = arith.constant 8.000000e+00 : f32
    %276 = vector.broadcast %cst_103 : f32 to vector<2x8x1xf32>
    %277 = arith.mulf %276, %275 : vector<2x8x1xf32>
    %278 = arith.addf %272, %277 : vector<2x8x1xf32>
    "tpu.trace_start"() <{level = 10 : i32, message = "bqk,bkd->bqd"}> : () -> ()
    %cst_104 = arith.constant dense<0.000000e+00> : vector<2x8x8xf32>
    %279 = tpu.matmul %270, %255, %cst_104 {dimension_numbers = #tpu.dot_dimension_numbers<[2], [1], [1], [2], [0, 0, 0, 1, 1, 2], [0], [0]>} : vector<2x8x8xf32>, vector<2x8x8xf32>, vector<2x8x8xf32> -> vector<2x8x8xf32>
    "tpu.trace_stop"() : () -> ()
    %280 = vector.broadcast %278 : vector<2x8x1xf32> to vector<2x8x8xf32>
    %281 = arith.divf %279, %280 : vector<2x8x8xf32>
    %282 = vector.shape_cast %281 : vector<2x8x8xf32> to vector<16x8xf32>
    %283 = vector.extract_strided_slice %249 {offsets = [0, 8], sizes = [16, 8], strides = [1, 1]} : vector<16x96xf32> to vector<16x8xf32>
    %284 = vector.shape_cast %283 : vector<16x8xf32> to vector<2x8x8xf32>
    %285 = vector.extract_strided_slice %249 {offsets = [0, 40], sizes = [16, 8], strides = [1, 1]} : vector<16x96xf32> to vector<16x8xf32>
    %286 = vector.shape_cast %285 : vector<16x8xf32> to vector<2x8x8xf32>
    %287 = vector.extract_strided_slice %249 {offsets = [0, 72], sizes = [16, 8], strides = [1, 1]} : vector<16x96xf32> to vector<16x8xf32>
    %288 = vector.shape_cast %287 : vector<16x8xf32> to vector<2x8x8xf32>
    "tpu.trace_start"() <{level = 10 : i32, message = "bqd,bkd->bqk"}> : () -> ()
    %cst_105 = arith.constant dense<0.000000e+00> : vector<2x8x8xf32>
    %289 = tpu.matmul %284, %286, %cst_105 {dimension_numbers = #tpu.dot_dimension_numbers<[2], [2], [1], [1], [0, 0, 0, 1, 1, 1], [0], [0]>} : vector<2x8x8xf32>, vector<2x8x8xf32>, vector<2x8x8xf32> -> vector<2x8x8xf32>
    "tpu.trace_stop"() : () -> ()
    %cst_106 = arith.constant 0.353553385 : f32
    %290 = vector.broadcast %cst_106 : f32 to vector<2x8x8xf32>
    %291 = arith.mulf %289, %290 : vector<2x8x8xf32>
    %292 = tpu.iota {dimensions = array<i32: 1>} : vector<2x8x8xi32>
    %293 = tpu.iota {dimensions = array<i32: 2>} : vector<2x8x8xi32>
    %294 = arith.cmpi sle, %293, %292 : vector<2x8x8xi32>
    %cst_107 = arith.constant -1.000000e+30 : f32
    %295 = vector.broadcast %cst_107 : f32 to vector<2x8x8xf32>
    %296 = arith.select %294, %291, %295 : vector<2x8x8xi1>, vector<2x8x8xf32>
    %cst_108 = arith.constant dense<0xFF800000> : vector<2x8xf32>
    %297 = vector.multi_reduction <maximumf>, %296, %cst_108 [2] : vector<2x8x8xf32> to vector<2x8xf32>
    %298 = vector.shape_cast %297 : vector<2x8xf32> to vector<2x8x1xf32>
    %cst_109 = arith.constant 0.000000e+00 : f32
    %299 = vector.broadcast %cst_109 : f32 to vector<2x8x1xf32>
    %300 = arith.maximumf %298, %299 : vector<2x8x1xf32>
    %301 = vector.broadcast %300 : vector<2x8x1xf32> to vector<2x8x8xf32>
    %302 = arith.subf %296, %301 : vector<2x8x8xf32>
    %303 = math.exp %302 : vector<2x8x8xf32>
    %cst_110 = arith.constant dense<0.000000e+00> : vector<2x8xf32>
    %304 = vector.multi_reduction <add>, %303, %cst_110 [2] : vector<2x8x8xf32> to vector<2x8xf32>
    %305 = vector.shape_cast %304 : vector<2x8xf32> to vector<2x8x1xf32>
    %cst_111 = arith.constant 0.000000e+00 : f32
    %306 = vector.broadcast %cst_111 : f32 to vector<2x8x1xf32>
    %307 = arith.subf %306, %300 : vector<2x8x1xf32>
    %308 = math.exp %307 : vector<2x8x1xf32>
    %cst_112 = arith.constant 8.000000e+00 : f32
    %309 = vector.broadcast %cst_112 : f32 to vector<2x8x1xf32>
    %310 = arith.mulf %309, %308 : vector<2x8x1xf32>
    %311 = arith.addf %305, %310 : vector<2x8x1xf32>
    "tpu.trace_start"() <{level = 10 : i32, message = "bqk,bkd->bqd"}> : () -> ()
    %cst_113 = arith.constant dense<0.000000e+00> : vector<2x8x8xf32>
    %312 = tpu.matmul %303, %288, %cst_113 {dimension_numbers = #tpu.dot_dimension_numbers<[2], [1], [1], [2], [0, 0, 0, 1, 1, 2], [0], [0]>} : vector<2x8x8xf32>, vector<2x8x8xf32>, vector<2x8x8xf32> -> vector<2x8x8xf32>
    "tpu.trace_stop"() : () -> ()
    %313 = vector.broadcast %311 : vector<2x8x1xf32> to vector<2x8x8xf32>
    %314 = arith.divf %312, %313 : vector<2x8x8xf32>
    %315 = vector.shape_cast %314 : vector<2x8x8xf32> to vector<16x8xf32>
    %316 = vector.extract_strided_slice %249 {offsets = [0, 16], sizes = [16, 8], strides = [1, 1]} : vector<16x96xf32> to vector<16x8xf32>
    %317 = vector.shape_cast %316 : vector<16x8xf32> to vector<2x8x8xf32>
    %318 = vector.extract_strided_slice %249 {offsets = [0, 48], sizes = [16, 8], strides = [1, 1]} : vector<16x96xf32> to vector<16x8xf32>
    %319 = vector.shape_cast %318 : vector<16x8xf32> to vector<2x8x8xf32>
    %320 = vector.extract_strided_slice %249 {offsets = [0, 80], sizes = [16, 8], strides = [1, 1]} : vector<16x96xf32> to vector<16x8xf32>
    %321 = vector.shape_cast %320 : vector<16x8xf32> to vector<2x8x8xf32>
    "tpu.trace_start"() <{level = 10 : i32, message = "bqd,bkd->bqk"}> : () -> ()
    %cst_114 = arith.constant dense<0.000000e+00> : vector<2x8x8xf32>
    %322 = tpu.matmul %317, %319, %cst_114 {dimension_numbers = #tpu.dot_dimension_numbers<[2], [2], [1], [1], [0, 0, 0, 1, 1, 1], [0], [0]>} : vector<2x8x8xf32>, vector<2x8x8xf32>, vector<2x8x8xf32> -> vector<2x8x8xf32>
    "tpu.trace_stop"() : () -> ()
    %cst_115 = arith.constant 0.353553385 : f32
    %323 = vector.broadcast %cst_115 : f32 to vector<2x8x8xf32>
    %324 = arith.mulf %322, %323 : vector<2x8x8xf32>
    %325 = tpu.iota {dimensions = array<i32: 1>} : vector<2x8x8xi32>
    %326 = tpu.iota {dimensions = array<i32: 2>} : vector<2x8x8xi32>
    %327 = arith.cmpi sle, %326, %325 : vector<2x8x8xi32>
    %cst_116 = arith.constant -1.000000e+30 : f32
    %328 = vector.broadcast %cst_116 : f32 to vector<2x8x8xf32>
    %329 = arith.select %327, %324, %328 : vector<2x8x8xi1>, vector<2x8x8xf32>
    %cst_117 = arith.constant dense<0xFF800000> : vector<2x8xf32>
    %330 = vector.multi_reduction <maximumf>, %329, %cst_117 [2] : vector<2x8x8xf32> to vector<2x8xf32>
    %331 = vector.shape_cast %330 : vector<2x8xf32> to vector<2x8x1xf32>
    %cst_118 = arith.constant 0.000000e+00 : f32
    %332 = vector.broadcast %cst_118 : f32 to vector<2x8x1xf32>
    %333 = arith.maximumf %331, %332 : vector<2x8x1xf32>
    %334 = vector.broadcast %333 : vector<2x8x1xf32> to vector<2x8x8xf32>
    %335 = arith.subf %329, %334 : vector<2x8x8xf32>
    %336 = math.exp %335 : vector<2x8x8xf32>
    %cst_119 = arith.constant dense<0.000000e+00> : vector<2x8xf32>
    %337 = vector.multi_reduction <add>, %336, %cst_119 [2] : vector<2x8x8xf32> to vector<2x8xf32>
    %338 = vector.shape_cast %337 : vector<2x8xf32> to vector<2x8x1xf32>
    %cst_120 = arith.constant 0.000000e+00 : f32
    %339 = vector.broadcast %cst_120 : f32 to vector<2x8x1xf32>
    %340 = arith.subf %339, %333 : vector<2x8x1xf32>
    %341 = math.exp %340 : vector<2x8x1xf32>
    %cst_121 = arith.constant 8.000000e+00 : f32
    %342 = vector.broadcast %cst_121 : f32 to vector<2x8x1xf32>
    %343 = arith.mulf %342, %341 : vector<2x8x1xf32>
    %344 = arith.addf %338, %343 : vector<2x8x1xf32>
    "tpu.trace_start"() <{level = 10 : i32, message = "bqk,bkd->bqd"}> : () -> ()
    %cst_122 = arith.constant dense<0.000000e+00> : vector<2x8x8xf32>
    %345 = tpu.matmul %336, %321, %cst_122 {dimension_numbers = #tpu.dot_dimension_numbers<[2], [1], [1], [2], [0, 0, 0, 1, 1, 2], [0], [0]>} : vector<2x8x8xf32>, vector<2x8x8xf32>, vector<2x8x8xf32> -> vector<2x8x8xf32>
    "tpu.trace_stop"() : () -> ()
    %346 = vector.broadcast %344 : vector<2x8x1xf32> to vector<2x8x8xf32>
    %347 = arith.divf %345, %346 : vector<2x8x8xf32>
    %348 = vector.shape_cast %347 : vector<2x8x8xf32> to vector<16x8xf32>
    %349 = vector.extract_strided_slice %249 {offsets = [0, 24], sizes = [16, 8], strides = [1, 1]} : vector<16x96xf32> to vector<16x8xf32>
    %350 = vector.shape_cast %349 : vector<16x8xf32> to vector<2x8x8xf32>
    %351 = vector.extract_strided_slice %249 {offsets = [0, 56], sizes = [16, 8], strides = [1, 1]} : vector<16x96xf32> to vector<16x8xf32>
    %352 = vector.shape_cast %351 : vector<16x8xf32> to vector<2x8x8xf32>
    %353 = vector.extract_strided_slice %249 {offsets = [0, 88], sizes = [16, 8], strides = [1, 1]} : vector<16x96xf32> to vector<16x8xf32>
    %354 = vector.shape_cast %353 : vector<16x8xf32> to vector<2x8x8xf32>
    "tpu.trace_start"() <{level = 10 : i32, message = "bqd,bkd->bqk"}> : () -> ()
    %cst_123 = arith.constant dense<0.000000e+00> : vector<2x8x8xf32>
    %355 = tpu.matmul %350, %352, %cst_123 {dimension_numbers = #tpu.dot_dimension_numbers<[2], [2], [1], [1], [0, 0, 0, 1, 1, 1], [0], [0]>} : vector<2x8x8xf32>, vector<2x8x8xf32>, vector<2x8x8xf32> -> vector<2x8x8xf32>
    "tpu.trace_stop"() : () -> ()
    %cst_124 = arith.constant 0.353553385 : f32
    %356 = vector.broadcast %cst_124 : f32 to vector<2x8x8xf32>
    %357 = arith.mulf %355, %356 : vector<2x8x8xf32>
    %358 = tpu.iota {dimensions = array<i32: 1>} : vector<2x8x8xi32>
    %359 = tpu.iota {dimensions = array<i32: 2>} : vector<2x8x8xi32>
    %360 = arith.cmpi sle, %359, %358 : vector<2x8x8xi32>
    %cst_125 = arith.constant -1.000000e+30 : f32
    %361 = vector.broadcast %cst_125 : f32 to vector<2x8x8xf32>
    %362 = arith.select %360, %357, %361 : vector<2x8x8xi1>, vector<2x8x8xf32>
    %cst_126 = arith.constant dense<0xFF800000> : vector<2x8xf32>
    %363 = vector.multi_reduction <maximumf>, %362, %cst_126 [2] : vector<2x8x8xf32> to vector<2x8xf32>
    %364 = vector.shape_cast %363 : vector<2x8xf32> to vector<2x8x1xf32>
    %cst_127 = arith.constant 0.000000e+00 : f32
    %365 = vector.broadcast %cst_127 : f32 to vector<2x8x1xf32>
    %366 = arith.maximumf %364, %365 : vector<2x8x1xf32>
    %367 = vector.broadcast %366 : vector<2x8x1xf32> to vector<2x8x8xf32>
    %368 = arith.subf %362, %367 : vector<2x8x8xf32>
    %369 = math.exp %368 : vector<2x8x8xf32>
    %cst_128 = arith.constant dense<0.000000e+00> : vector<2x8xf32>
    %370 = vector.multi_reduction <add>, %369, %cst_128 [2] : vector<2x8x8xf32> to vector<2x8xf32>
    %371 = vector.shape_cast %370 : vector<2x8xf32> to vector<2x8x1xf32>
    %cst_129 = arith.constant 0.000000e+00 : f32
    %372 = vector.broadcast %cst_129 : f32 to vector<2x8x1xf32>
    %373 = arith.subf %372, %366 : vector<2x8x1xf32>
    %374 = math.exp %373 : vector<2x8x1xf32>
    %cst_130 = arith.constant 8.000000e+00 : f32
    %375 = vector.broadcast %cst_130 : f32 to vector<2x8x1xf32>
    %376 = arith.mulf %375, %374 : vector<2x8x1xf32>
    %377 = arith.addf %371, %376 : vector<2x8x1xf32>
    "tpu.trace_start"() <{level = 10 : i32, message = "bqk,bkd->bqd"}> : () -> ()
    %cst_131 = arith.constant dense<0.000000e+00> : vector<2x8x8xf32>
    %378 = tpu.matmul %369, %354, %cst_131 {dimension_numbers = #tpu.dot_dimension_numbers<[2], [1], [1], [2], [0, 0, 0, 1, 1, 2], [0], [0]>} : vector<2x8x8xf32>, vector<2x8x8xf32>, vector<2x8x8xf32> -> vector<2x8x8xf32>
    "tpu.trace_stop"() : () -> ()
    %379 = vector.broadcast %377 : vector<2x8x1xf32> to vector<2x8x8xf32>
    %380 = arith.divf %378, %379 : vector<2x8x8xf32>
    %381 = vector.shape_cast %380 : vector<2x8x8xf32> to vector<16x8xf32>
    %382 = tpu.concatenate %282, %315, %348, %381 in 1 : vector<16x8xf32>, vector<16x8xf32>, vector<16x8xf32>, vector<16x8xf32> -> vector<16x32xf32>
    %c0_132 = arith.constant 0 : index
    %c0_133 = arith.constant 0 : index
    %383 = vector.load %arg20[%c0_132, %c0_133] : memref<32x32xf32, #tpu.memory_space<vmem>>, vector<32x32xf32>
    %cst_134 = arith.constant dense<0.000000e+00> : vector<16x32xf32>
    %384 = tpu.matmul %382, %383, %cst_134 {dimension_numbers = #tpu.dot_dimension_numbers<[1], [0], [0], [1], [0, 0, 1, 1], [], []>} : vector<16x32xf32>, vector<32x32xf32>, vector<16x32xf32> -> vector<16x32xf32>
    %c0_135 = arith.constant 0 : index
    %c0_136 = arith.constant 0 : index
    %385 = vector.load %arg21[%c0_135, %c0_136] : memref<1x32xf32, #tpu.memory_space<vmem>>, vector<1x32xf32>
    %386 = vector.broadcast %385 : vector<1x32xf32> to vector<16x32xf32>
    %387 = arith.addf %384, %386 : vector<16x32xf32>
    %388 = arith.addf %222, %387 : vector<16x32xf32>
    %cst_137 = arith.constant dense<0.000000e+00> : vector<16xf32>
    %389 = vector.multi_reduction <add>, %388, %cst_137 [1] : vector<16x32xf32> to vector<16xf32>
    %390 = vector.shape_cast %389 : vector<16xf32> to vector<16x1xf32>
    %cst_138 = arith.constant 3.200000e+01 : f32
    %391 = vector.broadcast %cst_138 : f32 to vector<16x1xf32>
    %392 = arith.divf %390, %391 : vector<16x1xf32>
    %393 = vector.broadcast %392 : vector<16x1xf32> to vector<16x32xf32>
    %394 = arith.subf %388, %393 : vector<16x32xf32>
    %395 = arith.mulf %394, %394 : vector<16x32xf32>
    %cst_139 = arith.constant dense<0.000000e+00> : vector<16xf32>
    %396 = vector.multi_reduction <add>, %395, %cst_139 [1] : vector<16x32xf32> to vector<16xf32>
    %397 = vector.shape_cast %396 : vector<16xf32> to vector<16x1xf32>
    %cst_140 = arith.constant 3.200000e+01 : f32
    %398 = vector.broadcast %cst_140 : f32 to vector<16x1xf32>
    %399 = arith.divf %397, %398 : vector<16x1xf32>
    %cst_141 = arith.constant 9.99999974E-6 : f32
    %400 = vector.broadcast %cst_141 : f32 to vector<16x1xf32>
    %401 = arith.addf %399, %400 : vector<16x1xf32>
    %402 = math.rsqrt %401 : vector<16x1xf32>
    %403 = vector.broadcast %402 : vector<16x1xf32> to vector<16x32xf32>
    %404 = arith.mulf %394, %403 : vector<16x32xf32>
    %c0_142 = arith.constant 0 : index
    %c0_143 = arith.constant 0 : index
    %405 = vector.load %arg22[%c0_142, %c0_143] : memref<1x32xf32, #tpu.memory_space<vmem>>, vector<1x32xf32>
    %406 = vector.broadcast %405 : vector<1x32xf32> to vector<16x32xf32>
    %407 = arith.mulf %404, %406 : vector<16x32xf32>
    %c0_144 = arith.constant 0 : index
    %c0_145 = arith.constant 0 : index
    %408 = vector.load %arg23[%c0_144, %c0_145] : memref<1x32xf32, #tpu.memory_space<vmem>>, vector<1x32xf32>
    %409 = vector.broadcast %408 : vector<1x32xf32> to vector<16x32xf32>
    %410 = arith.addf %407, %409 : vector<16x32xf32>
    %c0_146 = arith.constant 0 : index
    %c0_147 = arith.constant 0 : index
    %411 = vector.load %arg24[%c0_146, %c0_147] : memref<32x128xf32, #tpu.memory_space<vmem>>, vector<32x128xf32>
    %cst_148 = arith.constant dense<0.000000e+00> : vector<16x128xf32>
    %412 = tpu.matmul %410, %411, %cst_148 {dimension_numbers = #tpu.dot_dimension_numbers<[1], [0], [0], [1], [0, 0, 1, 1], [], []>} : vector<16x32xf32>, vector<32x128xf32>, vector<16x128xf32> -> vector<16x128xf32>
    %c0_149 = arith.constant 0 : index
    %c0_150 = arith.constant 0 : index
    %413 = vector.load %arg25[%c0_149, %c0_150] : memref<1x128xf32, #tpu.memory_space<vmem>>, vector<1x128xf32>
    %414 = vector.broadcast %413 : vector<1x128xf32> to vector<16x128xf32>
    %415 = arith.addf %412, %414 : vector<16x128xf32>
    %cst_151 = arith.constant 5.000000e-01 : f32
    %416 = vector.broadcast %cst_151 : f32 to vector<16x128xf32>
    %417 = arith.mulf %416, %415 : vector<16x128xf32>
    %cst_152 = arith.constant 4.471500e-02 : f32
    %418 = vector.broadcast %cst_152 : f32 to vector<16x128xf32>
    %419 = arith.mulf %418, %415 : vector<16x128xf32>
    %420 = arith.mulf %419, %415 : vector<16x128xf32>
    %421 = arith.mulf %420, %415 : vector<16x128xf32>
    %422 = arith.addf %415, %421 : vector<16x128xf32>
    %cst_153 = arith.constant 0.797884583 : f32
    %423 = vector.broadcast %cst_153 : f32 to vector<16x128xf32>
    %424 = arith.mulf %423, %422 : vector<16x128xf32>
    %425 = math.tanh %424 : vector<16x128xf32>
    %cst_154 = arith.constant 1.000000e+00 : f32
    %426 = vector.broadcast %cst_154 : f32 to vector<16x128xf32>
    %427 = arith.addf %426, %425 : vector<16x128xf32>
    %428 = arith.mulf %417, %427 : vector<16x128xf32>
    %c0_155 = arith.constant 0 : index
    %c0_156 = arith.constant 0 : index
    %429 = vector.load %arg26[%c0_155, %c0_156] : memref<128x32xf32, #tpu.memory_space<vmem>>, vector<128x32xf32>
    %cst_157 = arith.constant dense<0.000000e+00> : vector<16x32xf32>
    %430 = tpu.matmul %428, %429, %cst_157 {dimension_numbers = #tpu.dot_dimension_numbers<[1], [0], [0], [1], [0, 0, 1, 1], [], []>} : vector<16x128xf32>, vector<128x32xf32>, vector<16x32xf32> -> vector<16x32xf32>
    %c0_158 = arith.constant 0 : index
    %c0_159 = arith.constant 0 : index
    %431 = vector.load %arg27[%c0_158, %c0_159] : memref<1x32xf32, #tpu.memory_space<vmem>>, vector<1x32xf32>
    %432 = vector.broadcast %431 : vector<1x32xf32> to vector<16x32xf32>
    %433 = arith.addf %430, %432 : vector<16x32xf32>
    %434 = arith.addf %388, %433 : vector<16x32xf32>
    %cst_160 = arith.constant dense<0.000000e+00> : vector<16xf32>
    %435 = vector.multi_reduction <add>, %434, %cst_160 [1] : vector<16x32xf32> to vector<16xf32>
    %436 = vector.shape_cast %435 : vector<16xf32> to vector<16x1xf32>
    %cst_161 = arith.constant 3.200000e+01 : f32
    %437 = vector.broadcast %cst_161 : f32 to vector<16x1xf32>
    %438 = arith.divf %436, %437 : vector<16x1xf32>
    %439 = vector.broadcast %438 : vector<16x1xf32> to vector<16x32xf32>
    %440 = arith.subf %434, %439 : vector<16x32xf32>
    %441 = arith.mulf %440, %440 : vector<16x32xf32>
    %cst_162 = arith.constant dense<0.000000e+00> : vector<16xf32>
    %442 = vector.multi_reduction <add>, %441, %cst_162 [1] : vector<16x32xf32> to vector<16xf32>
    %443 = vector.shape_cast %442 : vector<16xf32> to vector<16x1xf32>
    %cst_163 = arith.constant 3.200000e+01 : f32
    %444 = vector.broadcast %cst_163 : f32 to vector<16x1xf32>
    %445 = arith.divf %443, %444 : vector<16x1xf32>
    %cst_164 = arith.constant 9.99999974E-6 : f32
    %446 = vector.broadcast %cst_164 : f32 to vector<16x1xf32>
    %447 = arith.addf %445, %446 : vector<16x1xf32>
    %448 = math.rsqrt %447 : vector<16x1xf32>
    %449 = vector.broadcast %448 : vector<16x1xf32> to vector<16x32xf32>
    %450 = arith.mulf %440, %449 : vector<16x32xf32>
    %c0_165 = arith.constant 0 : index
    %c0_166 = arith.constant 0 : index
    %451 = vector.load %arg28[%c0_165, %c0_166] : memref<1x32xf32, #tpu.memory_space<vmem>>, vector<1x32xf32>
    %452 = vector.broadcast %451 : vector<1x32xf32> to vector<16x32xf32>
    %453 = arith.mulf %450, %452 : vector<16x32xf32>
    %c0_167 = arith.constant 0 : index
    %c0_168 = arith.constant 0 : index
    %454 = vector.load %arg29[%c0_167, %c0_168] : memref<1x32xf32, #tpu.memory_space<vmem>>, vector<1x32xf32>
    %455 = vector.broadcast %454 : vector<1x32xf32> to vector<16x32xf32>
    %456 = arith.addf %453, %455 : vector<16x32xf32>
    %c0_169 = arith.constant 0 : index
    %c0_170 = arith.constant 0 : index
    %457 = vector.load %arg2[%c0_169, %c0_170] : memref<64x32xf32, #tpu.memory_space<vmem>>, vector<64x32xf32>
    %cst_171 = arith.constant dense<0.000000e+00> : vector<16x64xf32>
    %458 = tpu.matmul %456, %457, %cst_171 {dimension_numbers = #tpu.dot_dimension_numbers<[1], [1], [0], [0], [0, 0, 1, 0], [], []>} : vector<16x32xf32>, vector<64x32xf32>, vector<16x64xf32> -> vector<16x64xf32>
    %c0_172 = arith.constant 0 : index
    %c0_173 = arith.constant 0 : index
    %459 = vector.load %arg30[%c0_172, %c0_173] : memref<16x64xf32, #tpu.memory_space<vmem>>, vector<16x64xf32>
    tpu.vector_store %arg30[%c0_172, %c0_173], %458 {strides = array<i32>} : memref<16x64xf32, #tpu.memory_space<vmem>>, vector<16x64xf32>,
    return
  }
  func.func @transform_0(%arg0: i32) -> (i32, i32) {
    %c0_i32 = arith.constant 0 : i32
    %c0_i32_0 = arith.constant 0 : i32
    %c0_i32_1 = arith.constant 0 : i32
    return %c0_i32, %c0_i32_0 : i32, i32
  }
  func.func @transform_1(%arg0: i32) -> (i32, i32) {
    %c0_i32 = arith.constant 0 : i32
    %c0_i32_0 = arith.constant 0 : i32
    %c0_i32_1 = arith.constant 0 : i32
    return %c0_i32, %c0_i32_0 : i32, i32
  }
  func.func @transform_2(%arg0: i32) -> (i32, i32) {
    %c0_i32 = arith.constant 0 : i32
    %c0_i32_0 = arith.constant 0 : i32
    %c0_i32_1 = arith.constant 0 : i32
    return %c0_i32, %c0_i32_0 : i32, i32
  }
  func.func @transform_3(%arg0: i32) -> (i32, i32) {
    %c0_i32 = arith.constant 0 : i32
    %c0_i32_0 = arith.constant 0 : i32
    %c0_i32_1 = arith.constant 0 : i32
    return %c0_i32, %c0_i32_0 : i32, i32
  }
  func.func @transform_4(%arg0: i32) -> (i32, i32) {
    %c0_i32 = arith.constant 0 : i32
    %c0_i32_0 = arith.constant 0 : i32
    %c0_i32_1 = arith.constant 0 : i32
    return %c0_i32, %c0_i32_0 : i32, i32
  }
  func.func @transform_5(%arg0: i32) -> (i32, i32) {
    %c0_i32 = arith.constant 0 : i32
    %c0_i32_0 = arith.constant 0 : i32
    %c0_i32_1 = arith.constant 0 : i32
    return %c0_i32, %c0_i32_0 : i32, i32
  }
  func.func @transform_6(%arg0: i32) -> (i32, i32) {
    %c0_i32 = arith.constant 0 : i32
    %c0_i32_0 = arith.constant 0 : i32
    %c0_i32_1 = arith.constant 0 : i32
    return %c0_i32, %c0_i32_0 : i32, i32
  }
  func.func @transform_7(%arg0: i32) -> (i32, i32) {
    %c0_i32 = arith.constant 0 : i32
    %c0_i32_0 = arith.constant 0 : i32
    %c0_i32_1 = arith.constant 0 : i32
    return %c0_i32, %c0_i32_0 : i32, i32
  }
  func.func @transform_8(%arg0: i32) -> (i32, i32) {
    %c0_i32 = arith.constant 0 : i32
    %c0_i32_0 = arith.constant 0 : i32
    %c0_i32_1 = arith.constant 0 : i32
    return %c0_i32, %c0_i32_0 : i32, i32
  }
  func.func @transform_9(%arg0: i32) -> (i32, i32) {
    %c0_i32 = arith.constant 0 : i32
    %c0_i32_0 = arith.constant 0 : i32
    %c0_i32_1 = arith.constant 0 : i32
    return %c0_i32, %c0_i32_0 : i32, i32
  }
  func.func @transform_10(%arg0: i32) -> (i32, i32) {
    %c0_i32 = arith.constant 0 : i32
    %c0_i32_0 = arith.constant 0 : i32
    %c0_i32_1 = arith.constant 0 : i32
    return %c0_i32, %c0_i32_0 : i32, i32
  }
  func.func @transform_11(%arg0: i32) -> (i32, i32) {
    %c0_i32 = arith.constant 0 : i32
    %c0_i32_0 = arith.constant 0 : i32
    %c0_i32_1 = arith.constant 0 : i32
    return %c0_i32, %c0_i32_0 : i32, i32
  }
  func.func @transform_12(%arg0: i32) -> (i32, i32) {
    %c0_i32 = arith.constant 0 : i32
    %c0_i32_0 = arith.constant 0 : i32
    %c0_i32_1 = arith.constant 0 : i32
    return %c0_i32, %c0_i32_0 : i32, i32
  }
  func.func @transform_13(%arg0: i32) -> (i32, i32) {
    %c0_i32 = arith.constant 0 : i32
    %c0_i32_0 = arith.constant 0 : i32
    %c0_i32_1 = arith.constant 0 : i32
    return %c0_i32, %c0_i32_0 : i32, i32
  }
  func.func @transform_14(%arg0: i32) -> (i32, i32) {
    %c0_i32 = arith.constant 0 : i32
    %c0_i32_0 = arith.constant 0 : i32
    %c0_i32_1 = arith.constant 0 : i32
    return %c0_i32, %c0_i32_0 : i32, i32
  }
  func.func @transform_15(%arg0: i32) -> (i32, i32) {
    %c0_i32 = arith.constant 0 : i32
    %c0_i32_0 = arith.constant 0 : i32
    %c0_i32_1 = arith.constant 0 : i32
    return %c0_i32, %c0_i32_0 : i32, i32
  }
  func.func @transform_16(%arg0: i32) -> (i32, i32) {
    %c0_i32 = arith.constant 0 : i32
    %c0_i32_0 = arith.constant 0 : i32
    %c0_i32_1 = arith.constant 0 : i32
    return %c0_i32, %c0_i32_0 : i32, i32
  }
  func.func @transform_17(%arg0: i32) -> (i32, i32) {
    %c0_i32 = arith.constant 0 : i32
    %c0_i32_0 = arith.constant 0 : i32
    %c0_i32_1 = arith.constant 0 : i32
    return %c0_i32, %c0_i32_0 : i32, i32
  }
  func.func @transform_18(%arg0: i32) -> (i32, i32) {
    %c0_i32 = arith.constant 0 : i32
    %c0_i32_0 = arith.constant 0 : i32
    %c0_i32_1 = arith.constant 0 : i32
    return %c0_i32, %c0_i32_0 : i32, i32
  }
  func.func @transform_19(%arg0: i32) -> (i32, i32) {
    %c0_i32 = arith.constant 0 : i32
    %c0_i32_0 = arith.constant 0 : i32
    %c0_i32_1 = arith.constant 0 : i32
    return %c0_i32, %c0_i32_0 : i32, i32
  }
  func.func @transform_20(%arg0: i32) -> (i32, i32) {
    %c0_i32 = arith.constant 0 : i32
    %c0_i32_0 = arith.constant 0 : i32
    %c0_i32_1 = arith.constant 0 : i32
    return %c0_i32, %c0_i32_0 : i32, i32
  }
  func.func @transform_21(%arg0: i32) -> (i32, i32) {
    %c0_i32 = arith.constant 0 : i32
    %c0_i32_0 = arith.constant 0 : i32
    %c0_i32_1 = arith.constant 0 : i32
    return %c0_i32, %c0_i32_0 : i32, i32
  }
  func.func @transform_22(%arg0: i32) -> (i32, i32) {
    %c0_i32 = arith.constant 0 : i32
    %c0_i32_0 = arith.constant 0 : i32
    %c0_i32_1 = arith.constant 0 : i32
    return %c0_i32, %c0_i32_0 : i32, i32
  }
  func.func @transform_23(%arg0: i32) -> (i32, i32) {
    %c0_i32 = arith.constant 0 : i32
    %c0_i32_0 = arith.constant 0 : i32
    %c0_i32_1 = arith.constant 0 : i32
    return %c0_i32, %c0_i32_0 : i32, i32
  }
  func.func @transform_24(%arg0: i32) -> (i32, i32) {
    %c0_i32 = arith.constant 0 : i32
    %c0_i32_0 = arith.constant 0 : i32
    %c0_i32_1 = arith.constant 0 : i32
    return %c0_i32, %c0_i32_0 : i32, i32
  }
  func.func @transform_25(%arg0: i32) -> (i32, i32) {
    %c0_i32 = arith.constant 0 : i32
    %c0_i32_0 = arith.constant 0 : i32
    %c0_i32_1 = arith.constant 0 : i32
    return %c0_i32, %c0_i32_0 : i32, i32
  }
  func.func @transform_26(%arg0: i32) -> (i32, i32) {
    %c0_i32 = arith.constant 0 : i32
    %c0_i32_0 = arith.constant 0 : i32
    %c0_i32_1 = arith.constant 0 : i32
    return %c0_i32, %c0_i32_0 : i32, i32
  }
  func.func @transform_27(%arg0: i32) -> (i32, i32) {
    %c0_i32 = arith.constant 0 : i32
    %c0_i32_0 = arith.constant 0 : i32
    %c0_i32_1 = arith.constant 0 : i32
    return %c0_i32, %c0_i32_0 : i32, i32
  }
  func.func @transform_28(%arg0: i32) -> (i32, i32) {
    %c0_i32 = arith.constant 0 : i32
    %c0_i32_0 = arith.constant 0 : i32
    %c0_i32_1 = arith.constant 0 : i32
    return %c0_i32, %c0_i32_0 : i32, i32
  }
  func.func @transform_29(%arg0: i32) -> (i32, i32) {
    %c0_i32 = arith.constant 0 : i32
    %c0_i32_0 = arith.constant 0 : i32
    %c0_i32_1 = arith.constant 0 : i32
    return %c0_i32, %c0_i32_0 : i32, i32
  }
}

</mosaic_0001>

<llo_original>
// kernel: tpu_custom_call.1
$region0: #{tpu_custom_call.1}
  #allocation0 [shape = 'u32[]', space=smem, size = 0x4, offset = 0x4, fixed_abs, tag = 'smem constant byte address 0x4 - core index']
  #allocation1 [shape = 'u32[144,128]{1,0:T(1,128)}', space=vmem, size = 0x12000, scoped, tag = 'internal scratch']
  %s0 = inlined_call_operand.smem [shape: u32[30], index: -1, kind: input, shape index: {}]
  %s1 = sld [smem:[%s0]]
  %s2 = scalar_lea.smem %s0, 1
  %s3 = sld [smem:[%s2]]
  %s4 = scalar_lea.smem %s0, 2
  %s5 = sld [smem:[%s4]]
  %s6 = scalar_lea.smem %s0, 3
  %s7 = sld [smem:[%s6]]
  %s8 = scalar_lea.smem %s0, 4
  %s9 = sld [smem:[%s8]]
  %s10 = scalar_lea.smem %s0, 5
  %s11 = sld [smem:[%s10]]
  %s12 = scalar_lea.smem %s0, 6
  %s13 = sld [smem:[%s12]]
  %s14 = scalar_lea.smem %s0, 7
  %s15 = sld [smem:[%s14]]
  %s16 = scalar_lea.smem %s0, 8
  %s17 = sld [smem:[%s16]]
  %s18 = scalar_lea.smem %s0, 9
  %s19 = sld [smem:[%s18]]
  %s20 = scalar_lea.smem %s0, 10
  %s21 = sld [smem:[%s20]]
  %s22 = scalar_lea.smem %s0, 11
  %s23 = sld [smem:[%s22]]
  %s24 = scalar_lea.smem %s0, 12
  %s25 = sld [smem:[%s24]]
  %s26 = scalar_lea.smem %s0, 13
  %s27 = sld [smem:[%s26]]
  %s28 = scalar_lea.smem %s0, 14
  %s29 = sld [smem:[%s28]]
  %s30 = scalar_lea.smem %s0, 15
  %s31 = sld [smem:[%s30]]
  %s32 = scalar_lea.smem %s0, 16
  %s33 = sld [smem:[%s32]]
  %s34 = scalar_lea.smem %s0, 17
  %s35 = sld [smem:[%s34]]
  %s36 = scalar_lea.smem %s0, 18
  %s37 = sld [smem:[%s36]]
  %s38 = scalar_lea.smem %s0, 19
  %s39 = sld [smem:[%s38]]
  %s40 = scalar_lea.smem %s0, 20
  %s41 = sld [smem:[%s40]]
  %s42 = scalar_lea.smem %s0, 21
  %s43 = sld [smem:[%s42]]
  %s44 = scalar_lea.smem %s0, 22
  %s45 = sld [smem:[%s44]]
  %s46 = scalar_lea.smem %s0, 23
  %s47 = sld [smem:[%s46]]
  %s48 = scalar_lea.smem %s0, 24
  %s49 = sld [smem:[%s48]]
  %s50 = scalar_lea.smem %s0, 25
  %s51 = sld [smem:[%s50]]
  %s52 = scalar_lea.smem %s0, 26
  %s53 = sld [smem:[%s52]]
  %s54 = scalar_lea.smem %s0, 27
  %s55 = sld [smem:[%s54]]
  %s56 = scalar_lea.smem %s0, 28
  %s57 = sld [smem:[%s56]]
  %s58 = scalar_lea.smem %s0, 29
  %s59 = sld [smem:[%s58]]
  %s60 = sld [smem:[#allocation0]]
  $region126: #{tpu_custom_call.1} parent=0
    _
  %s62 = ssub.s32 1, %s60
  %s63 = scalar_select 0, %s62, %s60
  $region1: #{tpu_custom_call.1} parent=0
    #allocation2 [shape = 'u8[8192]{0}', space=vmem, size = 0x2000, scoped, tag = 'output window, operand 0, single buffered']
    #allocation3 [shape = 's32[1]{0}', space=sflag, size = 0x4, scoped, tag = 'scoped memory for tpu_custom_call.1']
    %64 = vsyncpa [#allocation3], 0
    // Predicated region
    $region2: #{tpu_custom_call.1} parent=1 // pred_check
      _
    $region3: #{tpu_custom_call.1} parent=1 // pred_check_branch
      %66 = sbr.rel (0) target = $region5
    $region4: #{tpu_custom_call.1} parent=1 // pred_region
      _
    $region5: #{tpu_custom_call.1} parent=1 // pred_fallthru
      _
    // Predicated region
    $region6: #{tpu_custom_call.1} parent=1 // pred_check
      _
    $region7: #{tpu_custom_call.1} parent=1 // pred_check_branch
      %68 = sbr.rel (0) target = $region9
    $region8: #{tpu_custom_call.1} parent=1 // pred_region
      _
    $region9: #{tpu_custom_call.1} parent=1 // pred_fallthru
      _
    // Predicated region
    $region10: #{tpu_custom_call.1} parent=1 // pred_check
      _
    $region11: #{tpu_custom_call.1} parent=1 // pred_check_branch
      %70 = sbr.rel (0) target = $region13
    $region12: #{tpu_custom_call.1} parent=1 // pred_region
      _
    $region13: #{tpu_custom_call.1} parent=1 // pred_fallthru
      _
    // Predicated region
    $region14: #{tpu_custom_call.1} parent=1 // pred_check
      _
    $region15: #{tpu_custom_call.1} parent=1 // pred_check_branch
      %72 = sbr.rel (0) target = $region17
    $region16: #{tpu_custom_call.1} parent=1 // pred_region
      _
    $region17: #{tpu_custom_call.1} parent=1 // pred_fallthru
      _
    // Predicated region
    $region18: #{tpu_custom_call.1} parent=1 // pred_check
      _
    $region19: #{tpu_custom_call.1} parent=1 // pred_check_branch
      %74 = sbr.rel (0) target = $region21
    $region20: #{tpu_custom_call.1} parent=1 // pred_region
      _
    $region21: #{tpu_custom_call.1} parent=1 // pred_fallthru
      _
    // Predicated region
    $region22: #{tpu_custom_call.1} parent=1 // pred_check
      _
    $region23: #{tpu_custom_call.1} parent=1 // pred_check_branch
      %76 = sbr.rel (0) target = $region25
    $region24: #{tpu_custom_call.1} parent=1 // pred_region
      _
    $region25: #{tpu_custom_call.1} parent=1 // pred_fallthru
      _
    // Predicated region
    $region26: #{tpu_custom_call.1} parent=1 // pred_check
      _
    $region27: #{tpu_custom_call.1} parent=1 // pred_check_branch
      %78 = sbr.rel (0) target = $region29
    $region28: #{tpu_custom_call.1} parent=1 // pred_region
      _
    $region29: #{tpu_custom_call.1} parent=1 // pred_fallthru
      _
    // Predicated region
    $region30: #{tpu_custom_call.1} parent=1 // pred_check
      _
    $region31: #{tpu_custom_call.1} parent=1 // pred_check_branch
      %80 = sbr.rel (0) target = $region33
    $region32: #{tpu_custom_call.1} parent=1 // pred_region
      _
    $region33: #{tpu_custom_call.1} parent=1 // pred_fallthru
      _
    // Predicated region
    $region34: #{tpu_custom_call.1} parent=1 // pred_check
      _
    $region35: #{tpu_custom_call.1} parent=1 // pred_check_branch
      %82 = sbr.rel (0) target = $region37
    $region36: #{tpu_custom_call.1} parent=1 // pred_region
      _
    $region37: #{tpu_custom_call.1} parent=1 // pred_fallthru
      _
    // Predicated region
    $region38: #{tpu_custom_call.1} parent=1 // pred_check
      _
    $region39: #{tpu_custom_call.1} parent=1 // pred_check_branch
      %84 = sbr.rel (0) target = $region41
    $region40: #{tpu_custom_call.1} parent=1 // pred_region
      _
    $region41: #{tpu_custom_call.1} parent=1 // pred_fallthru
      _
    // Predicated region
    $region42: #{tpu_custom_call.1} parent=1 // pred_check
      _
    $region43: #{tpu_custom_call.1} parent=1 // pred_check_branch
      %86 = sbr.rel (0) target = $region45
    $region44: #{tpu_custom_call.1} parent=1 // pred_region
      _
    $region45: #{tpu_custom_call.1} parent=1 // pred_fallthru
      _
    // Predicated region
    $region46: #{tpu_custom_call.1} parent=1 // pred_check
      _
    $region47: #{tpu_custom_call.1} parent=1 // pred_check_branch
      %88 = sbr.rel (0) target = $region49
    $region48: #{tpu_custom_call.1} parent=1 // pred_region
      _
    $region49: #{tpu_custom_call.1} parent=1 // pred_fallthru
      _
    // Predicated region
    $region50: #{tpu_custom_call.1} parent=1 // pred_check
      _
    $region51: #{tpu_custom_call.1} parent=1 // pred_check_branch
      %90 = sbr.rel (0) target = $region53
    $region52: #{tpu_custom_call.1} parent=1 // pred_region
      _
    $region53: #{tpu_custom_call.1} parent=1 // pred_fallthru
      _
    // Predicated region
    $region54: #{tpu_custom_call.1} parent=1 // pred_check
      _
    $region55: #{tpu_custom_call.1} parent=1 // pred_check_branch
      %92 = sbr.rel (0) target = $region57
    $region56: #{tpu_custom_call.1} parent=1 // pred_region
      _
    $region57: #{tpu_custom_call.1} parent=1 // pred_fallthru
      _
    // Predicated region
    $region58: #{tpu_custom_call.1} parent=1 // pred_check
      _
    $region59: #{tpu_custom_call.1} parent=1 // pred_check_branch
      %94 = sbr.rel (0) target = $region61
    $region60: #{tpu_custom_call.1} parent=1 // pred_region
      _
    $region61: #{tpu_custom_call.1} parent=1 // pred_fallthru
      _
    // Predicated region
    $region62: #{tpu_custom_call.1} parent=1 // pred_check
      _
    $region63: #{tpu_custom_call.1} parent=1 // pred_check_branch
      %96 = sbr.rel (0) target = $region65
    $region64: #{tpu_custom_call.1} parent=1 // pred_region
      _
    $region65: #{tpu_custom_call.1} parent=1 // pred_fallthru
      _
    // Predicated region
    $region66: #{tpu_custom_call.1} parent=1 // pred_check
      _
    $region67: #{tpu_custom_call.1} parent=1 // pred_check_branch
      %98 = sbr.rel (0) target = $region69
    $region68: #{tpu_custom_call.1} parent=1 // pred_region
      _
    $region69: #{tpu_custom_call.1} parent=1 // pred_fallthru
      _
    // Predicated region
    $region70: #{tpu_custom_call.1} parent=1 // pred_check
      _
    $region71: #{tpu_custom_call.1} parent=1 // pred_check_branch
      %100 = sbr.rel (0) target = $region73
    $region72: #{tpu_custom_call.1} parent=1 // pred_region
      _
    $region73: #{tpu_custom_call.1} parent=1 // pred_fallthru
      _
    // Predicated region
    $region74: #{tpu_custom_call.1} parent=1 // pred_check
      _
    $region75: #{tpu_custom_call.1} parent=1 // pred_check_branch
      %102 = sbr.rel (0) target = $region77
    $region76: #{tpu_custom_call.1} parent=1 // pred_region
      _
    $region77: #{tpu_custom_call.1} parent=1 // pred_fallthru
      _
    // Predicated region
    $region78: #{tpu_custom_call.1} parent=1 // pred_check
      _
    $region79: #{tpu_custom_call.1} parent=1 // pred_check_branch
      %104 = sbr.rel (0) target = $region81
    $region80: #{tpu_custom_call.1} parent=1 // pred_region
      _
    $region81: #{tpu_custom_call.1} parent=1 // pred_fallthru
      _
    // Predicated region
    $region82: #{tpu_custom_call.1} parent=1 // pred_check
      _
    $region83: #{tpu_custom_call.1} parent=1 // pred_check_branch
      %106 = sbr.rel (0) target = $region85
    $region84: #{tpu_custom_call.1} parent=1 // pred_region
      _
    $region85: #{tpu_custom_call.1} parent=1 // pred_fallthru
      _
    // Predicated region
    $region86: #{tpu_custom_call.1} parent=1 // pred_check
      _
    $region87: #{tpu_custom_call.1} parent=1 // pred_check_branch
      %108 = sbr.rel (0) target = $region89
    $region88: #{tpu_custom_call.1} parent=1 // pred_region
      _
    $region89: #{tpu_custom_call.1} parent=1 // pred_fallthru
      _
    // Predicated region
    $region90: #{tpu_custom_call.1} parent=1 // pred_check
      _
    $region91: #{tpu_custom_call.1} parent=1 // pred_check_branch
      %110 = sbr.rel (0) target = $region93
    $region92: #{tpu_custom_call.1} parent=1 // pred_region
      _
    $region93: #{tpu_custom_call.1} parent=1 // pred_fallthru
      _
    // Predicated region
    $region94: #{tpu_custom_call.1} parent=1 // pred_check
      _
    $region95: #{tpu_custom_call.1} parent=1 // pred_check_branch
      %112 = sbr.rel (0) target = $region97
    $region96: #{tpu_custom_call.1} parent=1 // pred_region
      _
    $region97: #{tpu_custom_call.1} parent=1 // pred_fallthru
      _
    // Predicated region
    $region98: #{tpu_custom_call.1} parent=1 // pred_check
      _
    $region99: #{tpu_custom_call.1} parent=1 // pred_check_branch
      %114 = sbr.rel (0) target = $region101
    $region100: #{tpu_custom_call.1} parent=1 // pred_region
      _
    $region101: #{tpu_custom_call.1} parent=1 // pred_fallthru
      _
    // Predicated region
    $region102: #{tpu_custom_call.1} parent=1 // pred_check
      _
    $region103: #{tpu_custom_call.1} parent=1 // pred_check_branch
      %116 = sbr.rel (0) target = $region105
    $region104: #{tpu_custom_call.1} parent=1 // pred_region
      _
    $region105: #{tpu_custom_call.1} parent=1 // pred_fallthru
      _
    // Predicated region
    $region106: #{tpu_custom_call.1} parent=1 // pred_check
      _
    $region107: #{tpu_custom_call.1} parent=1 // pred_check_branch
      %118 = sbr.rel (0) target = $region109
    $region108: #{tpu_custom_call.1} parent=1 // pred_region
      _
    $region109: #{tpu_custom_call.1} parent=1 // pred_fallthru
      _
    // Predicated region
    $region110: #{tpu_custom_call.1} parent=1 // pred_check
      _
    $region111: #{tpu_custom_call.1} parent=1 // pred_check_branch
      %120 = sbr.rel (0) target = $region113
    $region112: #{tpu_custom_call.1} parent=1 // pred_region
      _
    $region113: #{tpu_custom_call.1} parent=1 // pred_fallthru
      _
    // Predicated region
    $region114: #{tpu_custom_call.1} parent=1 // pred_check
      _
    $region115: #{tpu_custom_call.1} parent=1 // pred_check_branch
      %122 = sbr.rel (0) target = $region117
    $region116: #{tpu_custom_call.1} parent=1 // pred_region
      _
    $region117: #{tpu_custom_call.1} parent=1 // pred_fallthru
      _
    %v123 = vld [vmem:[%s1] sm:$0xff]
    %v124 = vld [vmem:[%s1 + $0x8] sm:$0xff]
    %v125 = vlaneseq
    %v126 = vand.u32 %v125, 127
    %127 = vset.pattern.permute.xlu0 0
    %128 = vperm.xlu0 %127, %v123
    %v129 = vpop.permute.xlu0 %128
    %130 = vset.pattern.permute.xlu0 0
    %131 = vperm.xlu0 %130, %v124
    %v132 = vpop.permute.xlu0 %131
    %vm133 = vcmp.eq.s32.totalorder %v126, %v129
    %vm134 = vcmp.eq.s32.totalorder %v126, %v132
    %v135 = vsel %vm133, 1, 0
    %v136 = vsel %vm134, 1, 0
    %v137 = vcvt.s32.f32 %v135
    %v138 = vcvt.s32.f32 %v136
    %v139 = vld [vmem:[%s3] sm:$0xff]
    %v140 = vld [vmem:[%s3 + $0x8] sm:$0xff]
    %v141 = vld [vmem:[%s3 + $0x10] sm:$0xff]
    %v142 = vld [vmem:[%s3 + $0x18] sm:$0xff]
    %v143 = vld [vmem:[%s3 + $0x20] sm:$0xff]
    %v144 = vld [vmem:[%s3 + $0x28] sm:$0xff]
    %v145 = vld [vmem:[%s3 + $0x30] sm:$0xff]
    %v146 = vld [vmem:[%s3 + $0x38] sm:$0xff]
    %v147 = vld [vmem:[%s5 + $0x8] sm:$0xff]
    %vm148 = vcmask 523264
    %v150 = vsel %vm148, %v137, 0
    %v153 = vsel %vm148, %v138, 0
    %155 = vmatprep.subr.mxu0 0.0
    %156 = vmatpush1.msra.mxu0 0.0
    %157 = vmatprep.subr.mxu0 0.0
    %158 = vmatpush1.msra.mxu0 0.0
    %159 = vmatprep.subr.mxu0 0.0
    %160 = vmatpush1.msra.mxu0 0.0
    %161 = vmatprep.subr.mxu0 0.0
    %162 = vmatpush1.msra.mxu0 0.0
    %163 = vmatprep.subr.mxu0 0.0
    %164 = vmatpush1.msra.mxu0 0.0
    %165 = vmatprep.subr.mxu0 0.0
    %166 = vmatpush1.msra.mxu0 0.0
    %167 = vmatprep.subr.mxu0 0.0
    %168 = vmatpush1.msra.mxu0 0.0
    %169 = vmatprep.subr.mxu0 0.0
    %170 = vmatpush1.msra.mxu0 0.0
    %171 = vmatprep.subr.mxu0 0.0
    %172 = vmatpush1.msra.mxu0 %v146
    %173 = vmatprep.subr.mxu0 0.0
    %174 = vmatpush1.msra.mxu0 %v145
    %175 = vmatprep.subr.mxu0 0.0
    %176 = vmatpush1.msra.mxu0 %v144
    %177 = vmatprep.subr.mxu0 0.0
    %178 = vmatpush1.msra.mxu0 %v143
    %179 = vmatprep.subr.mxu0 0.0
    %180 = vmatpush1.msra.mxu0 %v142
    %181 = vmatprep.subr.mxu0 0.0
    %182 = vmatpush1.msra.mxu0 %v141
    %183 = vmatprep.subr.mxu0 0.0
    %184 = vmatpush1.msra.mxu0 %v140
    %185 = vmatprep.subr.mxu0 0.0
    %186 = vmatpush1.msra.mxu0 %v139
    %187 = vmatprep.subr.mxu0 0.0
    %188 = vmatpush2.msra.mxu0 0.0
    %189 = vmatprep.subr.mxu0 0.0
    %190 = vmatpush2.msra.mxu0 0.0
    %191 = vmatprep.subr.mxu0 0.0
    %192 = vmatpush2.msra.mxu0 0.0
    %193 = vmatprep.subr.mxu0 0.0
    %194 = vmatpush2.msra.mxu0 0.0
    %195 = vmatprep.subr.mxu0 0.0
    %196 = vmatpush2.msra.mxu0 0.0
    %197 = vmatprep.subr.mxu0 0.0
    %198 = vmatpush2.msra.mxu0 0.0
    %199 = vmatprep.subr.mxu0 0.0
    %200 = vmatpush2.msra.mxu0 0.0
    %201 = vmatprep.subr.mxu0 0.0
    %202 = vmatpush2.msra.mxu0 0.0
    %203 = vmatprep.subr.mxu0 0.0
    %204 = vmatpush2.msra.mxu0 0.0
    %205 = vmatprep.subr.mxu0 0.0
    %206 = vmatpush2.msra.mxu0 0.0
    %207 = vmatprep.subr.mxu0 0.0
    %208 = vmatpush2.msra.mxu0 0.0
    %209 = vmatprep.subr.mxu0 0.0
    %210 = vmatpush2.msra.mxu0 0.0
    %211 = vmatprep.subr.mxu0 0.0
    %212 = vmatpush2.msra.mxu0 0.0
    %213 = vmatprep.subr.mxu0 0.0
    %214 = vmatpush2.msra.mxu0 0.0
    %215 = vmatprep.subr.mxu0 0.0
    %216 = vmatpush2.msra.mxu0 0.0
    %217 = vmatprep.subr.mxu0 0.0
    %218 = vmatpush2.msra.mxu0 0.0
    %219 = vmatprep.mubr.f32.mxu0 0.0
    %220 = vmatmul.mubr.f32.gmra.mxu0 %v150
    %v221 = vpop.f32.mrf.mxu0
    %v222 = vadd.f32 %v147, %v221
    %v223 = vpop.f32.mrf.mxu0
    %224 = vmatprep.mubr.f32.mxu0 0.0
    %225 = vmatmul.mubr.f32.gmra.mxu0 %v153
    %v226 = vpop.f32.mrf.mxu0
    %v227 = vadd.f32 %v147, %v226
    %v228 = vpop.f32.mrf.mxu0
    %229 = vdwg.mxu0
    %vm230 = vcmask 261120
    %v231 = vsel %vm230, %v222, 0.0
    %232 = vadd.xlane.f32.xlu0 %v231
    %v233 = vpop.xlane.xlu0 %232
    %v234 = vsel %vm230, %v227, 0.0
    %235 = vadd.xlane.f32.xlu0 %v234
    %v236 = vpop.xlane.xlu0 %235
    %v237 = vrcp.pop 32.0
    %v238 = vmul.f32 %v233, %v237
    %v239 = vmul.f32 %v236, %v237
    %v240 = vsub.f32 %v222, %v238
    %v241 = vsub.f32 %v227, %v239
    %v242 = vmul.f32 %v240, %v240
    %v243 = vmul.f32 %v241, %v241
    %v244 = vsel %vm230, %v242, 0.0
    %245 = vadd.xlane.f32.xlu0 %v244
    %v246 = vpop.xlane.xlu0 %245
    %v247 = vsel %vm230, %v243, 0.0
    %248 = vadd.xlane.f32.xlu0 %v247
    %v249 = vpop.xlane.xlu0 %248
    %v250 = vmul.f32 %v246, %v237
    %v251 = vmul.f32 %v249, %v237
    %v252 = vadd.f32 %v250, 1e-05
    %v253 = vadd.f32 %v251, 1e-05
    %v254 = vrsqrt.pop %v252
    %v255 = vrsqrt.pop %v253
    %v256 = vmul.f32 %v240, %v254
    %v257 = vmul.f32 %v241, %v255
    %v258 = vld [vmem:[%s7] sm:$0x1]
    %v260 = vlaneseq
    %v261 = vshrl.u32 %v260, 7
    %v262 = vsub.s32 0, %v261
    %v263 = vrot.slane %v258, %v262
    %v265 = vmul.f32 %v256, %v263
    %v266 = vmul.f32 %v257, %v263
    %v267 = vld [vmem:[%s9] sm:$0x1]
    %v269 = vlaneseq
    %v270 = vshrl.u32 %v269, 7
    %v271 = vsub.s32 0, %v270
    %v272 = vrot.slane %v267, %v271
    %v274 = vadd.f32 %v265, %v272
    %v275 = vadd.f32 %v266, %v272
    %v276 = vld [vmem:[%s11] sm:$0xff]
    %v277 = vld [vmem:[%s11 + $0x8] sm:$0xff]
    %v278 = vld [vmem:[%s11 + $0x10] sm:$0xff]
    %v279 = vld [vmem:[%s11 + $0x18] sm:$0xff]
    %v280 = vld [vmem:[%s13] sm:$0x1]
    %v282 = vlaneseq
    %v283 = vshrl.u32 %v282, 7
    %v284 = vsub.s32 0, %v283
    %v285 = vrot.slane %v280, %v284
    %v288 = vsel %vm230, %v274, 0
    %v291 = vsel %vm230, %v275, 0
    %293 = vmatprep.subr.mxu0 0.0
    %294 = vmatpush1.msra.mxu0 0.0
    %295 = vmatprep.subr.mxu0 0.0
    %296 = vmatpush1.msra.mxu0 0.0
    %297 = vmatprep.subr.mxu0 0.0
    %298 = vmatpush1.msra.mxu0 0.0
    %299 = vmatprep.subr.mxu0 0.0
    %300 = vmatpush1.msra.mxu0 0.0
    %301 = vmatprep.subr.mxu0 0.0
    %302 = vmatpush1.msra.mxu0 0.0
    %303 = vmatprep.subr.mxu0 0.0
    %304 = vmatpush1.msra.mxu0 0.0
    %305 = vmatprep.subr.mxu0 0.0
    %306 = vmatpush1.msra.mxu0 0.0
    %307 = vmatprep.subr.mxu0 0.0
    %308 = vmatpush1.msra.mxu0 0.0
    %309 = vmatprep.subr.mxu0 0.0
    %310 = vmatpush1.msra.mxu0 0.0
    %311 = vmatprep.subr.mxu0 0.0
    %312 = vmatpush1.msra.mxu0 0.0
    %313 = vmatprep.subr.mxu0 0.0
    %314 = vmatpush1.msra.mxu0 0.0
    %315 = vmatprep.subr.mxu0 0.0
    %316 = vmatpush1.msra.mxu0 0.0
    %317 = vmatprep.subr.mxu0 0.0
    %318 = vmatpush1.msra.mxu0 %v279
    %319 = vmatprep.subr.mxu0 0.0
    %320 = vmatpush1.msra.mxu0 %v278
    %321 = vmatprep.subr.mxu0 0.0
    %322 = vmatpush1.msra.mxu0 %v277
    %323 = vmatprep.subr.mxu0 0.0
    %324 = vmatpush1.msra.mxu0 %v276
    %325 = vmatprep.subr.mxu0 0.0
    %326 = vmatpush2.msra.mxu0 0.0
    %327 = vmatprep.subr.mxu0 0.0
    %328 = vmatpush2.msra.mxu0 0.0
    %329 = vmatprep.subr.mxu0 0.0
    %330 = vmatpush2.msra.mxu0 0.0
    %331 = vmatprep.subr.mxu0 0.0
    %332 = vmatpush2.msra.mxu0 0.0
    %333 = vmatprep.subr.mxu0 0.0
    %334 = vmatpush2.msra.mxu0 0.0
    %335 = vmatprep.subr.mxu0 0.0
    %336 = vmatpush2.msra.mxu0 0.0
    %337 = vmatprep.subr.mxu0 0.0
    %338 = vmatpush2.msra.mxu0 0.0
    %339 = vmatprep.subr.mxu0 0.0
    %340 = vmatpush2.msra.mxu0 0.0
    %341 = vmatprep.subr.mxu0 0.0
    %342 = vmatpush2.msra.mxu0 0.0
    %343 = vmatprep.subr.mxu0 0.0
    %344 = vmatpush2.msra.mxu0 0.0
    %345 = vmatprep.subr.mxu0 0.0
    %346 = vmatpush2.msra.mxu0 0.0
    %347 = vmatprep.subr.mxu0 0.0
    %348 = vmatpush2.msra.mxu0 0.0
    %349 = vmatprep.subr.mxu0 0.0
    %350 = vmatpush2.msra.mxu0 0.0
    %351 = vmatprep.subr.mxu0 0.0
    %352 = vmatpush2.msra.mxu0 0.0
    %353 = vmatprep.subr.mxu0 0.0
    %354 = vmatpush2.msra.mxu0 0.0
    %355 = vmatprep.subr.mxu0 0.0
    %356 = vmatpush2.msra.mxu0 0.0
    %357 = vmatprep.mubr.f32.mxu0 0.0
    %358 = vmatmul.mubr.f32.gmra.mxu0 %v288
    %v359 = vpop.f32.mrf.mxu0
    %v360 = vadd.f32 %v285, %v359
    %v361 = vpop.f32.mrf.mxu0
    %362 = vmatprep.mubr.f32.mxu0 0.0
    %363 = vmatmul.mubr.f32.gmra.mxu0 %v291
    %v364 = vpop.f32.mrf.mxu0
    %v365 = vadd.f32 %v285, %v364
    %v366 = vpop.f32.mrf.mxu0
    %367 = vdwg.mxu0
    %369 = vrot.lane.b32.xlu0 %v360, 96
    %v370 = vpop.permute.xlu0 %369
    %vm371 = vcmask 64512
    %v372 = vsel %vm371, %v360, 0
    %v374 = vsel %vm371, %v370, 0
    %376 = vmatprep.subr.mxu0 0.0
    %377 = vmatpush1.xpose.msra.mxu0 0.0
    %378 = vmatprep.subr.mxu0 0.0
    %379 = vmatpush1.xpose.msra.mxu0 0.0
    %380 = vmatprep.subr.mxu0 0.0
    %381 = vmatpush1.xpose.msra.mxu0 0.0
    %382 = vmatprep.subr.mxu0 0.0
    %383 = vmatpush1.xpose.msra.mxu0 0.0
    %384 = vmatprep.subr.mxu0 0.0
    %385 = vmatpush1.xpose.msra.mxu0 0.0
    %386 = vmatprep.subr.mxu0 0.0
    %387 = vmatpush1.xpose.msra.mxu0 0.0
    %388 = vmatprep.subr.mxu0 0.0
    %389 = vmatpush1.xpose.msra.mxu0 0.0
    %390 = vmatprep.subr.mxu0 0.0
    %391 = vmatpush1.xpose.msra.mxu0 0.0
    %392 = vmatprep.subr.mxu0 0.0
    %393 = vmatpush1.xpose.msra.mxu0 0.0
    %394 = vmatprep.subr.mxu0 0.0
    %395 = vmatpush1.xpose.msra.mxu0 0.0
    %396 = vmatprep.subr.mxu0 0.0
    %397 = vmatpush1.xpose.msra.mxu0 0.0
    %398 = vmatprep.subr.mxu0 0.0
    %399 = vmatpush1.xpose.msra.mxu0 0.0
    %400 = vmatprep.subr.mxu0 0.0
    %401 = vmatpush1.xpose.msra.mxu0 0.0
    %402 = vmatprep.subr.mxu0 0.0
    %403 = vmatpush1.xpose.msra.mxu0 0.0
    %404 = vmatprep.subr.mxu0 0.0
    %405 = vmatpush1.xpose.msra.mxu0 0.0
    %406 = vmatprep.subr.mxu0 0.0
    %407 = vmatpush1.xpose.msra.mxu0 %v374
    %408 = vmatprep.subr.mxu0 0.0
    %409 = vmatpush2.xpose.msra.mxu0 0.0
    %410 = vmatprep.subr.mxu0 0.0
    %411 = vmatpush2.xpose.msra.mxu0 0.0
    %412 = vmatprep.subr.mxu0 0.0
    %413 = vmatpush2.xpose.msra.mxu0 0.0
    %414 = vmatprep.subr.mxu0 0.0
    %415 = vmatpush2.xpose.msra.mxu0 0.0
    %416 = vmatprep.subr.mxu0 0.0
    %417 = vmatpush2.xpose.msra.mxu0 0.0
    %418 = vmatprep.subr.mxu0 0.0
    %419 = vmatpush2.xpose.msra.mxu0 0.0
    %420 = vmatprep.subr.mxu0 0.0
    %421 = vmatpush2.xpose.msra.mxu0 0.0
    %422 = vmatprep.subr.mxu0 0.0
    %423 = vmatpush2.xpose.msra.mxu0 0.0
    %424 = vmatprep.subr.mxu0 0.0
    %425 = vmatpush2.xpose.msra.mxu0 0.0
    %426 = vmatprep.subr.mxu0 0.0
    %427 = vmatpush2.xpose.msra.mxu0 0.0
    %428 = vmatprep.subr.mxu0 0.0
    %429 = vmatpush2.xpose.msra.mxu0 0.0
    %430 = vmatprep.subr.mxu0 0.0
    %431 = vmatpush2.xpose.msra.mxu0 0.0
    %432 = vmatprep.subr.mxu0 0.0
    %433 = vmatpush2.xpose.msra.mxu0 0.0
    %434 = vmatprep.subr.mxu0 0.0
    %435 = vmatpush2.xpose.msra.mxu0 0.0
    %436 = vmatprep.subr.mxu0 0.0
    %437 = vmatpush2.xpose.msra.mxu0 0.0
    %438 = vmatprep.subr.mxu0 0.0
    %439 = vmatpush2.xpose.msra.mxu0 0.0
    %440 = vmatprep.mubr.f32.mxu0 0.0
    %441 = vmatmul.mubr.f32.gmra.mxu0 %v372
    %v442 = vpop.f32.mrf.mxu0
    %v443 = vadd.f32 0.0, %v442
    %v444 = vpop.f32.mrf.mxu0
    %445 = vdwg.mxu0
    %447 = vrot.lane.b32.xlu0 %v365, 96
    %v448 = vpop.permute.xlu0 %447
    %v449 = vsel %vm371, %v365, 0
    %v451 = vsel %vm371, %v448, 0
    %453 = vmatprep.subr.mxu0 0.0
    %454 = vmatpush1.xpose.msra.mxu0 0.0
    %455 = vmatprep.subr.mxu0 0.0
    %456 = vmatpush1.xpose.msra.mxu0 0.0
    %457 = vmatprep.subr.mxu0 0.0
    %458 = vmatpush1.xpose.msra.mxu0 0.0
    %459 = vmatprep.subr.mxu0 0.0
    %460 = vmatpush1.xpose.msra.mxu0 0.0
    %461 = vmatprep.subr.mxu0 0.0
    %462 = vmatpush1.xpose.msra.mxu0 0.0
    %463 = vmatprep.subr.mxu0 0.0
    %464 = vmatpush1.xpose.msra.mxu0 0.0
    %465 = vmatprep.subr.mxu0 0.0
    %466 = vmatpush1.xpose.msra.mxu0 0.0
    %467 = vmatprep.subr.mxu0 0.0
    %468 = vmatpush1.xpose.msra.mxu0 0.0
    %469 = vmatprep.subr.mxu0 0.0
    %470 = vmatpush1.xpose.msra.mxu0 0.0
    %471 = vmatprep.subr.mxu0 0.0
    %472 = vmatpush1.xpose.msra.mxu0 0.0
    %473 = vmatprep.subr.mxu0 0.0
    %474 = vmatpush1.xpose.msra.mxu0 0.0
    %475 = vmatprep.subr.mxu0 0.0
    %476 = vmatpush1.xpose.msra.mxu0 0.0
    %477 = vmatprep.subr.mxu0 0.0
    %478 = vmatpush1.xpose.msra.mxu0 0.0
    %479 = vmatprep.subr.mxu0 0.0
    %480 = vmatpush1.xpose.msra.mxu0 0.0
    %481 = vmatprep.subr.mxu0 0.0
    %482 = vmatpush1.xpose.msra.mxu0 0.0
    %483 = vmatprep.subr.mxu0 0.0
    %484 = vmatpush1.xpose.msra.mxu0 %v451
    %485 = vmatprep.subr.mxu0 0.0
    %486 = vmatpush2.xpose.msra.mxu0 0.0
    %487 = vmatprep.subr.mxu0 0.0
    %488 = vmatpush2.xpose.msra.mxu0 0.0
    %489 = vmatprep.subr.mxu0 0.0
    %490 = vmatpush2.xpose.msra.mxu0 0.0
    %491 = vmatprep.subr.mxu0 0.0
    %492 = vmatpush2.xpose.msra.mxu0 0.0
    %493 = vmatprep.subr.mxu0 0.0
    %494 = vmatpush2.xpose.msra.mxu0 0.0
    %495 = vmatprep.subr.mxu0 0.0
    %496 = vmatpush2.xpose.msra.mxu0 0.0
    %497 = vmatprep.subr.mxu0 0.0
    %498 = vmatpush2.xpose.msra.mxu0 0.0
    %499 = vmatprep.subr.mxu0 0.0
    %500 = vmatpush2.xpose.msra.mxu0 0.0
    %501 = vmatprep.subr.mxu0 0.0
    %502 = vmatpush2.xpose.msra.mxu0 0.0
    %503 = vmatprep.subr.mxu0 0.0
    %504 = vmatpush2.xpose.msra.mxu0 0.0
    %505 = vmatprep.subr.mxu0 0.0
    %506 = vmatpush2.xpose.msra.mxu0 0.0
    %507 = vmatprep.subr.mxu0 0.0
    %508 = vmatpush2.xpose.msra.mxu0 0.0
    %509 = vmatprep.subr.mxu0 0.0
    %510 = vmatpush2.xpose.msra.mxu0 0.0
    %511 = vmatprep.subr.mxu0 0.0
    %512 = vmatpush2.xpose.msra.mxu0 0.0
    %513 = vmatprep.subr.mxu0 0.0
    %514 = vmatpush2.xpose.msra.mxu0 0.0
    %515 = vmatprep.subr.mxu0 0.0
    %516 = vmatpush2.xpose.msra.mxu0 0.0
    %517 = vmatprep.mubr.f32.mxu0 0.0
    %518 = vmatmul.mubr.f32.gmra.mxu0 %v449
    %v519 = vpop.f32.mrf.mxu0
    %v520 = vadd.f32 0.0, %v519
    %v521 = vpop.f32.mrf.mxu0
    %522 = vdwg.mxu0
    %v523 = vmul.f32 %v443, 0.35355338
    %v524 = vmul.f32 %v520, 0.35355338
    %v525 = vlaneseq
    %v526 = vshrl.u32 %v525, 7
    %vm527 = vcmp.le.s32.totalorder %v126, %v526
    %v528 = vsel %vm527, %v523, -1e+30
    %v529 = vsel %vm527, %v524, -1e+30
    %v530 = vsel %vm371, %v528, -inf
    %531 = vmax.xlane.f32.xlu0 %v530
    %v532 = vpop.xlane.xlu0 %531
    %v533 = vsel %vm371, %v529, -inf
    %534 = vmax.xlane.f32.xlu0 %v533
    %v535 = vpop.xlane.xlu0 %534
    %v536 = vmax.f32 %v532, 0.0
    %v537 = vmax.f32 %v535, 0.0
    %v538 = vsub.f32 %v528, %v536
    %v539 = vsub.f32 %v529, %v537
    %v540 = vmul.f32 %v538, 1.442695
    %v541 = vpow.pop %v540
    %v542 = vmul.f32 %v539, 1.442695
    %v543 = vpow.pop %v542
    %v544 = vsel %vm371, %v541, 0.0
    %545 = vadd.xlane.f32.xlu0 %v544
    %v546 = vpop.xlane.xlu0 %545
    %v547 = vsel %vm371, %v543, 0.0
    %548 = vadd.xlane.f32.xlu0 %v547
    %v549 = vpop.xlane.xlu0 %548
    %v550 = vsub.f32 0.0, %v536
    %v551 = vsub.f32 0.0, %v537
    %v552 = vmul.f32 %v550, 1.442695
    %v553 = vpow.pop %v552
    %v554 = vmul.f32 %v551, 1.442695
    %v555 = vpow.pop %v554
    %v556 = vmul.f32 %v553, 8.0
    %v557 = vmul.f32 %v555, 8.0
    %v558 = vadd.f32 %v546, %v556
    %v559 = vadd.f32 %v549, %v557
    %560 = vrot.lane.b32.xlu0 %v360, 64
    %v561 = vpop.permute.xlu0 %560
    %v564 = vsel %vm371, %v541, 0
    %566 = vmatprep.subr.mxu0 0.0
    %567 = vmatpush1.msra.mxu0 0.0
    %568 = vmatprep.subr.mxu0 0.0
    %569 = vmatpush1.msra.mxu0 0.0
    %570 = vmatprep.subr.mxu0 0.0
    %571 = vmatpush1.msra.mxu0 0.0
    %572 = vmatprep.subr.mxu0 0.0
    %573 = vmatpush1.msra.mxu0 0.0
    %574 = vmatprep.subr.mxu0 0.0
    %575 = vmatpush1.msra.mxu0 0.0
    %576 = vmatprep.subr.mxu0 0.0
    %577 = vmatpush1.msra.mxu0 0.0
    %578 = vmatprep.subr.mxu0 0.0
    %579 = vmatpush1.msra.mxu0 0.0
    %580 = vmatprep.subr.mxu0 0.0
    %581 = vmatpush1.msra.mxu0 0.0
    %582 = vmatprep.subr.mxu0 0.0
    %583 = vmatpush1.msra.mxu0 0.0
    %584 = vmatprep.subr.mxu0 0.0
    %585 = vmatpush1.msra.mxu0 0.0
    %586 = vmatprep.subr.mxu0 0.0
    %587 = vmatpush1.msra.mxu0 0.0
    %588 = vmatprep.subr.mxu0 0.0
    %589 = vmatpush1.msra.mxu0 0.0
    %590 = vmatprep.subr.mxu0 0.0
    %591 = vmatpush1.msra.mxu0 0.0
    %592 = vmatprep.subr.mxu0 0.0
    %593 = vmatpush1.msra.mxu0 0.0
    %594 = vmatprep.subr.mxu0 0.0
    %595 = vmatpush1.msra.mxu0 0.0
    %596 = vmatprep.subr.mxu0 0.0
    %597 = vmatpush1.msra.mxu0 %v561
    %598 = vmatprep.subr.mxu0 0.0
    %599 = vmatpush2.msra.mxu0 0.0
    %600 = vmatprep.subr.mxu0 0.0
    %601 = vmatpush2.msra.mxu0 0.0
    %602 = vmatprep.subr.mxu0 0.0
    %603 = vmatpush2.msra.mxu0 0.0
    %604 = vmatprep.subr.mxu0 0.0
    %605 = vmatpush2.msra.mxu0 0.0
    %606 = vmatprep.subr.mxu0 0.0
    %607 = vmatpush2.msra.mxu0 0.0
    %608 = vmatprep.subr.mxu0 0.0
    %609 = vmatpush2.msra.mxu0 0.0
    %610 = vmatprep.subr.mxu0 0.0
    %611 = vmatpush2.msra.mxu0 0.0
    %612 = vmatprep.subr.mxu0 0.0
    %613 = vmatpush2.msra.mxu0 0.0
    %614 = vmatprep.subr.mxu0 0.0
    %615 = vmatpush2.msra.mxu0 0.0
    %616 = vmatprep.subr.mxu0 0.0
    %617 = vmatpush2.msra.mxu0 0.0
    %618 = vmatprep.subr.mxu0 0.0
    %619 = vmatpush2.msra.mxu0 0.0
    %620 = vmatprep.subr.mxu0 0.0
    %621 = vmatpush2.msra.mxu0 0.0
    %622 = vmatprep.subr.mxu0 0.0
    %623 = vmatpush2.msra.mxu0 0.0
    %624 = vmatprep.subr.mxu0 0.0
    %625 = vmatpush2.msra.mxu0 0.0
    %626 = vmatprep.subr.mxu0 0.0
    %627 = vmatpush2.msra.mxu0 0.0
    %628 = vmatprep.subr.mxu0 0.0
    %629 = vmatpush2.msra.mxu0 0.0
    %630 = vmatprep.mubr.f32.mxu0 0.0
    %631 = vmatmul.mubr.f32.gmra.mxu0 %v564
    %v632 = vpop.f32.mrf.mxu0
    %v633 = vadd.f32 0.0, %v632
    %v634 = vpop.f32.mrf.mxu0
    %635 = vdwg.mxu0
    %636 = vrot.lane.b32.xlu0 %v365, 64
    %v637 = vpop.permute.xlu0 %636
    %v640 = vsel %vm371, %v543, 0
    %642 = vmatprep.subr.mxu0 0.0
    %643 = vmatpush1.msra.mxu0 0.0
    %644 = vmatprep.subr.mxu0 0.0
    %645 = vmatpush1.msra.mxu0 0.0
    %646 = vmatprep.subr.mxu0 0.0
    %647 = vmatpush1.msra.mxu0 0.0
    %648 = vmatprep.subr.mxu0 0.0
    %649 = vmatpush1.msra.mxu0 0.0
    %650 = vmatprep.subr.mxu0 0.0
    %651 = vmatpush1.msra.mxu0 0.0
    %652 = vmatprep.subr.mxu0 0.0
    %653 = vmatpush1.msra.mxu0 0.0
    %654 = vmatprep.subr.mxu0 0.0
    %655 = vmatpush1.msra.mxu0 0.0
    %656 = vmatprep.subr.mxu0 0.0
    %657 = vmatpush1.msra.mxu0 0.0
    %658 = vmatprep.subr.mxu0 0.0
    %659 = vmatpush1.msra.mxu0 0.0
    %660 = vmatprep.subr.mxu0 0.0
    %661 = vmatpush1.msra.mxu0 0.0
    %662 = vmatprep.subr.mxu0 0.0
    %663 = vmatpush1.msra.mxu0 0.0
    %664 = vmatprep.subr.mxu0 0.0
    %665 = vmatpush1.msra.mxu0 0.0
    %666 = vmatprep.subr.mxu0 0.0
    %667 = vmatpush1.msra.mxu0 0.0
    %668 = vmatprep.subr.mxu0 0.0
    %669 = vmatpush1.msra.mxu0 0.0
    %670 = vmatprep.subr.mxu0 0.0
    %671 = vmatpush1.msra.mxu0 0.0
    %672 = vmatprep.subr.mxu0 0.0
    %673 = vmatpush1.msra.mxu0 %v637
    %674 = vmatprep.subr.mxu0 0.0
    %675 = vmatpush2.msra.mxu0 0.0
    %676 = vmatprep.subr.mxu0 0.0
    %677 = vmatpush2.msra.mxu0 0.0
    %678 = vmatprep.subr.mxu0 0.0
    %679 = vmatpush2.msra.mxu0 0.0
    %680 = vmatprep.subr.mxu0 0.0
    %681 = vmatpush2.msra.mxu0 0.0
    %682 = vmatprep.subr.mxu0 0.0
    %683 = vmatpush2.msra.mxu0 0.0
    %684 = vmatprep.subr.mxu0 0.0
    %685 = vmatpush2.msra.mxu0 0.0
    %686 = vmatprep.subr.mxu0 0.0
    %687 = vmatpush2.msra.mxu0 0.0
    %688 = vmatprep.subr.mxu0 0.0
    %689 = vmatpush2.msra.mxu0 0.0
    %690 = vmatprep.subr.mxu0 0.0
    %691 = vmatpush2.msra.mxu0 0.0
    %692 = vmatprep.subr.mxu0 0.0
    %693 = vmatpush2.msra.mxu0 0.0
    %694 = vmatprep.subr.mxu0 0.0
    %695 = vmatpush2.msra.mxu0 0.0
    %696 = vmatprep.subr.mxu0 0.0
    %697 = vmatpush2.msra.mxu0 0.0
    %698 = vmatprep.subr.mxu0 0.0
    %699 = vmatpush2.msra.mxu0 0.0
    %700 = vmatprep.subr.mxu0 0.0
    %701 = vmatpush2.msra.mxu0 0.0
    %702 = vmatprep.subr.mxu0 0.0
    %703 = vmatpush2.msra.mxu0 0.0
    %704 = vmatprep.subr.mxu0 0.0
    %705 = vmatpush2.msra.mxu0 0.0
    %706 = vmatprep.mubr.f32.mxu0 0.0
    %707 = vmatmul.mubr.f32.gmra.mxu0 %v640
    %v708 = vpop.f32.mrf.mxu0
    %v709 = vadd.f32 0.0, %v708
    %v710 = vpop.f32.mrf.mxu0
    %711 = vdwg.mxu0
    %v712 = vrcp.pop %v558
    %v713 = vmul.f32 %v633, %v712
    %v714 = vrcp.pop %v559
    %v715 = vmul.f32 %v709, %v714
    %716 = vrot.lane.b32.xlu0 %v360, 120
    %v717 = vpop.permute.xlu0 %716
    %718 = vrot.lane.b32.xlu0 %v360, 88
    %v719 = vpop.permute.xlu0 %718
    %v720 = vsel %vm371, %v717, 0
    %v722 = vsel %vm371, %v719, 0
    %724 = vmatprep.subr.mxu0 0.0
    %725 = vmatpush1.xpose.msra.mxu0 0.0
    %726 = vmatprep.subr.mxu0 0.0
    %727 = vmatpush1.xpose.msra.mxu0 0.0
    %728 = vmatprep.subr.mxu0 0.0
    %729 = vmatpush1.xpose.msra.mxu0 0.0
    %730 = vmatprep.subr.mxu0 0.0
    %731 = vmatpush1.xpose.msra.mxu0 0.0
    %732 = vmatprep.subr.mxu0 0.0
    %733 = vmatpush1.xpose.msra.mxu0 0.0
    %734 = vmatprep.subr.mxu0 0.0
    %735 = vmatpush1.xpose.msra.mxu0 0.0
    %736 = vmatprep.subr.mxu0 0.0
    %737 = vmatpush1.xpose.msra.mxu0 0.0
    %738 = vmatprep.subr.mxu0 0.0
    %739 = vmatpush1.xpose.msra.mxu0 0.0
    %740 = vmatprep.subr.mxu0 0.0
    %741 = vmatpush1.xpose.msra.mxu0 0.0
    %742 = vmatprep.subr.mxu0 0.0
    %743 = vmatpush1.xpose.msra.mxu0 0.0
    %744 = vmatprep.subr.mxu0 0.0
    %745 = vmatpush1.xpose.msra.mxu0 0.0
    %746 = vmatprep.subr.mxu0 0.0
    %747 = vmatpush1.xpose.msra.mxu0 0.0
    %748 = vmatprep.subr.mxu0 0.0
    %749 = vmatpush1.xpose.msra.mxu0 0.0
    %750 = vmatprep.subr.mxu0 0.0
    %751 = vmatpush1.xpose.msra.mxu0 0.0
    %752 = vmatprep.subr.mxu0 0.0
    %753 = vmatpush1.xpose.msra.mxu0 0.0
    %754 = vmatprep.subr.mxu0 0.0
    %755 = vmatpush1.xpose.msra.mxu0 %v722
    %756 = vmatprep.subr.mxu0 0.0
    %757 = vmatpush2.xpose.msra.mxu0 0.0
    %758 = vmatprep.subr.mxu0 0.0
    %759 = vmatpush2.xpose.msra.mxu0 0.0
    %760 = vmatprep.subr.mxu0 0.0
    %761 = vmatpush2.xpose.msra.mxu0 0.0
    %762 = vmatprep.subr.mxu0 0.0
    %763 = vmatpush2.xpose.msra.mxu0 0.0
    %764 = vmatprep.subr.mxu0 0.0
    %765 = vmatpush2.xpose.msra.mxu0 0.0
    %766 = vmatprep.subr.mxu0 0.0
    %767 = vmatpush2.xpose.msra.mxu0 0.0
    %768 = vmatprep.subr.mxu0 0.0
    %769 = vmatpush2.xpose.msra.mxu0 0.0
    %770 = vmatprep.subr.mxu0 0.0
    %771 = vmatpush2.xpose.msra.mxu0 0.0
    %772 = vmatprep.subr.mxu0 0.0
    %773 = vmatpush2.xpose.msra.mxu0 0.0
    %774 = vmatprep.subr.mxu0 0.0
    %775 = vmatpush2.xpose.msra.mxu0 0.0
    %776 = vmatprep.subr.mxu0 0.0
    %777 = vmatpush2.xpose.msra.mxu0 0.0
    %778 = vmatprep.subr.mxu0 0.0
    %779 = vmatpush2.xpose.msra.mxu0 0.0
    %780 = vmatprep.subr.mxu0 0.0
    %781 = vmatpush2.xpose.msra.mxu0 0.0
    %782 = vmatprep.subr.mxu0 0.0
    %783 = vmatpush2.xpose.msra.mxu0 0.0
    %784 = vmatprep.subr.mxu0 0.0
    %785 = vmatpush2.xpose.msra.mxu0 0.0
    %786 = vmatprep.subr.mxu0 0.0
    %787 = vmatpush2.xpose.msra.mxu0 0.0
    %788 = vmatprep.mubr.f32.mxu0 0.0
    %789 = vmatmul.mubr.f32.gmra.mxu0 %v720
    %v790 = vpop.f32.mrf.mxu0
    %v791 = vadd.f32 0.0, %v790
    %v792 = vpop.f32.mrf.mxu0
    %793 = vdwg.mxu0
    %794 = vrot.lane.b32.xlu0 %v365, 120
    %v795 = vpop.permute.xlu0 %794
    %796 = vrot.lane.b32.xlu0 %v365, 88
    %v797 = vpop.permute.xlu0 %796
    %v798 = vsel %vm371, %v795, 0
    %v800 = vsel %vm371, %v797, 0
    %802 = vmatprep.subr.mxu0 0.0
    %803 = vmatpush1.xpose.msra.mxu0 0.0
    %804 = vmatprep.subr.mxu0 0.0
    %805 = vmatpush1.xpose.msra.mxu0 0.0
    %806 = vmatprep.subr.mxu0 0.0
    %807 = vmatpush1.xpose.msra.mxu0 0.0
    %808 = vmatprep.subr.mxu0 0.0
    %809 = vmatpush1.xpose.msra.mxu0 0.0
    %810 = vmatprep.subr.mxu0 0.0
    %811 = vmatpush1.xpose.msra.mxu0 0.0
    %812 = vmatprep.subr.mxu0 0.0
    %813 = vmatpush1.xpose.msra.mxu0 0.0
    %814 = vmatprep.subr.mxu0 0.0
    %815 = vmatpush1.xpose.msra.mxu0 0.0
    %816 = vmatprep.subr.mxu0 0.0
    %817 = vmatpush1.xpose.msra.mxu0 0.0
    %818 = vmatprep.subr.mxu0 0.0
    %819 = vmatpush1.xpose.msra.mxu0 0.0
    %820 = vmatprep.subr.mxu0 0.0
    %821 = vmatpush1.xpose.msra.mxu0 0.0
    %822 = vmatprep.subr.mxu0 0.0
    %823 = vmatpush1.xpose.msra.mxu0 0.0
    %824 = vmatprep.subr.mxu0 0.0
    %825 = vmatpush1.xpose.msra.mxu0 0.0
    %826 = vmatprep.subr.mxu0 0.0
    %827 = vmatpush1.xpose.msra.mxu0 0.0
    %828 = vmatprep.subr.mxu0 0.0
    %829 = vmatpush1.xpose.msra.mxu0 0.0
    %830 = vmatprep.subr.mxu0 0.0
    %831 = vmatpush1.xpose.msra.mxu0 0.0
    %832 = vmatprep.subr.mxu0 0.0
    %833 = vmatpush1.xpose.msra.mxu0 %v800
    %834 = vmatprep.subr.mxu0 0.0
    %835 = vmatpush2.xpose.msra.mxu0 0.0
    %836 = vmatprep.subr.mxu0 0.0
    %837 = vmatpush2.xpose.msra.mxu0 0.0
    %838 = vmatprep.subr.mxu0 0.0
    %839 = vmatpush2.xpose.msra.mxu0 0.0
    %840 = vmatprep.subr.mxu0 0.0
    %841 = vmatpush2.xpose.msra.mxu0 0.0
    %842 = vmatprep.subr.mxu0 0.0
    %843 = vmatpush2.xpose.msra.mxu0 0.0
    %844 = vmatprep.subr.mxu0 0.0
    %845 = vmatpush2.xpose.msra.mxu0 0.0
    %846 = vmatprep.subr.mxu0 0.0
    %847 = vmatpush2.xpose.msra.mxu0 0.0
    %848 = vmatprep.subr.mxu0 0.0
    %849 = vmatpush2.xpose.msra.mxu0 0.0
    %850 = vmatprep.subr.mxu0 0.0
    %851 = vmatpush2.xpose.msra.mxu0 0.0
    %852 = vmatprep.subr.mxu0 0.0
    %853 = vmatpush2.xpose.msra.mxu0 0.0
    %854 = vmatprep.subr.mxu0 0.0
    %855 = vmatpush2.xpose.msra.mxu0 0.0
    %856 = vmatprep.subr.mxu0 0.0
    %857 = vmatpush2.xpose.msra.mxu0 0.0
    %858 = vmatprep.subr.mxu0 0.0
    %859 = vmatpush2.xpose.msra.mxu0 0.0
    %860 = vmatprep.subr.mxu0 0.0
    %861 = vmatpush2.xpose.msra.mxu0 0.0
    %862 = vmatprep.subr.mxu0 0.0
    %863 = vmatpush2.xpose.msra.mxu0 0.0
    %864 = vmatprep.subr.mxu0 0.0
    %865 = vmatpush2.xpose.msra.mxu0 0.0
    %866 = vmatprep.mubr.f32.mxu0 0.0
    %867 = vmatmul.mubr.f32.gmra.mxu0 %v798
    %v868 = vpop.f32.mrf.mxu0
    %v869 = vadd.f32 0.0, %v868
    %v870 = vpop.f32.mrf.mxu0
    %871 = vdwg.mxu0
    %v872 = vmul.f32 %v791, 0.35355338
    %v873 = vmul.f32 %v869, 0.35355338
    %v874 = vsel %vm527, %v872, -1e+30
    %v875 = vsel %vm527, %v873, -1e+30
    %v876 = vsel %vm371, %v874, -inf
    %877 = vmax.xlane.f32.xlu0 %v876
    %v878 = vpop.xlane.xlu0 %877
    %v879 = vsel %vm371, %v875, -inf
    %880 = vmax.xlane.f32.xlu0 %v879
    %v881 = vpop.xlane.xlu0 %880
    %v882 = vmax.f32 %v878, 0.0
    %v883 = vmax.f32 %v881, 0.0
    %v884 = vsub.f32 %v874, %v882
    %v885 = vsub.f32 %v875, %v883
    %v886 = vmul.f32 %v884, 1.442695
    %v887 = vpow.pop %v886
    %v888 = vmul.f32 %v885, 1.442695
    %v889 = vpow.pop %v888
    %v890 = vsel %vm371, %v887, 0.0
    %891 = vadd.xlane.f32.xlu0 %v890
    %v892 = vpop.xlane.xlu0 %891
    %v893 = vsel %vm371, %v889, 0.0
    %894 = vadd.xlane.f32.xlu0 %v893
    %v895 = vpop.xlane.xlu0 %894
    %v896 = vsub.f32 0.0, %v882
    %v897 = vsub.f32 0.0, %v883
    %v898 = vmul.f32 %v896, 1.442695
    %v899 = vpow.pop %v898
    %v900 = vmul.f32 %v897, 1.442695
    %v901 = vpow.pop %v900
    %v902 = vmul.f32 %v899, 8.0
    %v903 = vmul.f32 %v901, 8.0
    %v904 = vadd.f32 %v892, %v902
    %v905 = vadd.f32 %v895, %v903
    %906 = vrot.lane.b32.xlu0 %v360, 56
    %v907 = vpop.permute.xlu0 %906
    %v910 = vsel %vm371, %v887, 0
    %912 = vmatprep.subr.mxu0 0.0
    %913 = vmatpush1.msra.mxu0 0.0
    %914 = vmatprep.subr.mxu0 0.0
    %915 = vmatpush1.msra.mxu0 0.0
    %916 = vmatprep.subr.mxu0 0.0
    %917 = vmatpush1.msra.mxu0 0.0
    %918 = vmatprep.subr.mxu0 0.0
    %919 = vmatpush1.msra.mxu0 0.0
    %920 = vmatprep.subr.mxu0 0.0
    %921 = vmatpush1.msra.mxu0 0.0
    %922 = vmatprep.subr.mxu0 0.0
    %923 = vmatpush1.msra.mxu0 0.0
    %924 = vmatprep.subr.mxu0 0.0
    %925 = vmatpush1.msra.mxu0 0.0
    %926 = vmatprep.subr.mxu0 0.0
    %927 = vmatpush1.msra.mxu0 0.0
    %928 = vmatprep.subr.mxu0 0.0
    %929 = vmatpush1.msra.mxu0 0.0
    %930 = vmatprep.subr.mxu0 0.0
    %931 = vmatpush1.msra.mxu0 0.0
    %932 = vmatprep.subr.mxu0 0.0
    %933 = vmatpush1.msra.mxu0 0.0
    %934 = vmatprep.subr.mxu0 0.0
    %935 = vmatpush1.msra.mxu0 0.0
    %936 = vmatprep.subr.mxu0 0.0
    %937 = vmatpush1.msra.mxu0 0.0
    %938 = vmatprep.subr.mxu0 0.0
    %939 = vmatpush1.msra.mxu0 0.0
    %940 = vmatprep.subr.mxu0 0.0
    %941 = vmatpush1.msra.mxu0 0.0
    %942 = vmatprep.subr.mxu0 0.0
    %943 = vmatpush1.msra.mxu0 %v907
    %944 = vmatprep.subr.mxu0 0.0
    %945 = vmatpush2.msra.mxu0 0.0
    %946 = vmatprep.subr.mxu0 0.0
    %947 = vmatpush2.msra.mxu0 0.0
    %948 = vmatprep.subr.mxu0 0.0
    %949 = vmatpush2.msra.mxu0 0.0
    %950 = vmatprep.subr.mxu0 0.0
    %951 = vmatpush2.msra.mxu0 0.0
    %952 = vmatprep.subr.mxu0 0.0
    %953 = vmatpush2.msra.mxu0 0.0
    %954 = vmatprep.subr.mxu0 0.0
    %955 = vmatpush2.msra.mxu0 0.0
    %956 = vmatprep.subr.mxu0 0.0
    %957 = vmatpush2.msra.mxu0 0.0
    %958 = vmatprep.subr.mxu0 0.0
    %959 = vmatpush2.msra.mxu0 0.0
    %960 = vmatprep.subr.mxu0 0.0
    %961 = vmatpush2.msra.mxu0 0.0
    %962 = vmatprep.subr.mxu0 0.0
    %963 = vmatpush2.msra.mxu0 0.0
    %964 = vmatprep.subr.mxu0 0.0
    %965 = vmatpush2.msra.mxu0 0.0
    %966 = vmatprep.subr.mxu0 0.0
    %967 = vmatpush2.msra.mxu0 0.0
    %968 = vmatprep.subr.mxu0 0.0
    %969 = vmatpush2.msra.mxu0 0.0
    %970 = vmatprep.subr.mxu0 0.0
    %971 = vmatpush2.msra.mxu0 0.0
    %972 = vmatprep.subr.mxu0 0.0
    %973 = vmatpush2.msra.mxu0 0.0
    %974 = vmatprep.subr.mxu0 0.0
    %975 = vmatpush2.msra.mxu0 0.0
    %976 = vmatprep.mubr.f32.mxu0 0.0
    %977 = vmatmul.mubr.f32.gmra.mxu0 %v910
    %v978 = vpop.f32.mrf.mxu0
    %v979 = vadd.f32 0.0, %v978
    %v980 = vpop.f32.mrf.mxu0
    %981 = vdwg.mxu0
    %982 = vrot.lane.b32.xlu0 %v365, 56
    %v983 = vpop.permute.xlu0 %982
    %v986 = vsel %vm371, %v889, 0
    %988 = vmatprep.subr.mxu0 0.0
    %989 = vmatpush1.msra.mxu0 0.0
    %990 = vmatprep.subr.mxu0 0.0
    %991 = vmatpush1.msra.mxu0 0.0
    %992 = vmatprep.subr.mxu0 0.0
    %993 = vmatpush1.msra.mxu0 0.0
    %994 = vmatprep.subr.mxu0 0.0
    %995 = vmatpush1.msra.mxu0 0.0
    %996 = vmatprep.subr.mxu0 0.0
    %997 = vmatpush1.msra.mxu0 0.0
    %998 = vmatprep.subr.mxu0 0.0
    %999 = vmatpush1.msra.mxu0 0.0
    %1000 = vmatprep.subr.mxu0 0.0
    %1001 = vmatpush1.msra.mxu0 0.0
    %1002 = vmatprep.subr.mxu0 0.0
    %1003 = vmatpush1.msra.mxu0 0.0
    %1004 = vmatprep.subr.mxu0 0.0
    %1005 = vmatpush1.msra.mxu0 0.0
    %1006 = vmatprep.subr.mxu0 0.0
    %1007 = vmatpush1.msra.mxu0 0.0
    %1008 = vmatprep.subr.mxu0 0.0
    %1009 = vmatpush1.msra.mxu0 0.0
    %1010 = vmatprep.subr.mxu0 0.0
    %1011 = vmatpush1.msra.mxu0 0.0
    %1012 = vmatprep.subr.mxu0 0.0
    %1013 = vmatpush1.msra.mxu0 0.0
    %1014 = vmatprep.subr.mxu0 0.0
    %1015 = vmatpush1.msra.mxu0 0.0
    %1016 = vmatprep.subr.mxu0 0.0
    %1017 = vmatpush1.msra.mxu0 0.0
    %1018 = vmatprep.subr.mxu0 0.0
    %1019 = vmatpush1.msra.mxu0 %v983
    %1020 = vmatprep.subr.mxu0 0.0
    %1021 = vmatpush2.msra.mxu0 0.0
    %1022 = vmatprep.subr.mxu0 0.0
    %1023 = vmatpush2.msra.mxu0 0.0
    %1024 = vmatprep.subr.mxu0 0.0
    %1025 = vmatpush2.msra.mxu0 0.0
    %1026 = vmatprep.subr.mxu0 0.0
    %1027 = vmatpush2.msra.mxu0 0.0
    %1028 = vmatprep.subr.mxu0 0.0
    %1029 = vmatpush2.msra.mxu0 0.0
    %1030 = vmatprep.subr.mxu0 0.0
    %1031 = vmatpush2.msra.mxu0 0.0
    %1032 = vmatprep.subr.mxu0 0.0
    %1033 = vmatpush2.msra.mxu0 0.0
    %1034 = vmatprep.subr.mxu0 0.0
    %1035 = vmatpush2.msra.mxu0 0.0
    %1036 = vmatprep.subr.mxu0 0.0
    %1037 = vmatpush2.msra.mxu0 0.0
    %1038 = vmatprep.subr.mxu0 0.0
    %1039 = vmatpush2.msra.mxu0 0.0
    %1040 = vmatprep.subr.mxu0 0.0
    %1041 = vmatpush2.msra.mxu0 0.0
    %1042 = vmatprep.subr.mxu0 0.0
    %1043 = vmatpush2.msra.mxu0 0.0
    %1044 = vmatprep.subr.mxu0 0.0
    %1045 = vmatpush2.msra.mxu0 0.0
    %1046 = vmatprep.subr.mxu0 0.0
    %1047 = vmatpush2.msra.mxu0 0.0
    %1048 = vmatprep.subr.mxu0 0.0
    %1049 = vmatpush2.msra.mxu0 0.0
    %1050 = vmatprep.subr.mxu0 0.0
    %1051 = vmatpush2.msra.mxu0 0.0
    %1052 = vmatprep.mubr.f32.mxu0 0.0
    %1053 = vmatmul.mubr.f32.gmra.mxu0 %v986
    %v1054 = vpop.f32.mrf.mxu0
    %v1055 = vadd.f32 0.0, %v1054
    %v1056 = vpop.f32.mrf.mxu0
    %1057 = vdwg.mxu0
    %v1058 = vrcp.pop %v904
    %v1059 = vmul.f32 %v979, %v1058
    %v1060 = vrcp.pop %v905
    %v1061 = vmul.f32 %v1055, %v1060
    %1062 = vrot.lane.b32.xlu0 %v360, 112
    %v1063 = vpop.permute.xlu0 %1062
    %1064 = vrot.lane.b32.xlu0 %v360, 80
    %v1065 = vpop.permute.xlu0 %1064
    %v1066 = vsel %vm371, %v1063, 0
    %v1068 = vsel %vm371, %v1065, 0
    %1070 = vmatprep.subr.mxu0 0.0
    %1071 = vmatpush1.xpose.msra.mxu0 0.0
    %1072 = vmatprep.subr.mxu0 0.0
    %1073 = vmatpush1.xpose.msra.mxu0 0.0
    %1074 = vmatprep.subr.mxu0 0.0
    %1075 = vmatpush1.xpose.msra.mxu0 0.0
    %1076 = vmatprep.subr.mxu0 0.0
    %1077 = vmatpush1.xpose.msra.mxu0 0.0
    %1078 = vmatprep.subr.mxu0 0.0
    %1079 = vmatpush1.xpose.msra.mxu0 0.0
    %1080 = vmatprep.subr.mxu0 0.0
    %1081 = vmatpush1.xpose.msra.mxu0 0.0
    %1082 = vmatprep.subr.mxu0 0.0
    %1083 = vmatpush1.xpose.msra.mxu0 0.0
    %1084 = vmatprep.subr.mxu0 0.0
    %1085 = vmatpush1.xpose.msra.mxu0 0.0
    %1086 = vmatprep.subr.mxu0 0.0
    %1087 = vmatpush1.xpose.msra.mxu0 0.0
    %1088 = vmatprep.subr.mxu0 0.0
    %1089 = vmatpush1.xpose.msra.mxu0 0.0
    %1090 = vmatprep.subr.mxu0 0.0
    %1091 = vmatpush1.xpose.msra.mxu0 0.0
    %1092 = vmatprep.subr.mxu0 0.0
    %1093 = vmatpush1.xpose.msra.mxu0 0.0
    %1094 = vmatprep.subr.mxu0 0.0
    %1095 = vmatpush1.xpose.msra.mxu0 0.0
    %1096 = vmatprep.subr.mxu0 0.0
    %1097 = vmatpush1.xpose.msra.mxu0 0.0
    %1098 = vmatprep.subr.mxu0 0.0
    %1099 = vmatpush1.xpose.msra.mxu0 0.0
    %1100 = vmatprep.subr.mxu0 0.0
    %1101 = vmatpush1.xpose.msra.mxu0 %v1068
    %1102 = vmatprep.subr.mxu0 0.0
    %1103 = vmatpush2.xpose.msra.mxu0 0.0
    %1104 = vmatprep.subr.mxu0 0.0
    %1105 = vmatpush2.xpose.msra.mxu0 0.0
    %1106 = vmatprep.subr.mxu0 0.0
    %1107 = vmatpush2.xpose.msra.mxu0 0.0
    %1108 = vmatprep.subr.mxu0 0.0
    %1109 = vmatpush2.xpose.msra.mxu0 0.0
    %1110 = vmatprep.subr.mxu0 0.0
    %1111 = vmatpush2.xpose.msra.mxu0 0.0
    %1112 = vmatprep.subr.mxu0 0.0
    %1113 = vmatpush2.xpose.msra.mxu0 0.0
    %1114 = vmatprep.subr.mxu0 0.0
    %1115 = vmatpush2.xpose.msra.mxu0 0.0
    %1116 = vmatprep.subr.mxu0 0.0
    %1117 = vmatpush2.xpose.msra.mxu0 0.0
    %1118 = vmatprep.subr.mxu0 0.0
    %1119 = vmatpush2.xpose.msra.mxu0 0.0
    %1120 = vmatprep.subr.mxu0 0.0
    %1121 = vmatpush2.xpose.msra.mxu0 0.0
    %1122 = vmatprep.subr.mxu0 0.0
    %1123 = vmatpush2.xpose.msra.mxu0 0.0
    %1124 = vmatprep.subr.mxu0 0.0
    %1125 = vmatpush2.xpose.msra.mxu0 0.0
    %1126 = vmatprep.subr.mxu0 0.0
    %1127 = vmatpush2.xpose.msra.mxu0 0.0
    %1128 = vmatprep.subr.mxu0 0.0
    %1129 = vmatpush2.xpose.msra.mxu0 0.0
    %1130 = vmatprep.subr.mxu0 0.0
    %1131 = vmatpush2.xpose.msra.mxu0 0.0
    %1132 = vmatprep.subr.mxu0 0.0
    %1133 = vmatpush2.xpose.msra.mxu0 0.0
    %1134 = vmatprep.mubr.f32.mxu0 0.0
    %1135 = vmatmul.mubr.f32.gmra.mxu0 %v1066
    %v1136 = vpop.f32.mrf.mxu0
    %v1137 = vadd.f32 0.0, %v1136
    %v1138 = vpop.f32.mrf.mxu0
    %1139 = vdwg.mxu0
    %1140 = vrot.lane.b32.xlu0 %v365, 112
    %v1141 = vpop.permute.xlu0 %1140
    %1142 = vrot.lane.b32.xlu0 %v365, 80
    %v1143 = vpop.permute.xlu0 %1142
    %v1144 = vsel %vm371, %v1141, 0
    %v1146 = vsel %vm371, %v1143, 0
    %1148 = vmatprep.subr.mxu0 0.0
    %1149 = vmatpush1.xpose.msra.mxu0 0.0
    %1150 = vmatprep.subr.mxu0 0.0
    %1151 = vmatpush1.xpose.msra.mxu0 0.0
    %1152 = vmatprep.subr.mxu0 0.0
    %1153 = vmatpush1.xpose.msra.mxu0 0.0
    %1154 = vmatprep.subr.mxu0 0.0
    %1155 = vmatpush1.xpose.msra.mxu0 0.0
    %1156 = vmatprep.subr.mxu0 0.0
    %1157 = vmatpush1.xpose.msra.mxu0 0.0
    %1158 = vmatprep.subr.mxu0 0.0
    %1159 = vmatpush1.xpose.msra.mxu0 0.0
    %1160 = vmatprep.subr.mxu0 0.0
    %1161 = vmatpush1.xpose.msra.mxu0 0.0
    %1162 = vmatprep.subr.mxu0 0.0
    %1163 = vmatpush1.xpose.msra.mxu0 0.0
    %1164 = vmatprep.subr.mxu0 0.0
    %1165 = vmatpush1.xpose.msra.mxu0 0.0
    %1166 = vmatprep.subr.mxu0 0.0
    %1167 = vmatpush1.xpose.msra.mxu0 0.0
    %1168 = vmatprep.subr.mxu0 0.0
    %1169 = vmatpush1.xpose.msra.mxu0 0.0
    %1170 = vmatprep.subr.mxu0 0.0
    %1171 = vmatpush1.xpose.msra.mxu0 0.0
    %1172 = vmatprep.subr.mxu0 0.0
    %1173 = vmatpush1.xpose.msra.mxu0 0.0
    %1174 = vmatprep.subr.mxu0 0.0
    %1175 = vmatpush1.xpose.msra.mxu0 0.0
    %1176 = vmatprep.subr.mxu0 0.0
    %1177 = vmatpush1.xpose.msra.mxu0 0.0
    %1178 = vmatprep.subr.mxu0 0.0
    %1179 = vmatpush1.xpose.msra.mxu0 %v1146
    %1180 = vmatprep.subr.mxu0 0.0
    %1181 = vmatpush2.xpose.msra.mxu0 0.0
    %1182 = vmatprep.subr.mxu0 0.0
    %1183 = vmatpush2.xpose.msra.mxu0 0.0
    %1184 = vmatprep.subr.mxu0 0.0
    %1185 = vmatpush2.xpose.msra.mxu0 0.0
    %1186 = vmatprep.subr.mxu0 0.0
    %1187 = vmatpush2.xpose.msra.mxu0 0.0
    %1188 = vmatprep.subr.mxu0 0.0
    %1189 = vmatpush2.xpose.msra.mxu0 0.0
    %1190 = vmatprep.subr.mxu0 0.0
    %1191 = vmatpush2.xpose.msra.mxu0 0.0
    %1192 = vmatprep.subr.mxu0 0.0
    %1193 = vmatpush2.xpose.msra.mxu0 0.0
    %1194 = vmatprep.subr.mxu0 0.0
    %1195 = vmatpush2.xpose.msra.mxu0 0.0
    %1196 = vmatprep.subr.mxu0 0.0
    %1197 = vmatpush2.xpose.msra.mxu0 0.0
    %1198 = vmatprep.subr.mxu0 0.0
    %1199 = vmatpush2.xpose.msra.mxu0 0.0
    %1200 = vmatprep.subr.mxu0 0.0
    %1201 = vmatpush2.xpose.msra.mxu0 0.0
    %1202 = vmatprep.subr.mxu0 0.0
    %1203 = vmatpush2.xpose.msra.mxu0 0.0
    %1204 = vmatprep.subr.mxu0 0.0
    %1205 = vmatpush2.xpose.msra.mxu0 0.0
    %1206 = vmatprep.subr.mxu0 0.0
    %1207 = vmatpush2.xpose.msra.mxu0 0.0
    %1208 = vmatprep.subr.mxu0 0.0
    %1209 = vmatpush2.xpose.msra.mxu0 0.0
    %1210 = vmatprep.subr.mxu0 0.0
    %1211 = vmatpush2.xpose.msra.mxu0 0.0
    %1212 = vmatprep.mubr.f32.mxu0 0.0
    %1213 = vmatmul.mubr.f32.gmra.mxu0 %v1144
    %v1214 = vpop.f32.mrf.mxu0
    %v1215 = vadd.f32 0.0, %v1214
    %v1216 = vpop.f32.mrf.mxu0
    %1217 = vdwg.mxu0
    %v1218 = vmul.f32 %v1137, 0.35355338
    %v1219 = vmul.f32 %v1215, 0.35355338
    %v1220 = vsel %vm527, %v1218, -1e+30
    %v1221 = vsel %vm527, %v1219, -1e+30
    %v1222 = vsel %vm371, %v1220, -inf
    %1223 = vmax.xlane.f32.xlu0 %v1222
    %v1224 = vpop.xlane.xlu0 %1223
    %v1225 = vsel %vm371, %v1221, -inf
    %1226 = vmax.xlane.f32.xlu0 %v1225
    %v1227 = vpop.xlane.xlu0 %1226
    %v1228 = vmax.f32 %v1224, 0.0
    %v1229 = vmax.f32 %v1227, 0.0
    %v1230 = vsub.f32 %v1220, %v1228
    %v1231 = vsub.f32 %v1221, %v1229
    %v1232 = vmul.f32 %v1230, 1.442695
    %v1233 = vpow.pop %v1232
    %v1234 = vmul.f32 %v1231, 1.442695
    %v1235 = vpow.pop %v1234
    %v1236 = vsel %vm371, %v1233, 0.0
    %1237 = vadd.xlane.f32.xlu0 %v1236
    %v1238 = vpop.xlane.xlu0 %1237
    %v1239 = vsel %vm371, %v1235, 0.0
    %1240 = vadd.xlane.f32.xlu0 %v1239
    %v1241 = vpop.xlane.xlu0 %1240
    %v1242 = vsub.f32 0.0, %v1228
    %v1243 = vsub.f32 0.0, %v1229
    %v1244 = vmul.f32 %v1242, 1.442695
    %v1245 = vpow.pop %v1244
    %v1246 = vmul.f32 %v1243, 1.442695
    %v1247 = vpow.pop %v1246
    %v1248 = vmul.f32 %v1245, 8.0
    %v1249 = vmul.f32 %v1247, 8.0
    %v1250 = vadd.f32 %v1238, %v1248
    %v1251 = vadd.f32 %v1241, %v1249
    %1252 = vrot.lane.b32.xlu0 %v360, 48
    %v1253 = vpop.permute.xlu0 %1252
    %v1256 = vsel %vm371, %v1233, 0
    %1258 = vmatprep.subr.mxu0 0.0
    %1259 = vmatpush1.msra.mxu0 0.0
    %1260 = vmatprep.subr.mxu0 0.0
    %1261 = vmatpush1.msra.mxu0 0.0
    %1262 = vmatprep.subr.mxu0 0.0
    %1263 = vmatpush1.msra.mxu0 0.0
    %1264 = vmatprep.subr.mxu0 0.0
    %1265 = vmatpush1.msra.mxu0 0.0
    %1266 = vmatprep.subr.mxu0 0.0
    %1267 = vmatpush1.msra.mxu0 0.0
    %1268 = vmatprep.subr.mxu0 0.0
    %1269 = vmatpush1.msra.mxu0 0.0
    %1270 = vmatprep.subr.mxu0 0.0
    %1271 = vmatpush1.msra.mxu0 0.0
    %1272 = vmatprep.subr.mxu0 0.0
    %1273 = vmatpush1.msra.mxu0 0.0
    %1274 = vmatprep.subr.mxu0 0.0
    %1275 = vmatpush1.msra.mxu0 0.0
    %1276 = vmatprep.subr.mxu0 0.0
    %1277 = vmatpush1.msra.mxu0 0.0
    %1278 = vmatprep.subr.mxu0 0.0
    %1279 = vmatpush1.msra.mxu0 0.0
    %1280 = vmatprep.subr.mxu0 0.0
    %1281 = vmatpush1.msra.mxu0 0.0
    %1282 = vmatprep.subr.mxu0 0.0
    %1283 = vmatpush1.msra.mxu0 0.0
    %1284 = vmatprep.subr.mxu0 0.0
    %1285 = vmatpush1.msra.mxu0 0.0
    %1286 = vmatprep.subr.mxu0 0.0
    %1287 = vmatpush1.msra.mxu0 0.0
    %1288 = vmatprep.subr.mxu0 0.0
    %1289 = vmatpush1.msra.mxu0 %v1253
    %1290 = vmatprep.subr.mxu0 0.0
    %1291 = vmatpush2.msra.mxu0 0.0
    %1292 = vmatprep.subr.mxu0 0.0
    %1293 = vmatpush2.msra.mxu0 0.0
    %1294 = vmatprep.subr.mxu0 0.0
    %1295 = vmatpush2.msra.mxu0 0.0
    %1296 = vmatprep.subr.mxu0 0.0
    %1297 = vmatpush2.msra.mxu0 0.0
    %1298 = vmatprep.subr.mxu0 0.0
    %1299 = vmatpush2.msra.mxu0 0.0
    %1300 = vmatprep.subr.mxu0 0.0
    %1301 = vmatpush2.msra.mxu0 0.0
    %1302 = vmatprep.subr.mxu0 0.0
    %1303 = vmatpush2.msra.mxu0 0.0
    %1304 = vmatprep.subr.mxu0 0.0
    %1305 = vmatpush2.msra.mxu0 0.0
    %1306 = vmatprep.subr.mxu0 0.0
    %1307 = vmatpush2.msra.mxu0 0.0
    %1308 = vmatprep.subr.mxu0 0.0
    %1309 = vmatpush2.msra.mxu0 0.0
    %1310 = vmatprep.subr.mxu0 0.0
    %1311 = vmatpush2.msra.mxu0 0.0
    %1312 = vmatprep.subr.mxu0 0.0
    %1313 = vmatpush2.msra.mxu0 0.0
    %1314 = vmatprep.subr.mxu0 0.0
    %1315 = vmatpush2.msra.mxu0 0.0
    %1316 = vmatprep.subr.mxu0 0.0
    %1317 = vmatpush2.msra.mxu0 0.0
    %1318 = vmatprep.subr.mxu0 0.0
    %1319 = vmatpush2.msra.mxu0 0.0
    %1320 = vmatprep.subr.mxu0 0.0
    %1321 = vmatpush2.msra.mxu0 0.0
    %1322 = vmatprep.mubr.f32.mxu0 0.0
    %1323 = vmatmul.mubr.f32.gmra.mxu0 %v1256
    %v1324 = vpop.f32.mrf.mxu0
    %v1325 = vadd.f32 0.0, %v1324
    %v1326 = vpop.f32.mrf.mxu0
    %1327 = vdwg.mxu0
    %1328 = vrot.lane.b32.xlu0 %v365, 48
    %v1329 = vpop.permute.xlu0 %1328
    %v1332 = vsel %vm371, %v1235, 0
    %1334 = vmatprep.subr.mxu0 0.0
    %1335 = vmatpush1.msra.mxu0 0.0
    %1336 = vmatprep.subr.mxu0 0.0
    %1337 = vmatpush1.msra.mxu0 0.0
    %1338 = vmatprep.subr.mxu0 0.0
    %1339 = vmatpush1.msra.mxu0 0.0
    %1340 = vmatprep.subr.mxu0 0.0
    %1341 = vmatpush1.msra.mxu0 0.0
    %1342 = vmatprep.subr.mxu0 0.0
    %1343 = vmatpush1.msra.mxu0 0.0
    %1344 = vmatprep.subr.mxu0 0.0
    %1345 = vmatpush1.msra.mxu0 0.0
    %1346 = vmatprep.subr.mxu0 0.0
    %1347 = vmatpush1.msra.mxu0 0.0
    %1348 = vmatprep.subr.mxu0 0.0
    %1349 = vmatpush1.msra.mxu0 0.0
    %1350 = vmatprep.subr.mxu0 0.0
    %1351 = vmatpush1.msra.mxu0 0.0
    %1352 = vmatprep.subr.mxu0 0.0
    %1353 = vmatpush1.msra.mxu0 0.0
    %1354 = vmatprep.subr.mxu0 0.0
    %1355 = vmatpush1.msra.mxu0 0.0
    %1356 = vmatprep.subr.mxu0 0.0
    %1357 = vmatpush1.msra.mxu0 0.0
    %1358 = vmatprep.subr.mxu0 0.0
    %1359 = vmatpush1.msra.mxu0 0.0
    %1360 = vmatprep.subr.mxu0 0.0
    %1361 = vmatpush1.msra.mxu0 0.0
    %1362 = vmatprep.subr.mxu0 0.0
    %1363 = vmatpush1.msra.mxu0 0.0
    %1364 = vmatprep.subr.mxu0 0.0
    %1365 = vmatpush1.msra.mxu0 %v1329
    %1366 = vmatprep.subr.mxu0 0.0
    %1367 = vmatpush2.msra.mxu0 0.0
    %1368 = vmatprep.subr.mxu0 0.0
    %1369 = vmatpush2.msra.mxu0 0.0
    %1370 = vmatprep.subr.mxu0 0.0
    %1371 = vmatpush2.msra.mxu0 0.0
    %1372 = vmatprep.subr.mxu0 0.0
    %1373 = vmatpush2.msra.mxu0 0.0
    %1374 = vmatprep.subr.mxu0 0.0
    %1375 = vmatpush2.msra.mxu0 0.0
    %1376 = vmatprep.subr.mxu0 0.0
    %1377 = vmatpush2.msra.mxu0 0.0
    %1378 = vmatprep.subr.mxu0 0.0
    %1379 = vmatpush2.msra.mxu0 0.0
    %1380 = vmatprep.subr.mxu0 0.0
    %1381 = vmatpush2.msra.mxu0 0.0
    %1382 = vmatprep.subr.mxu0 0.0
    %1383 = vmatpush2.msra.mxu0 0.0
    %1384 = vmatprep.subr.mxu0 0.0
    %1385 = vmatpush2.msra.mxu0 0.0
    %1386 = vmatprep.subr.mxu0 0.0
    %1387 = vmatpush2.msra.mxu0 0.0
    %1388 = vmatprep.subr.mxu0 0.0
    %1389 = vmatpush2.msra.mxu0 0.0
    %1390 = vmatprep.subr.mxu0 0.0
    %1391 = vmatpush2.msra.mxu0 0.0
    %1392 = vmatprep.subr.mxu0 0.0
    %1393 = vmatpush2.msra.mxu0 0.0
    %1394 = vmatprep.subr.mxu0 0.0
    %1395 = vmatpush2.msra.mxu0 0.0
    %1396 = vmatprep.subr.mxu0 0.0
    %1397 = vmatpush2.msra.mxu0 0.0
    %1398 = vmatprep.mubr.f32.mxu0 0.0
    %1399 = vmatmul.mubr.f32.gmra.mxu0 %v1332
    %v1400 = vpop.f32.mrf.mxu0
    %v1401 = vadd.f32 0.0, %v1400
    %v1402 = vpop.f32.mrf.mxu0
    %1403 = vdwg.mxu0
    %v1404 = vrcp.pop %v1250
    %v1405 = vmul.f32 %v1325, %v1404
    %v1406 = vrcp.pop %v1251
    %v1407 = vmul.f32 %v1401, %v1406
    %1408 = vrot.lane.b32.xlu0 %v360, 104
    %v1409 = vpop.permute.xlu0 %1408
    %1410 = vrot.lane.b32.xlu0 %v360, 72
    %v1411 = vpop.permute.xlu0 %1410
    %v1412 = vsel %vm371, %v1409, 0
    %v1414 = vsel %vm371, %v1411, 0
    %1416 = vmatprep.subr.mxu0 0.0
    %1417 = vmatpush1.xpose.msra.mxu0 0.0
    %1418 = vmatprep.subr.mxu0 0.0
    %1419 = vmatpush1.xpose.msra.mxu0 0.0
    %1420 = vmatprep.subr.mxu0 0.0
    %1421 = vmatpush1.xpose.msra.mxu0 0.0
    %1422 = vmatprep.subr.mxu0 0.0
    %1423 = vmatpush1.xpose.msra.mxu0 0.0
    %1424 = vmatprep.subr.mxu0 0.0
    %1425 = vmatpush1.xpose.msra.mxu0 0.0
    %1426 = vmatprep.subr.mxu0 0.0
    %1427 = vmatpush1.xpose.msra.mxu0 0.0
    %1428 = vmatprep.subr.mxu0 0.0
    %1429 = vmatpush1.xpose.msra.mxu0 0.0
    %1430 = vmatprep.subr.mxu0 0.0
    %1431 = vmatpush1.xpose.msra.mxu0 0.0
    %1432 = vmatprep.subr.mxu0 0.0
    %1433 = vmatpush1.xpose.msra.mxu0 0.0
    %1434 = vmatprep.subr.mxu0 0.0
    %1435 = vmatpush1.xpose.msra.mxu0 0.0
    %1436 = vmatprep.subr.mxu0 0.0
    %1437 = vmatpush1.xpose.msra.mxu0 0.0
    %1438 = vmatprep.subr.mxu0 0.0
    %1439 = vmatpush1.xpose.msra.mxu0 0.0
    %1440 = vmatprep.subr.mxu0 0.0
    %1441 = vmatpush1.xpose.msra.mxu0 0.0
    %1442 = vmatprep.subr.mxu0 0.0
    %1443 = vmatpush1.xpose.msra.mxu0 0.0
    %1444 = vmatprep.subr.mxu0 0.0
    %1445 = vmatpush1.xpose.msra.mxu0 0.0
    %1446 = vmatprep.subr.mxu0 0.0
    %1447 = vmatpush1.xpose.msra.mxu0 %v1414
    %1448 = vmatprep.subr.mxu0 0.0
    %1449 = vmatpush2.xpose.msra.mxu0 0.0
    %1450 = vmatprep.subr.mxu0 0.0
    %1451 = vmatpush2.xpose.msra.mxu0 0.0
    %1452 = vmatprep.subr.mxu0 0.0
    %1453 = vmatpush2.xpose.msra.mxu0 0.0
    %1454 = vmatprep.subr.mxu0 0.0
    %1455 = vmatpush2.xpose.msra.mxu0 0.0
    %1456 = vmatprep.subr.mxu0 0.0
    %1457 = vmatpush2.xpose.msra.mxu0 0.0
    %1458 = vmatprep.subr.mxu0 0.0
    %1459 = vmatpush2.xpose.msra.mxu0 0.0
    %1460 = vmatprep.subr.mxu0 0.0
    %1461 = vmatpush2.xpose.msra.mxu0 0.0
    %1462 = vmatprep.subr.mxu0 0.0
    %1463 = vmatpush2.xpose.msra.mxu0 0.0
    %1464 = vmatprep.subr.mxu0 0.0
    %1465 = vmatpush2.xpose.msra.mxu0 0.0
    %1466 = vmatprep.subr.mxu0 0.0
    %1467 = vmatpush2.xpose.msra.mxu0 0.0
    %1468 = vmatprep.subr.mxu0 0.0
    %1469 = vmatpush2.xpose.msra.mxu0 0.0
    %1470 = vmatprep.subr.mxu0 0.0
    %1471 = vmatpush2.xpose.msra.mxu0 0.0
    %1472 = vmatprep.subr.mxu0 0.0
    %1473 = vmatpush2.xpose.msra.mxu0 0.0
    %1474 = vmatprep.subr.mxu0 0.0
    %1475 = vmatpush2.xpose.msra.mxu0 0.0
    %1476 = vmatprep.subr.mxu0 0.0
    %1477 = vmatpush2.xpose.msra.mxu0 0.0
    %1478 = vmatprep.subr.mxu0 0.0
    %1479 = vmatpush2.xpose.msra.mxu0 0.0
    %1480 = vmatprep.mubr.f32.mxu0 0.0
    %1481 = vmatmul.mubr.f32.gmra.mxu0 %v1412
    %v1482 = vpop.f32.mrf.mxu0
    %v1483 = vadd.f32 0.0, %v1482
    %v1484 = vpop.f32.mrf.mxu0
    %1485 = vdwg.mxu0
    %1486 = vrot.lane.b32.xlu0 %v365, 104
    %v1487 = vpop.permute.xlu0 %1486
    %1488 = vrot.lane.b32.xlu0 %v365, 72
    %v1489 = vpop.permute.xlu0 %1488
    %v1490 = vsel %vm371, %v1487, 0
    %v1492 = vsel %vm371, %v1489, 0
    %1494 = vmatprep.subr.mxu0 0.0
    %1495 = vmatpush1.xpose.msra.mxu0 0.0
    %1496 = vmatprep.subr.mxu0 0.0
    %1497 = vmatpush1.xpose.msra.mxu0 0.0
    %1498 = vmatprep.subr.mxu0 0.0
    %1499 = vmatpush1.xpose.msra.mxu0 0.0
    %1500 = vmatprep.subr.mxu0 0.0
    %1501 = vmatpush1.xpose.msra.mxu0 0.0
    %1502 = vmatprep.subr.mxu0 0.0
    %1503 = vmatpush1.xpose.msra.mxu0 0.0
    %1504 = vmatprep.subr.mxu0 0.0
    %1505 = vmatpush1.xpose.msra.mxu0 0.0
    %1506 = vmatprep.subr.mxu0 0.0
    %1507 = vmatpush1.xpose.msra.mxu0 0.0
    %1508 = vmatprep.subr.mxu0 0.0
    %1509 = vmatpush1.xpose.msra.mxu0 0.0
    %1510 = vmatprep.subr.mxu0 0.0
    %1511 = vmatpush1.xpose.msra.mxu0 0.0
    %1512 = vmatprep.subr.mxu0 0.0
    %1513 = vmatpush1.xpose.msra.mxu0 0.0
    %1514 = vmatprep.subr.mxu0 0.0
    %1515 = vmatpush1.xpose.msra.mxu0 0.0
    %1516 = vmatprep.subr.mxu0 0.0
    %1517 = vmatpush1.xpose.msra.mxu0 0.0
    %1518 = vmatprep.subr.mxu0 0.0
    %1519 = vmatpush1.xpose.msra.mxu0 0.0
    %1520 = vmatprep.subr.mxu0 0.0
    %1521 = vmatpush1.xpose.msra.mxu0 0.0
    %1522 = vmatprep.subr.mxu0 0.0
    %1523 = vmatpush1.xpose.msra.mxu0 0.0
    %1524 = vmatprep.subr.mxu0 0.0
    %1525 = vmatpush1.xpose.msra.mxu0 %v1492
    %1526 = vmatprep.subr.mxu0 0.0
    %1527 = vmatpush2.xpose.msra.mxu0 0.0
    %1528 = vmatprep.subr.mxu0 0.0
    %1529 = vmatpush2.xpose.msra.mxu0 0.0
    %1530 = vmatprep.subr.mxu0 0.0
    %1531 = vmatpush2.xpose.msra.mxu0 0.0
    %1532 = vmatprep.subr.mxu0 0.0
    %1533 = vmatpush2.xpose.msra.mxu0 0.0
    %1534 = vmatprep.subr.mxu0 0.0
    %1535 = vmatpush2.xpose.msra.mxu0 0.0
    %1536 = vmatprep.subr.mxu0 0.0
    %1537 = vmatpush2.xpose.msra.mxu0 0.0
    %1538 = vmatprep.subr.mxu0 0.0
    %1539 = vmatpush2.xpose.msra.mxu0 0.0
    %1540 = vmatprep.subr.mxu0 0.0
    %1541 = vmatpush2.xpose.msra.mxu0 0.0
    %1542 = vmatprep.subr.mxu0 0.0
    %1543 = vmatpush2.xpose.msra.mxu0 0.0
    %1544 = vmatprep.subr.mxu0 0.0
    %1545 = vmatpush2.xpose.msra.mxu0 0.0
    %1546 = vmatprep.subr.mxu0 0.0
    %1547 = vmatpush2.xpose.msra.mxu0 0.0
    %1548 = vmatprep.subr.mxu0 0.0
    %1549 = vmatpush2.xpose.msra.mxu0 0.0
    %1550 = vmatprep.subr.mxu0 0.0
    %1551 = vmatpush2.xpose.msra.mxu0 0.0
    %1552 = vmatprep.subr.mxu0 0.0
    %1553 = vmatpush2.xpose.msra.mxu0 0.0
    %1554 = vmatprep.subr.mxu0 0.0
    %1555 = vmatpush2.xpose.msra.mxu0 0.0
    %1556 = vmatprep.subr.mxu0 0.0
    %1557 = vmatpush2.xpose.msra.mxu0 0.0
    %1558 = vmatprep.mubr.f32.mxu0 0.0
    %1559 = vmatmul.mubr.f32.gmra.mxu0 %v1490
    %v1560 = vpop.f32.mrf.mxu0
    %v1561 = vadd.f32 0.0, %v1560
    %v1562 = vpop.f32.mrf.mxu0
    %1563 = vdwg.mxu0
    %v1564 = vmul.f32 %v1483, 0.35355338
    %v1565 = vmul.f32 %v1561, 0.35355338
    %v1566 = vsel %vm527, %v1564, -1e+30
    %v1567 = vsel %vm527, %v1565, -1e+30
    %v1568 = vsel %vm371, %v1566, -inf
    %1569 = vmax.xlane.f32.xlu0 %v1568
    %v1570 = vpop.xlane.xlu0 %1569
    %v1571 = vsel %vm371, %v1567, -inf
    %1572 = vmax.xlane.f32.xlu0 %v1571
    %v1573 = vpop.xlane.xlu0 %1572
    %v1574 = vmax.f32 %v1570, 0.0
    %v1575 = vmax.f32 %v1573, 0.0
    %v1576 = vsub.f32 %v1566, %v1574
    %v1577 = vsub.f32 %v1567, %v1575
    %v1578 = vmul.f32 %v1576, 1.442695
    %v1579 = vpow.pop %v1578
    %v1580 = vmul.f32 %v1577, 1.442695
    %v1581 = vpow.pop %v1580
    %v1582 = vsel %vm371, %v1579, 0.0
    %1583 = vadd.xlane.f32.xlu0 %v1582
    %v1584 = vpop.xlane.xlu0 %1583
    %v1585 = vsel %vm371, %v1581, 0.0
    %1586 = vadd.xlane.f32.xlu0 %v1585
    %v1587 = vpop.xlane.xlu0 %1586
    %v1588 = vsub.f32 0.0, %v1574
    %v1589 = vsub.f32 0.0, %v1575
    %v1590 = vmul.f32 %v1588, 1.442695
    %v1591 = vpow.pop %v1590
    %v1592 = vmul.f32 %v1589, 1.442695
    %v1593 = vpow.pop %v1592
    %v1594 = vmul.f32 %v1591, 8.0
    %v1595 = vmul.f32 %v1593, 8.0
    %v1596 = vadd.f32 %v1584, %v1594
    %v1597 = vadd.f32 %v1587, %v1595
    %1598 = vrot.lane.b32.xlu0 %v360, 40
    %v1599 = vpop.permute.xlu0 %1598
    %v1602 = vsel %vm371, %v1579, 0
    %1604 = vmatprep.subr.mxu0 0.0
    %1605 = vmatpush1.msra.mxu0 0.0
    %1606 = vmatprep.subr.mxu0 0.0
    %1607 = vmatpush1.msra.mxu0 0.0
    %1608 = vmatprep.subr.mxu0 0.0
    %1609 = vmatpush1.msra.mxu0 0.0
    %1610 = vmatprep.subr.mxu0 0.0
    %1611 = vmatpush1.msra.mxu0 0.0
    %1612 = vmatprep.subr.mxu0 0.0
    %1613 = vmatpush1.msra.mxu0 0.0
    %1614 = vmatprep.subr.mxu0 0.0
    %1615 = vmatpush1.msra.mxu0 0.0
    %1616 = vmatprep.subr.mxu0 0.0
    %1617 = vmatpush1.msra.mxu0 0.0
    %1618 = vmatprep.subr.mxu0 0.0
    %1619 = vmatpush1.msra.mxu0 0.0
    %1620 = vmatprep.subr.mxu0 0.0
    %1621 = vmatpush1.msra.mxu0 0.0
    %1622 = vmatprep.subr.mxu0 0.0
    %1623 = vmatpush1.msra.mxu0 0.0
    %1624 = vmatprep.subr.mxu0 0.0
    %1625 = vmatpush1.msra.mxu0 0.0
    %1626 = vmatprep.subr.mxu0 0.0
    %1627 = vmatpush1.msra.mxu0 0.0
    %1628 = vmatprep.subr.mxu0 0.0
    %1629 = vmatpush1.msra.mxu0 0.0
    %1630 = vmatprep.subr.mxu0 0.0
    %1631 = vmatpush1.msra.mxu0 0.0
    %1632 = vmatprep.subr.mxu0 0.0
    %1633 = vmatpush1.msra.mxu0 0.0
    %1634 = vmatprep.subr.mxu0 0.0
    %1635 = vmatpush1.msra.mxu0 %v1599
    %1636 = vmatprep.subr.mxu0 0.0
    %1637 = vmatpush2.msra.mxu0 0.0
    %1638 = vmatprep.subr.mxu0 0.0
    %1639 = vmatpush2.msra.mxu0 0.0
    %1640 = vmatprep.subr.mxu0 0.0
    %1641 = vmatpush2.msra.mxu0 0.0
    %1642 = vmatprep.subr.mxu0 0.0
    %1643 = vmatpush2.msra.mxu0 0.0
    %1644 = vmatprep.subr.mxu0 0.0
    %1645 = vmatpush2.msra.mxu0 0.0
    %1646 = vmatprep.subr.mxu0 0.0
    %1647 = vmatpush2.msra.mxu0 0.0
    %1648 = vmatprep.subr.mxu0 0.0
    %1649 = vmatpush2.msra.mxu0 0.0
    %1650 = vmatprep.subr.mxu0 0.0
    %1651 = vmatpush2.msra.mxu0 0.0
    %1652 = vmatprep.subr.mxu0 0.0
    %1653 = vmatpush2.msra.mxu0 0.0
    %1654 = vmatprep.subr.mxu0 0.0
    %1655 = vmatpush2.msra.mxu0 0.0
    %1656 = vmatprep.subr.mxu0 0.0
    %1657 = vmatpush2.msra.mxu0 0.0
    %1658 = vmatprep.subr.mxu0 0.0
    %1659 = vmatpush2.msra.mxu0 0.0
    %1660 = vmatprep.subr.mxu0 0.0
    %1661 = vmatpush2.msra.mxu0 0.0
    %1662 = vmatprep.subr.mxu0 0.0
    %1663 = vmatpush2.msra.mxu0 0.0
    %1664 = vmatprep.subr.mxu0 0.0
    %1665 = vmatpush2.msra.mxu0 0.0
    %1666 = vmatprep.subr.mxu0 0.0
    %1667 = vmatpush2.msra.mxu0 0.0
    %1668 = vmatprep.mubr.f32.mxu0 0.0
    %1669 = vmatmul.mubr.f32.gmra.mxu0 %v1602
    %v1670 = vpop.f32.mrf.mxu0
    %v1671 = vadd.f32 0.0, %v1670
    %v1672 = vpop.f32.mrf.mxu0
    %1673 = vdwg.mxu0
    %1674 = vrot.lane.b32.xlu0 %v365, 40
    %v1675 = vpop.permute.xlu0 %1674
    %v1678 = vsel %vm371, %v1581, 0
    %1680 = vmatprep.subr.mxu0 0.0
    %1681 = vmatpush1.msra.mxu0 0.0
    %1682 = vmatprep.subr.mxu0 0.0
    %1683 = vmatpush1.msra.mxu0 0.0
    %1684 = vmatprep.subr.mxu0 0.0
    %1685 = vmatpush1.msra.mxu0 0.0
    %1686 = vmatprep.subr.mxu0 0.0
    %1687 = vmatpush1.msra.mxu0 0.0
    %1688 = vmatprep.subr.mxu0 0.0
    %1689 = vmatpush1.msra.mxu0 0.0
    %1690 = vmatprep.subr.mxu0 0.0
    %1691 = vmatpush1.msra.mxu0 0.0
    %1692 = vmatprep.subr.mxu0 0.0
    %1693 = vmatpush1.msra.mxu0 0.0
    %1694 = vmatprep.subr.mxu0 0.0
    %1695 = vmatpush1.msra.mxu0 0.0
    %1696 = vmatprep.subr.mxu0 0.0
    %1697 = vmatpush1.msra.mxu0 0.0
    %1698 = vmatprep.subr.mxu0 0.0
    %1699 = vmatpush1.msra.mxu0 0.0
    %1700 = vmatprep.subr.mxu0 0.0
    %1701 = vmatpush1.msra.mxu0 0.0
    %1702 = vmatprep.subr.mxu0 0.0
    %1703 = vmatpush1.msra.mxu0 0.0
    %1704 = vmatprep.subr.mxu0 0.0
    %1705 = vmatpush1.msra.mxu0 0.0
    %1706 = vmatprep.subr.mxu0 0.0
    %1707 = vmatpush1.msra.mxu0 0.0
    %1708 = vmatprep.subr.mxu0 0.0
    %1709 = vmatpush1.msra.mxu0 0.0
    %1710 = vmatprep.subr.mxu0 0.0
    %1711 = vmatpush1.msra.mxu0 %v1675
    %1712 = vmatprep.subr.mxu0 0.0
    %1713 = vmatpush2.msra.mxu0 0.0
    %1714 = vmatprep.subr.mxu0 0.0
    %1715 = vmatpush2.msra.mxu0 0.0
    %1716 = vmatprep.subr.mxu0 0.0
    %1717 = vmatpush2.msra.mxu0 0.0
    %1718 = vmatprep.subr.mxu0 0.0
    %1719 = vmatpush2.msra.mxu0 0.0
    %1720 = vmatprep.subr.mxu0 0.0
    %1721 = vmatpush2.msra.mxu0 0.0
    %1722 = vmatprep.subr.mxu0 0.0
    %1723 = vmatpush2.msra.mxu0 0.0
    %1724 = vmatprep.subr.mxu0 0.0
    %1725 = vmatpush2.msra.mxu0 0.0
    %1726 = vmatprep.subr.mxu0 0.0
    %1727 = vmatpush2.msra.mxu0 0.0
    %1728 = vmatprep.subr.mxu0 0.0
    %1729 = vmatpush2.msra.mxu0 0.0
    %1730 = vmatprep.subr.mxu0 0.0
    %1731 = vmatpush2.msra.mxu0 0.0
    %1732 = vmatprep.subr.mxu0 0.0
    %1733 = vmatpush2.msra.mxu0 0.0
    %1734 = vmatprep.subr.mxu0 0.0
    %1735 = vmatpush2.msra.mxu0 0.0
    %1736 = vmatprep.subr.mxu0 0.0
    %1737 = vmatpush2.msra.mxu0 0.0
    %1738 = vmatprep.subr.mxu0 0.0
    %1739 = vmatpush2.msra.mxu0 0.0
    %1740 = vmatprep.subr.mxu0 0.0
    %1741 = vmatpush2.msra.mxu0 0.0
    %1742 = vmatprep.subr.mxu0 0.0
    %1743 = vmatpush2.msra.mxu0 0.0
    %1744 = vmatprep.mubr.f32.mxu0 0.0
    %1745 = vmatmul.mubr.f32.gmra.mxu0 %v1678
    %v1746 = vpop.f32.mrf.mxu0
    %v1747 = vadd.f32 0.0, %v1746
    %v1748 = vpop.f32.mrf.mxu0
    %1749 = vdwg.mxu0
    %v1750 = vrcp.pop %v1596
    %v1751 = vmul.f32 %v1671, %v1750
    %v1752 = vrcp.pop %v1597
    %v1753 = vmul.f32 %v1747, %v1752
    %1756 = vrot.lane.b32.xlu0 %v1059, 8
    %v1757 = vpop.permute.xlu0 %1756
    %1758 = vrot.lane.b32.xlu0 %v1061, 8
    %v1759 = vpop.permute.xlu0 %1758
    %1764 = vrot.lane.b32.xlu0 %v1405, 16
    %v1765 = vpop.permute.xlu0 %1764
    %1766 = vrot.lane.b32.xlu0 %v1407, 16
    %v1767 = vpop.permute.xlu0 %1766
    %1772 = vrot.lane.b32.xlu0 %v1751, 24
    %v1773 = vpop.permute.xlu0 %1772
    %1774 = vrot.lane.b32.xlu0 %v1753, 24
    %v1775 = vpop.permute.xlu0 %1774
    %v1778 = vsel %vm371, %v713, %v1757
    %v1779 = vsel %vm371, %v715, %v1759
    %vm1780 = vcmask 130048
    %v1781 = vsel %vm1780, %v1778, %v1765
    %v1782 = vsel %vm1780, %v1779, %v1767
    %vm1783 = vcmask 195584
    %v1784 = vsel %vm1783, %v1781, %v1773
    %v1785 = vsel %vm1783, %v1782, %v1775
    %v1786 = vld [vmem:[%s15] sm:$0xff]
    %v1787 = vld [vmem:[%s15 + $0x8] sm:$0xff]
    %v1788 = vld [vmem:[%s15 + $0x10] sm:$0xff]
    %v1789 = vld [vmem:[%s15 + $0x18] sm:$0xff]
    %v1790 = vld [vmem:[%s17] sm:$0x1]
    %v1792 = vlaneseq
    %v1793 = vshrl.u32 %v1792, 7
    %v1794 = vsub.s32 0, %v1793
    %v1795 = vrot.slane %v1790, %v1794
    %v1798 = vsel %vm230, %v1784, 0
    %v1801 = vsel %vm230, %v1785, 0
    %1803 = vmatprep.subr.mxu0 0.0
    %1804 = vmatpush1.msra.mxu0 0.0
    %1805 = vmatprep.subr.mxu0 0.0
    %1806 = vmatpush1.msra.mxu0 0.0
    %1807 = vmatprep.subr.mxu0 0.0
    %1808 = vmatpush1.msra.mxu0 0.0
    %1809 = vmatprep.subr.mxu0 0.0
    %1810 = vmatpush1.msra.mxu0 0.0
    %1811 = vmatprep.subr.mxu0 0.0
    %1812 = vmatpush1.msra.mxu0 0.0
    %1813 = vmatprep.subr.mxu0 0.0
    %1814 = vmatpush1.msra.mxu0 0.0
    %1815 = vmatprep.subr.mxu0 0.0
    %1816 = vmatpush1.msra.mxu0 0.0
    %1817 = vmatprep.subr.mxu0 0.0
    %1818 = vmatpush1.msra.mxu0 0.0
    %1819 = vmatprep.subr.mxu0 0.0
    %1820 = vmatpush1.msra.mxu0 0.0
    %1821 = vmatprep.subr.mxu0 0.0
    %1822 = vmatpush1.msra.mxu0 0.0
    %1823 = vmatprep.subr.mxu0 0.0
    %1824 = vmatpush1.msra.mxu0 0.0
    %1825 = vmatprep.subr.mxu0 0.0
    %1826 = vmatpush1.msra.mxu0 0.0
    %1827 = vmatprep.subr.mxu0 0.0
    %1828 = vmatpush1.msra.mxu0 %v1789
    %1829 = vmatprep.subr.mxu0 0.0
    %1830 = vmatpush1.msra.mxu0 %v1788
    %1831 = vmatprep.subr.mxu0 0.0
    %1832 = vmatpush1.msra.mxu0 %v1787
    %1833 = vmatprep.subr.mxu0 0.0
    %1834 = vmatpush1.msra.mxu0 %v1786
    %1835 = vmatprep.subr.mxu0 0.0
    %1836 = vmatpush2.msra.mxu0 0.0
    %1837 = vmatprep.subr.mxu0 0.0
    %1838 = vmatpush2.msra.mxu0 0.0
    %1839 = vmatprep.subr.mxu0 0.0
    %1840 = vmatpush2.msra.mxu0 0.0
    %1841 = vmatprep.subr.mxu0 0.0
    %1842 = vmatpush2.msra.mxu0 0.0
    %1843 = vmatprep.subr.mxu0 0.0
    %1844 = vmatpush2.msra.mxu0 0.0
    %1845 = vmatprep.subr.mxu0 0.0
    %1846 = vmatpush2.msra.mxu0 0.0
    %1847 = vmatprep.subr.mxu0 0.0
    %1848 = vmatpush2.msra.mxu0 0.0
    %1849 = vmatprep.subr.mxu0 0.0
    %1850 = vmatpush2.msra.mxu0 0.0
    %1851 = vmatprep.subr.mxu0 0.0
    %1852 = vmatpush2.msra.mxu0 0.0
    %1853 = vmatprep.subr.mxu0 0.0
    %1854 = vmatpush2.msra.mxu0 0.0
    %1855 = vmatprep.subr.mxu0 0.0
    %1856 = vmatpush2.msra.mxu0 0.0
    %1857 = vmatprep.subr.mxu0 0.0
    %1858 = vmatpush2.msra.mxu0 0.0
    %1859 = vmatprep.subr.mxu0 0.0
    %1860 = vmatpush2.msra.mxu0 0.0
    %1861 = vmatprep.subr.mxu0 0.0
    %1862 = vmatpush2.msra.mxu0 0.0
    %1863 = vmatprep.subr.mxu0 0.0
    %1864 = vmatpush2.msra.mxu0 0.0
    %1865 = vmatprep.subr.mxu0 0.0
    %1866 = vmatpush2.msra.mxu0 0.0
    %1867 = vmatprep.mubr.f32.mxu0 0.0
    %1868 = vmatmul.mubr.f32.gmra.mxu0 %v1798
    %v1869 = vpop.f32.mrf.mxu0
    %v1870 = vadd.f32 %v1795, %v1869
    %v1871 = vpop.f32.mrf.mxu0
    %1872 = vmatprep.mubr.f32.mxu0 0.0
    %1873 = vmatmul.mubr.f32.gmra.mxu0 %v1801
    %v1874 = vpop.f32.mrf.mxu0
    %v1875 = vadd.f32 %v1795, %v1874
    %v1876 = vpop.f32.mrf.mxu0
    %1877 = vdwg.mxu0
    %v1878 = vadd.f32 %v222, %v1870
    %v1879 = vadd.f32 %v227, %v1875
    %v1880 = vsel %vm230, %v1878, 0.0
    %1881 = vadd.xlane.f32.xlu0 %v1880
    %v1882 = vpop.xlane.xlu0 %1881
    %v1883 = vsel %vm230, %v1879, 0.0
    %1884 = vadd.xlane.f32.xlu0 %v1883
    %v1885 = vpop.xlane.xlu0 %1884
    %v1886 = vmul.f32 %v1882, %v237
    %v1887 = vmul.f32 %v1885, %v237
    %v1888 = vsub.f32 %v1878, %v1886
    %v1889 = vsub.f32 %v1879, %v1887
    %v1890 = vmul.f32 %v1888, %v1888
    %v1891 = vmul.f32 %v1889, %v1889
    %v1892 = vsel %vm230, %v1890, 0.0
    %1893 = vadd.xlane.f32.xlu0 %v1892
    %v1894 = vpop.xlane.xlu0 %1893
    %v1895 = vsel %vm230, %v1891, 0.0
    %1896 = vadd.xlane.f32.xlu0 %v1895
    %v1897 = vpop.xlane.xlu0 %1896
    %v1898 = vmul.f32 %v1894, %v237
    %v1899 = vmul.f32 %v1897, %v237
    %v1900 = vadd.f32 %v1898, 1e-05
    %v1901 = vadd.f32 %v1899, 1e-05
    %v1902 = vrsqrt.pop %v1900
    %v1903 = vrsqrt.pop %v1901
    %v1904 = vmul.f32 %v1888, %v1902
    %v1905 = vmul.f32 %v1889, %v1903
    %v1906 = vld [vmem:[%s19] sm:$0x1]
    %v1908 = vlaneseq
    %v1909 = vshrl.u32 %v1908, 7
    %v1910 = vsub.s32 0, %v1909
    %v1911 = vrot.slane %v1906, %v1910
    %v1913 = vmul.f32 %v1904, %v1911
    %v1914 = vmul.f32 %v1905, %v1911
    %v1915 = vld [vmem:[%s21] sm:$0x1]
    %v1917 = vlaneseq
    %v1918 = vshrl.u32 %v1917, 7
    %v1919 = vsub.s32 0, %v1918
    %v1920 = vrot.slane %v1915, %v1919
    %v1922 = vadd.f32 %v1913, %v1920
    %v1923 = vadd.f32 %v1914, %v1920
    %v1924 = vld [vmem:[%s23] sm:$0xff]
    %v1925 = vld [vmem:[%s23 + $0x8] sm:$0xff]
    %v1926 = vld [vmem:[%s23 + $0x10] sm:$0xff]
    %v1927 = vld [vmem:[%s23 + $0x18] sm:$0xff]
    %v1928 = vld [vmem:[%s25] sm:$0x1]
    %v1930 = vlaneseq
    %v1931 = vshrl.u32 %v1930, 7
    %v1932 = vsub.s32 0, %v1931
    %v1933 = vrot.slane %v1928, %v1932
    %v1936 = vsel %vm230, %v1922, 0
    %v1939 = vsel %vm230, %v1923, 0
    %1941 = vmatprep.subr.mxu0 0.0
    %1942 = vmatpush1.msra.mxu0 0.0
    %1943 = vmatprep.subr.mxu0 0.0
    %1944 = vmatpush1.msra.mxu0 0.0
    %1945 = vmatprep.subr.mxu0 0.0
    %1946 = vmatpush1.msra.mxu0 0.0
    %1947 = vmatprep.subr.mxu0 0.0
    %1948 = vmatpush1.msra.mxu0 0.0
    %1949 = vmatprep.subr.mxu0 0.0
    %1950 = vmatpush1.msra.mxu0 0.0
    %1951 = vmatprep.subr.mxu0 0.0
    %1952 = vmatpush1.msra.mxu0 0.0
    %1953 = vmatprep.subr.mxu0 0.0
    %1954 = vmatpush1.msra.mxu0 0.0
    %1955 = vmatprep.subr.mxu0 0.0
    %1956 = vmatpush1.msra.mxu0 0.0
    %1957 = vmatprep.subr.mxu0 0.0
    %1958 = vmatpush1.msra.mxu0 0.0
    %1959 = vmatprep.subr.mxu0 0.0
    %1960 = vmatpush1.msra.mxu0 0.0
    %1961 = vmatprep.subr.mxu0 0.0
    %1962 = vmatpush1.msra.mxu0 0.0
    %1963 = vmatprep.subr.mxu0 0.0
    %1964 = vmatpush1.msra.mxu0 0.0
    %1965 = vmatprep.subr.mxu0 0.0
    %1966 = vmatpush1.msra.mxu0 %v1927
    %1967 = vmatprep.subr.mxu0 0.0
    %1968 = vmatpush1.msra.mxu0 %v1926
    %1969 = vmatprep.subr.mxu0 0.0
    %1970 = vmatpush1.msra.mxu0 %v1925
    %1971 = vmatprep.subr.mxu0 0.0
    %1972 = vmatpush1.msra.mxu0 %v1924
    %1973 = vmatprep.subr.mxu0 0.0
    %1974 = vmatpush2.msra.mxu0 0.0
    %1975 = vmatprep.subr.mxu0 0.0
    %1976 = vmatpush2.msra.mxu0 0.0
    %1977 = vmatprep.subr.mxu0 0.0
    %1978 = vmatpush2.msra.mxu0 0.0
    %1979 = vmatprep.subr.mxu0 0.0
    %1980 = vmatpush2.msra.mxu0 0.0
    %1981 = vmatprep.subr.mxu0 0.0
    %1982 = vmatpush2.msra.mxu0 0.0
    %1983 = vmatprep.subr.mxu0 0.0
    %1984 = vmatpush2.msra.mxu0 0.0
    %1985 = vmatprep.subr.mxu0 0.0
    %1986 = vmatpush2.msra.mxu0 0.0
    %1987 = vmatprep.subr.mxu0 0.0
    %1988 = vmatpush2.msra.mxu0 0.0
    %1989 = vmatprep.subr.mxu0 0.0
    %1990 = vmatpush2.msra.mxu0 0.0
    %1991 = vmatprep.subr.mxu0 0.0
    %1992 = vmatpush2.msra.mxu0 0.0
    %1993 = vmatprep.subr.mxu0 0.0
    %1994 = vmatpush2.msra.mxu0 0.0
    %1995 = vmatprep.subr.mxu0 0.0
    %1996 = vmatpush2.msra.mxu0 0.0
    %1997 = vmatprep.subr.mxu0 0.0
    %1998 = vmatpush2.msra.mxu0 0.0
    %1999 = vmatprep.subr.mxu0 0.0
    %2000 = vmatpush2.msra.mxu0 0.0
    %2001 = vmatprep.subr.mxu0 0.0
    %2002 = vmatpush2.msra.mxu0 0.0
    %2003 = vmatprep.subr.mxu0 0.0
    %2004 = vmatpush2.msra.mxu0 0.0
    %2005 = vmatprep.mubr.f32.mxu0 0.0
    %2006 = vmatmul.mubr.f32.gmra.mxu0 %v1936
    %v2007 = vpop.f32.mrf.mxu0
    %v2008 = vadd.f32 %v1933, %v2007
    %v2009 = vpop.f32.mrf.mxu0
    %2010 = vmatprep.mubr.f32.mxu0 0.0
    %2011 = vmatmul.mubr.f32.gmra.mxu0 %v1939
    %v2012 = vpop.f32.mrf.mxu0
    %v2013 = vadd.f32 %v1933, %v2012
    %v2014 = vpop.f32.mrf.mxu0
    %2015 = vdwg.mxu0
    %v2016 = vmul.f32 %v2008, 0.5
    %v2017 = vmul.f32 %v2013, 0.5
    %v2018 = vmul.f32 %v2008, 0.044715
    %v2019 = vmul.f32 %v2013, 0.044715
    %v2020 = vmul.f32 %v2018, %v2008
    %v2021 = vmul.f32 %v2019, %v2013
    %v2022 = vmul.f32 %v2020, %v2008
    %v2023 = vmul.f32 %v2021, %v2013
    %v2024 = vadd.f32 %v2008, %v2022
    %v2025 = vadd.f32 %v2013, %v2023
    %v2026 = vmul.f32 %v2024, 0.7978846
    %v2027 = vmul.f32 %v2025, 0.7978846
    %v2028 = vtanh.pop %v2026
    %v2029 = vtanh.pop %v2027
    %v2030 = vadd.f32 %v2028, 1.0
    %v2031 = vadd.f32 %v2029, 1.0
    %v2032 = vmul.f32 %v2016, %v2030
    %v2033 = vmul.f32 %v2017, %v2031
    %v2034 = vld [vmem:[%s27] sm:$0xff]
    %v2035 = vld [vmem:[%s27 + $0x8] sm:$0xff]
    %v2036 = vld [vmem:[%s27 + $0x10] sm:$0xff]
    %v2037 = vld [vmem:[%s27 + $0x18] sm:$0xff]
    %v2038 = vld [vmem:[%s27 + $0x20] sm:$0xff]
    %v2039 = vld [vmem:[%s27 + $0x28] sm:$0xff]
    %v2040 = vld [vmem:[%s27 + $0x30] sm:$0xff]
    %v2041 = vld [vmem:[%s27 + $0x38] sm:$0xff]
    %v2042 = vld [vmem:[%s27 + $0x40] sm:$0xff]
    %v2043 = vld [vmem:[%s27 + $0x48] sm:$0xff]
    %v2044 = vld [vmem:[%s27 + $0x50] sm:$0xff]
    %v2045 = vld [vmem:[%s27 + $0x58] sm:$0xff]
    %v2046 = vld [vmem:[%s27 + $0x60] sm:$0xff]
    %v2047 = vld [vmem:[%s27 + $0x68] sm:$0xff]
    %v2048 = vld [vmem:[%s27 + $0x70] sm:$0xff]
    %v2049 = vld [vmem:[%s27 + $0x78] sm:$0xff]
    %v2050 = vld [vmem:[%s29] sm:$0x1]
    %v2052 = vlaneseq
    %v2053 = vshrl.u32 %v2052, 7
    %v2054 = vsub.s32 0, %v2053
    %v2055 = vrot.slane %v2050, %v2054
    %2057 = vmatprep.subr.mxu0 0.0
    %2058 = vmatpush1.msra.mxu0 %v2049
    %2059 = vmatprep.subr.mxu0 0.0
    %2060 = vmatpush1.msra.mxu0 %v2048
    %2061 = vmatprep.subr.mxu0 0.0
    %2062 = vmatpush1.msra.mxu0 %v2047
    %2063 = vmatprep.subr.mxu0 0.0
    %2064 = vmatpush1.msra.mxu0 %v2046
    %2065 = vmatprep.subr.mxu0 0.0
    %2066 = vmatpush1.msra.mxu0 %v2045
    %2067 = vmatprep.subr.mxu0 0.0
    %2068 = vmatpush1.msra.mxu0 %v2044
    %2069 = vmatprep.subr.mxu0 0.0
    %2070 = vmatpush1.msra.mxu0 %v2043
    %2071 = vmatprep.subr.mxu0 0.0
    %2072 = vmatpush1.msra.mxu0 %v2042
    %2073 = vmatprep.subr.mxu0 0.0
    %2074 = vmatpush1.msra.mxu0 %v2041
    %2075 = vmatprep.subr.mxu0 0.0
    %2076 = vmatpush1.msra.mxu0 %v2040
    %2077 = vmatprep.subr.mxu0 0.0
    %2078 = vmatpush1.msra.mxu0 %v2039
    %2079 = vmatprep.subr.mxu0 0.0
    %2080 = vmatpush1.msra.mxu0 %v2038
    %2081 = vmatprep.subr.mxu0 0.0
    %2082 = vmatpush1.msra.mxu0 %v2037
    %2083 = vmatprep.subr.mxu0 0.0
    %2084 = vmatpush1.msra.mxu0 %v2036
    %2085 = vmatprep.subr.mxu0 0.0
    %2086 = vmatpush1.msra.mxu0 %v2035
    %2087 = vmatprep.subr.mxu0 0.0
    %2088 = vmatpush1.msra.mxu0 %v2034
    %2089 = vmatprep.subr.mxu0 0.0
    %2090 = vmatpush2.msra.mxu0 0.0
    %2091 = vmatprep.subr.mxu0 0.0
    %2092 = vmatpush2.msra.mxu0 0.0
    %2093 = vmatprep.subr.mxu0 0.0
    %2094 = vmatpush2.msra.mxu0 0.0
    %2095 = vmatprep.subr.mxu0 0.0
    %2096 = vmatpush2.msra.mxu0 0.0
    %2097 = vmatprep.subr.mxu0 0.0
    %2098 = vmatpush2.msra.mxu0 0.0
    %2099 = vmatprep.subr.mxu0 0.0
    %2100 = vmatpush2.msra.mxu0 0.0
    %2101 = vmatprep.subr.mxu0 0.0
    %2102 = vmatpush2.msra.mxu0 0.0
    %2103 = vmatprep.subr.mxu0 0.0
    %2104 = vmatpush2.msra.mxu0 0.0
    %2105 = vmatprep.subr.mxu0 0.0
    %2106 = vmatpush2.msra.mxu0 0.0
    %2107 = vmatprep.subr.mxu0 0.0
    %2108 = vmatpush2.msra.mxu0 0.0
    %2109 = vmatprep.subr.mxu0 0.0
    %2110 = vmatpush2.msra.mxu0 0.0
    %2111 = vmatprep.subr.mxu0 0.0
    %2112 = vmatpush2.msra.mxu0 0.0
    %2113 = vmatprep.subr.mxu0 0.0
    %2114 = vmatpush2.msra.mxu0 0.0
    %2115 = vmatprep.subr.mxu0 0.0
    %2116 = vmatpush2.msra.mxu0 0.0
    %2117 = vmatprep.subr.mxu0 0.0
    %2118 = vmatpush2.msra.mxu0 0.0
    %2119 = vmatprep.subr.mxu0 0.0
    %2120 = vmatpush2.msra.mxu0 0.0
    %2121 = vmatprep.mubr.f32.mxu0 0.0
    %2122 = vmatmul.mubr.f32.gmra.mxu0 %v2032
    %v2123 = vpop.f32.mrf.mxu0
    %v2124 = vadd.f32 %v2055, %v2123
    %v2125 = vpop.f32.mrf.mxu0
    %2126 = vmatprep.mubr.f32.mxu0 0.0
    %2127 = vmatmul.mubr.f32.gmra.mxu0 %v2033
    %v2128 = vpop.f32.mrf.mxu0
    %v2129 = vadd.f32 %v2055, %v2128
    %v2130 = vpop.f32.mrf.mxu0
    %2131 = vdwg.mxu0
    %v2132 = vadd.f32 %v1878, %v2124
    %v2133 = vadd.f32 %v1879, %v2129
    %v2134 = vsel %vm230, %v2132, 0.0
    %2135 = vadd.xlane.f32.xlu0 %v2134
    %v2136 = vpop.xlane.xlu0 %2135
    %v2137 = vsel %vm230, %v2133, 0.0
    %2138 = vadd.xlane.f32.xlu0 %v2137
    %v2139 = vpop.xlane.xlu0 %2138
    %v2140 = vmul.f32 %v2136, %v237
    %v2141 = vmul.f32 %v2139, %v237
    %v2142 = vsub.f32 %v2132, %v2140
    %v2143 = vsub.f32 %v2133, %v2141
    %v2144 = vmul.f32 %v2142, %v2142
    %v2145 = vmul.f32 %v2143, %v2143
    %v2146 = vsel %vm230, %v2144, 0.0
    %2147 = vadd.xlane.f32.xlu0 %v2146
    %v2148 = vpop.xlane.xlu0 %2147
    %v2149 = vsel %vm230, %v2145, 0.0
    %2150 = vadd.xlane.f32.xlu0 %v2149
    %v2151 = vpop.xlane.xlu0 %2150
    %v2152 = vmul.f32 %v2148, %v237
    %v2153 = vmul.f32 %v2151, %v237
    %v2154 = vadd.f32 %v2152, 1e-05
    %v2155 = vadd.f32 %v2153, 1e-05
    %v2156 = vrsqrt.pop %v2154
    %v2157 = vrsqrt.pop %v2155
    %v2158 = vmul.f32 %v2142, %v2156
    %v2159 = vmul.f32 %v2143, %v2157
    %v2160 = vld [vmem:[%s31] sm:$0x1]
    %v2162 = vlaneseq
    %v2163 = vshrl.u32 %v2162, 7
    %v2164 = vsub.s32 0, %v2163
    %v2165 = vrot.slane %v2160, %v2164
    %v2167 = vmul.f32 %v2158, %v2165
    %v2168 = vmul.f32 %v2159, %v2165
    %v2169 = vld [vmem:[%s33] sm:$0x1]
    %v2171 = vlaneseq
    %v2172 = vshrl.u32 %v2171, 7
    %v2173 = vsub.s32 0, %v2172
    %v2174 = vrot.slane %v2169, %v2173
    %v2176 = vadd.f32 %v2167, %v2174
    %v2177 = vadd.f32 %v2168, %v2174
    %v2178 = vld [vmem:[%s35] sm:$0xff]
    %v2179 = vld [vmem:[%s35 + $0x8] sm:$0xff]
    %v2180 = vld [vmem:[%s35 + $0x10] sm:$0xff]
    %v2181 = vld [vmem:[%s35 + $0x18] sm:$0xff]
    %v2182 = vld [vmem:[%s37] sm:$0x1]
    %v2184 = vlaneseq
    %v2185 = vshrl.u32 %v2184, 7
    %v2186 = vsub.s32 0, %v2185
    %v2187 = vrot.slane %v2182, %v2186
    %v2190 = vsel %vm230, %v2176, 0
    %v2193 = vsel %vm230, %v2177, 0
    %2195 = vmatprep.subr.mxu0 0.0
    %2196 = vmatpush1.msra.mxu0 0.0
    %2197 = vmatprep.subr.mxu0 0.0
    %2198 = vmatpush1.msra.mxu0 0.0
    %2199 = vmatprep.subr.mxu0 0.0
    %2200 = vmatpush1.msra.mxu0 0.0
    %2201 = vmatprep.subr.mxu0 0.0
    %2202 = vmatpush1.msra.mxu0 0.0
    %2203 = vmatprep.subr.mxu0 0.0
    %2204 = vmatpush1.msra.mxu0 0.0
    %2205 = vmatprep.subr.mxu0 0.0
    %2206 = vmatpush1.msra.mxu0 0.0
    %2207 = vmatprep.subr.mxu0 0.0
    %2208 = vmatpush1.msra.mxu0 0.0
    %2209 = vmatprep.subr.mxu0 0.0
    %2210 = vmatpush1.msra.mxu0 0.0
    %2211 = vmatprep.subr.mxu0 0.0
    %2212 = vmatpush1.msra.mxu0 0.0
    %2213 = vmatprep.subr.mxu0 0.0
    %2214 = vmatpush1.msra.mxu0 0.0
    %2215 = vmatprep.subr.mxu0 0.0
    %2216 = vmatpush1.msra.mxu0 0.0
    %2217 = vmatprep.subr.mxu0 0.0
    %2218 = vmatpush1.msra.mxu0 0.0
    %2219 = vmatprep.subr.mxu0 0.0
    %2220 = vmatpush1.msra.mxu0 %v2181
    %2221 = vmatprep.subr.mxu0 0.0
    %2222 = vmatpush1.msra.mxu0 %v2180
    %2223 = vmatprep.subr.mxu0 0.0
    %2224 = vmatpush1.msra.mxu0 %v2179
    %2225 = vmatprep.subr.mxu0 0.0
    %2226 = vmatpush1.msra.mxu0 %v2178
    %2227 = vmatprep.subr.mxu0 0.0
    %2228 = vmatpush2.msra.mxu0 0.0
    %2229 = vmatprep.subr.mxu0 0.0
    %2230 = vmatpush2.msra.mxu0 0.0
    %2231 = vmatprep.subr.mxu0 0.0
    %2232 = vmatpush2.msra.mxu0 0.0
    %2233 = vmatprep.subr.mxu0 0.0
    %2234 = vmatpush2.msra.mxu0 0.0
    %2235 = vmatprep.subr.mxu0 0.0
    %2236 = vmatpush2.msra.mxu0 0.0
    %2237 = vmatprep.subr.mxu0 0.0
    %2238 = vmatpush2.msra.mxu0 0.0
    %2239 = vmatprep.subr.mxu0 0.0
    %2240 = vmatpush2.msra.mxu0 0.0
    %2241 = vmatprep.subr.mxu0 0.0
    %2242 = vmatpush2.msra.mxu0 0.0
    %2243 = vmatprep.subr.mxu0 0.0
    %2244 = vmatpush2.msra.mxu0 0.0
    %2245 = vmatprep.subr.mxu0 0.0
    %2246 = vmatpush2.msra.mxu0 0.0
    %2247 = vmatprep.subr.mxu0 0.0
    %2248 = vmatpush2.msra.mxu0 0.0
    %2249 = vmatprep.subr.mxu0 0.0
    %2250 = vmatpush2.msra.mxu0 0.0
    %2251 = vmatprep.subr.mxu0 0.0
    %2252 = vmatpush2.msra.mxu0 0.0
    %2253 = vmatprep.subr.mxu0 0.0
    %2254 = vmatpush2.msra.mxu0 0.0
    %2255 = vmatprep.subr.mxu0 0.0
    %2256 = vmatpush2.msra.mxu0 0.0
    %2257 = vmatprep.subr.mxu0 0.0
    %2258 = vmatpush2.msra.mxu0 0.0
    %2259 = vmatprep.mubr.f32.mxu0 0.0
    %2260 = vmatmul.mubr.f32.gmra.mxu0 %v2190
    %v2261 = vpop.f32.mrf.mxu0
    %v2262 = vadd.f32 %v2187, %v2261
    %v2263 = vpop.f32.mrf.mxu0
    %2264 = vmatprep.mubr.f32.mxu0 0.0
    %2265 = vmatmul.mubr.f32.gmra.mxu0 %v2193
    %v2266 = vpop.f32.mrf.mxu0
    %v2267 = vadd.f32 %v2187, %v2266
    %v2268 = vpop.f32.mrf.mxu0
    %2269 = vdwg.mxu0
    %2271 = vrot.lane.b32.xlu0 %v2262, 96
    %v2272 = vpop.permute.xlu0 %2271
    %v2273 = vsel %vm371, %v2262, 0
    %v2275 = vsel %vm371, %v2272, 0
    %2277 = vmatprep.subr.mxu0 0.0
    %2278 = vmatpush1.xpose.msra.mxu0 0.0
    %2279 = vmatprep.subr.mxu0 0.0
    %2280 = vmatpush1.xpose.msra.mxu0 0.0
    %2281 = vmatprep.subr.mxu0 0.0
    %2282 = vmatpush1.xpose.msra.mxu0 0.0
    %2283 = vmatprep.subr.mxu0 0.0
    %2284 = vmatpush1.xpose.msra.mxu0 0.0
    %2285 = vmatprep.subr.mxu0 0.0
    %2286 = vmatpush1.xpose.msra.mxu0 0.0
    %2287 = vmatprep.subr.mxu0 0.0
    %2288 = vmatpush1.xpose.msra.mxu0 0.0
    %2289 = vmatprep.subr.mxu0 0.0
    %2290 = vmatpush1.xpose.msra.mxu0 0.0
    %2291 = vmatprep.subr.mxu0 0.0
    %2292 = vmatpush1.xpose.msra.mxu0 0.0
    %2293 = vmatprep.subr.mxu0 0.0
    %2294 = vmatpush1.xpose.msra.mxu0 0.0
    %2295 = vmatprep.subr.mxu0 0.0
    %2296 = vmatpush1.xpose.msra.mxu0 0.0
    %2297 = vmatprep.subr.mxu0 0.0
    %2298 = vmatpush1.xpose.msra.mxu0 0.0
    %2299 = vmatprep.subr.mxu0 0.0
    %2300 = vmatpush1.xpose.msra.mxu0 0.0
    %2301 = vmatprep.subr.mxu0 0.0
    %2302 = vmatpush1.xpose.msra.mxu0 0.0
    %2303 = vmatprep.subr.mxu0 0.0
    %2304 = vmatpush1.xpose.msra.mxu0 0.0
    %2305 = vmatprep.subr.mxu0 0.0
    %2306 = vmatpush1.xpose.msra.mxu0 0.0
    %2307 = vmatprep.subr.mxu0 0.0
    %2308 = vmatpush1.xpose.msra.mxu0 %v2275
    %2309 = vmatprep.subr.mxu0 0.0
    %2310 = vmatpush2.xpose.msra.mxu0 0.0
    %2311 = vmatprep.subr.mxu0 0.0
    %2312 = vmatpush2.xpose.msra.mxu0 0.0
    %2313 = vmatprep.subr.mxu0 0.0
    %2314 = vmatpush2.xpose.msra.mxu0 0.0
    %2315 = vmatprep.subr.mxu0 0.0
    %2316 = vmatpush2.xpose.msra.mxu0 0.0
    %2317 = vmatprep.subr.mxu0 0.0
    %2318 = vmatpush2.xpose.msra.mxu0 0.0
    %2319 = vmatprep.subr.mxu0 0.0
    %2320 = vmatpush2.xpose.msra.mxu0 0.0
    %2321 = vmatprep.subr.mxu0 0.0
    %2322 = vmatpush2.xpose.msra.mxu0 0.0
    %2323 = vmatprep.subr.mxu0 0.0
    %2324 = vmatpush2.xpose.msra.mxu0 0.0
    %2325 = vmatprep.subr.mxu0 0.0
    %2326 = vmatpush2.xpose.msra.mxu0 0.0
    %2327 = vmatprep.subr.mxu0 0.0
    %2328 = vmatpush2.xpose.msra.mxu0 0.0
    %2329 = vmatprep.subr.mxu0 0.0
    %2330 = vmatpush2.xpose.msra.mxu0 0.0
    %2331 = vmatprep.subr.mxu0 0.0
    %2332 = vmatpush2.xpose.msra.mxu0 0.0
    %2333 = vmatprep.subr.mxu0 0.0
    %2334 = vmatpush2.xpose.msra.mxu0 0.0
    %2335 = vmatprep.subr.mxu0 0.0
    %2336 = vmatpush2.xpose.msra.mxu0 0.0
    %2337 = vmatprep.subr.mxu0 0.0
    %2338 = vmatpush2.xpose.msra.mxu0 0.0
    %2339 = vmatprep.subr.mxu0 0.0
    %2340 = vmatpush2.xpose.msra.mxu0 0.0
    %2341 = vmatprep.mubr.f32.mxu0 0.0
    %2342 = vmatmul.mubr.f32.gmra.mxu0 %v2273
    %v2343 = vpop.f32.mrf.mxu0
    %v2344 = vadd.f32 0.0, %v2343
    %v2345 = vpop.f32.mrf.mxu0
    %2346 = vdwg.mxu0
    %2348 = vrot.lane.b32.xlu0 %v2267, 96
    %v2349 = vpop.permute.xlu0 %2348
    %v2350 = vsel %vm371, %v2267, 0
    %v2352 = vsel %vm371, %v2349, 0
    %2354 = vmatprep.subr.mxu0 0.0
    %2355 = vmatpush1.xpose.msra.mxu0 0.0
    %2356 = vmatprep.subr.mxu0 0.0
    %2357 = vmatpush1.xpose.msra.mxu0 0.0
    %2358 = vmatprep.subr.mxu0 0.0
    %2359 = vmatpush1.xpose.msra.mxu0 0.0
    %2360 = vmatprep.subr.mxu0 0.0
    %2361 = vmatpush1.xpose.msra.mxu0 0.0
    %2362 = vmatprep.subr.mxu0 0.0
    %2363 = vmatpush1.xpose.msra.mxu0 0.0
    %2364 = vmatprep.subr.mxu0 0.0
    %2365 = vmatpush1.xpose.msra.mxu0 0.0
    %2366 = vmatprep.subr.mxu0 0.0
    %2367 = vmatpush1.xpose.msra.mxu0 0.0
    %2368 = vmatprep.subr.mxu0 0.0
    %2369 = vmatpush1.xpose.msra.mxu0 0.0
    %2370 = vmatprep.subr.mxu0 0.0
    %2371 = vmatpush1.xpose.msra.mxu0 0.0
    %2372 = vmatprep.subr.mxu0 0.0
    %2373 = vmatpush1.xpose.msra.mxu0 0.0
    %2374 = vmatprep.subr.mxu0 0.0
    %2375 = vmatpush1.xpose.msra.mxu0 0.0
    %2376 = vmatprep.subr.mxu0 0.0
    %2377 = vmatpush1.xpose.msra.mxu0 0.0
    %2378 = vmatprep.subr.mxu0 0.0
    %2379 = vmatpush1.xpose.msra.mxu0 0.0
    %2380 = vmatprep.subr.mxu0 0.0
    %2381 = vmatpush1.xpose.msra.mxu0 0.0
    %2382 = vmatprep.subr.mxu0 0.0
    %2383 = vmatpush1.xpose.msra.mxu0 0.0
    %2384 = vmatprep.subr.mxu0 0.0
    %2385 = vmatpush1.xpose.msra.mxu0 %v2352
    %2386 = vmatprep.subr.mxu0 0.0
    %2387 = vmatpush2.xpose.msra.mxu0 0.0
    %2388 = vmatprep.subr.mxu0 0.0
    %2389 = vmatpush2.xpose.msra.mxu0 0.0
    %2390 = vmatprep.subr.mxu0 0.0
    %2391 = vmatpush2.xpose.msra.mxu0 0.0
    %2392 = vmatprep.subr.mxu0 0.0
    %2393 = vmatpush2.xpose.msra.mxu0 0.0
    %2394 = vmatprep.subr.mxu0 0.0
    %2395 = vmatpush2.xpose.msra.mxu0 0.0
    %2396 = vmatprep.subr.mxu0 0.0
    %2397 = vmatpush2.xpose.msra.mxu0 0.0
    %2398 = vmatprep.subr.mxu0 0.0
    %2399 = vmatpush2.xpose.msra.mxu0 0.0
    %2400 = vmatprep.subr.mxu0 0.0
    %2401 = vmatpush2.xpose.msra.mxu0 0.0
    %2402 = vmatprep.subr.mxu0 0.0
    %2403 = vmatpush2.xpose.msra.mxu0 0.0
    %2404 = vmatprep.subr.mxu0 0.0
    %2405 = vmatpush2.xpose.msra.mxu0 0.0
    %2406 = vmatprep.subr.mxu0 0.0
    %2407 = vmatpush2.xpose.msra.mxu0 0.0
    %2408 = vmatprep.subr.mxu0 0.0
    %2409 = vmatpush2.xpose.msra.mxu0 0.0
    %2410 = vmatprep.subr.mxu0 0.0
    %2411 = vmatpush2.xpose.msra.mxu0 0.0
    %2412 = vmatprep.subr.mxu0 0.0
    %2413 = vmatpush2.xpose.msra.mxu0 0.0
    %2414 = vmatprep.subr.mxu0 0.0
    %2415 = vmatpush2.xpose.msra.mxu0 0.0
    %2416 = vmatprep.subr.mxu0 0.0
    %2417 = vmatpush2.xpose.msra.mxu0 0.0
    %2418 = vmatprep.mubr.f32.mxu0 0.0
    %2419 = vmatmul.mubr.f32.gmra.mxu0 %v2350
    %v2420 = vpop.f32.mrf.mxu0
    %v2421 = vadd.f32 0.0, %v2420
    %v2422 = vpop.f32.mrf.mxu0
    %2423 = vdwg.mxu0
    %v2424 = vmul.f32 %v2344, 0.35355338
    %v2425 = vmul.f32 %v2421, 0.35355338
    %v2426 = vsel %vm527, %v2424, -1e+30
    %v2427 = vsel %vm527, %v2425, -1e+30
    %v2428 = vsel %vm371, %v2426, -inf
    %2429 = vmax.xlane.f32.xlu0 %v2428
    %v2430 = vpop.xlane.xlu0 %2429
    %v2431 = vsel %vm371, %v2427, -inf
    %2432 = vmax.xlane.f32.xlu0 %v2431
    %v2433 = vpop.xlane.xlu0 %2432
    %v2434 = vmax.f32 %v2430, 0.0
    %v2435 = vmax.f32 %v2433, 0.0
    %v2436 = vsub.f32 %v2426, %v2434
    %v2437 = vsub.f32 %v2427, %v2435
    %v2438 = vmul.f32 %v2436, 1.442695
    %v2439 = vpow.pop %v2438
    %v2440 = vmul.f32 %v2437, 1.442695
    %v2441 = vpow.pop %v2440
    %v2442 = vsel %vm371, %v2439, 0.0
    %2443 = vadd.xlane.f32.xlu0 %v2442
    %v2444 = vpop.xlane.xlu0 %2443
    %v2445 = vsel %vm371, %v2441, 0.0
    %2446 = vadd.xlane.f32.xlu0 %v2445
    %v2447 = vpop.xlane.xlu0 %2446
    %v2448 = vsub.f32 0.0, %v2434
    %v2449 = vsub.f32 0.0, %v2435
    %v2450 = vmul.f32 %v2448, 1.442695
    %v2451 = vpow.pop %v2450
    %v2452 = vmul.f32 %v2449, 1.442695
    %v2453 = vpow.pop %v2452
    %v2454 = vmul.f32 %v2451, 8.0
    %v2455 = vmul.f32 %v2453, 8.0
    %v2456 = vadd.f32 %v2444, %v2454
    %v2457 = vadd.f32 %v2447, %v2455
    %2458 = vrot.lane.b32.xlu0 %v2262, 64
    %v2459 = vpop.permute.xlu0 %2458
    %v2462 = vsel %vm371, %v2439, 0
    %2464 = vmatprep.subr.mxu0 0.0
    %2465 = vmatpush1.msra.mxu0 0.0
    %2466 = vmatprep.subr.mxu0 0.0
    %2467 = vmatpush1.msra.mxu0 0.0
    %2468 = vmatprep.subr.mxu0 0.0
    %2469 = vmatpush1.msra.mxu0 0.0
    %2470 = vmatprep.subr.mxu0 0.0
    %2471 = vmatpush1.msra.mxu0 0.0
    %2472 = vmatprep.subr.mxu0 0.0
    %2473 = vmatpush1.msra.mxu0 0.0
    %2474 = vmatprep.subr.mxu0 0.0
    %2475 = vmatpush1.msra.mxu0 0.0
    %2476 = vmatprep.subr.mxu0 0.0
    %2477 = vmatpush1.msra.mxu0 0.0
    %2478 = vmatprep.subr.mxu0 0.0
    %2479 = vmatpush1.msra.mxu0 0.0
    %2480 = vmatprep.subr.mxu0 0.0
    %2481 = vmatpush1.msra.mxu0 0.0
    %2482 = vmatprep.subr.mxu0 0.0
    %2483 = vmatpush1.msra.mxu0 0.0
    %2484 = vmatprep.subr.mxu0 0.0
    %2485 = vmatpush1.msra.mxu0 0.0
    %2486 = vmatprep.subr.mxu0 0.0
    %2487 = vmatpush1.msra.mxu0 0.0
    %2488 = vmatprep.subr.mxu0 0.0
    %2489 = vmatpush1.msra.mxu0 0.0
    %2490 = vmatprep.subr.mxu0 0.0
    %2491 = vmatpush1.msra.mxu0 0.0
    %2492 = vmatprep.subr.mxu0 0.0
    %2493 = vmatpush1.msra.mxu0 0.0
    %2494 = vmatprep.subr.mxu0 0.0
    %2495 = vmatpush1.msra.mxu0 %v2459
    %2496 = vmatprep.subr.mxu0 0.0
    %2497 = vmatpush2.msra.mxu0 0.0
    %2498 = vmatprep.subr.mxu0 0.0
    %2499 = vmatpush2.msra.mxu0 0.0
    %2500 = vmatprep.subr.mxu0 0.0
    %2501 = vmatpush2.msra.mxu0 0.0
    %2502 = vmatprep.subr.mxu0 0.0
    %2503 = vmatpush2.msra.mxu0 0.0
    %2504 = vmatprep.subr.mxu0 0.0
    %2505 = vmatpush2.msra.mxu0 0.0
    %2506 = vmatprep.subr.mxu0 0.0
    %2507 = vmatpush2.msra.mxu0 0.0
    %2508 = vmatprep.subr.mxu0 0.0
    %2509 = vmatpush2.msra.mxu0 0.0
    %2510 = vmatprep.subr.mxu0 0.0
    %2511 = vmatpush2.msra.mxu0 0.0
    %2512 = vmatprep.subr.mxu0 0.0
    %2513 = vmatpush2.msra.mxu0 0.0
    %2514 = vmatprep.subr.mxu0 0.0
    %2515 = vmatpush2.msra.mxu0 0.0
    %2516 = vmatprep.subr.mxu0 0.0
    %2517 = vmatpush2.msra.mxu0 0.0
    %2518 = vmatprep.subr.mxu0 0.0
    %2519 = vmatpush2.msra.mxu0 0.0
    %2520 = vmatprep.subr.mxu0 0.0
    %2521 = vmatpush2.msra.mxu0 0.0
    %2522 = vmatprep.subr.mxu0 0.0
    %2523 = vmatpush2.msra.mxu0 0.0
    %2524 = vmatprep.subr.mxu0 0.0
    %2525 = vmatpush2.msra.mxu0 0.0
    %2526 = vmatprep.subr.mxu0 0.0
    %2527 = vmatpush2.msra.mxu0 0.0
    %2528 = vmatprep.mubr.f32.mxu0 0.0
    %2529 = vmatmul.mubr.f32.gmra.mxu0 %v2462
    %v2530 = vpop.f32.mrf.mxu0
    %v2531 = vadd.f32 0.0, %v2530
    %v2532 = vpop.f32.mrf.mxu0
    %2533 = vdwg.mxu0
    %2534 = vrot.lane.b32.xlu0 %v2267, 64
    %v2535 = vpop.permute.xlu0 %2534
    %v2538 = vsel %vm371, %v2441, 0
    %2540 = vmatprep.subr.mxu0 0.0
    %2541 = vmatpush1.msra.mxu0 0.0
    %2542 = vmatprep.subr.mxu0 0.0
    %2543 = vmatpush1.msra.mxu0 0.0
    %2544 = vmatprep.subr.mxu0 0.0
    %2545 = vmatpush1.msra.mxu0 0.0
    %2546 = vmatprep.subr.mxu0 0.0
    %2547 = vmatpush1.msra.mxu0 0.0
    %2548 = vmatprep.subr.mxu0 0.0
    %2549 = vmatpush1.msra.mxu0 0.0
    %2550 = vmatprep.subr.mxu0 0.0
    %2551 = vmatpush1.msra.mxu0 0.0
    %2552 = vmatprep.subr.mxu0 0.0
    %2553 = vmatpush1.msra.mxu0 0.0
    %2554 = vmatprep.subr.mxu0 0.0
    %2555 = vmatpush1.msra.mxu0 0.0
    %2556 = vmatprep.subr.mxu0 0.0
    %2557 = vmatpush1.msra.mxu0 0.0
    %2558 = vmatprep.subr.mxu0 0.0
    %2559 = vmatpush1.msra.mxu0 0.0
    %2560 = vmatprep.subr.mxu0 0.0
    %2561 = vmatpush1.msra.mxu0 0.0
    %2562 = vmatprep.subr.mxu0 0.0
    %2563 = vmatpush1.msra.mxu0 0.0
    %2564 = vmatprep.subr.mxu0 0.0
    %2565 = vmatpush1.msra.mxu0 0.0
    %2566 = vmatprep.subr.mxu0 0.0
    %2567 = vmatpush1.msra.mxu0 0.0
    %2568 = vmatprep.subr.mxu0 0.0
    %2569 = vmatpush1.msra.mxu0 0.0
    %2570 = vmatprep.subr.mxu0 0.0
    %2571 = vmatpush1.msra.mxu0 %v2535
    %2572 = vmatprep.subr.mxu0 0.0
    %2573 = vmatpush2.msra.mxu0 0.0
    %2574 = vmatprep.subr.mxu0 0.0
    %2575 = vmatpush2.msra.mxu0 0.0
    %2576 = vmatprep.subr.mxu0 0.0
    %2577 = vmatpush2.msra.mxu0 0.0
    %2578 = vmatprep.subr.mxu0 0.0
    %2579 = vmatpush2.msra.mxu0 0.0
    %2580 = vmatprep.subr.mxu0 0.0
    %2581 = vmatpush2.msra.mxu0 0.0
    %2582 = vmatprep.subr.mxu0 0.0
    %2583 = vmatpush2.msra.mxu0 0.0
    %2584 = vmatprep.subr.mxu0 0.0
    %2585 = vmatpush2.msra.mxu0 0.0
    %2586 = vmatprep.subr.mxu0 0.0
    %2587 = vmatpush2.msra.mxu0 0.0
    %2588 = vmatprep.subr.mxu0 0.0
    %2589 = vmatpush2.msra.mxu0 0.0
    %2590 = vmatprep.subr.mxu0 0.0
    %2591 = vmatpush2.msra.mxu0 0.0
    %2592 = vmatprep.subr.mxu0 0.0
    %2593 = vmatpush2.msra.mxu0 0.0
    %2594 = vmatprep.subr.mxu0 0.0
    %2595 = vmatpush2.msra.mxu0 0.0
    %2596 = vmatprep.subr.mxu0 0.0
    %2597 = vmatpush2.msra.mxu0 0.0
    %2598 = vmatprep.subr.mxu0 0.0
    %2599 = vmatpush2.msra.mxu0 0.0
    %2600 = vmatprep.subr.mxu0 0.0
    %2601 = vmatpush2.msra.mxu0 0.0
    %2602 = vmatprep.subr.mxu0 0.0
    %2603 = vmatpush2.msra.mxu0 0.0
    %2604 = vmatprep.mubr.f32.mxu0 0.0
    %2605 = vmatmul.mubr.f32.gmra.mxu0 %v2538
    %v2606 = vpop.f32.mrf.mxu0
    %v2607 = vadd.f32 0.0, %v2606
    %v2608 = vpop.f32.mrf.mxu0
    %2609 = vdwg.mxu0
    %v2610 = vrcp.pop %v2456
    %v2611 = vmul.f32 %v2531, %v2610
    %v2612 = vrcp.pop %v2457
    %v2613 = vmul.f32 %v2607, %v2612
    %2614 = vrot.lane.b32.xlu0 %v2262, 120
    %v2615 = vpop.permute.xlu0 %2614
    %2616 = vrot.lane.b32.xlu0 %v2262, 88
    %v2617 = vpop.permute.xlu0 %2616
    %v2618 = vsel %vm371, %v2615, 0
    %v2620 = vsel %vm371, %v2617, 0
    %2622 = vmatprep.subr.mxu0 0.0
    %2623 = vmatpush1.xpose.msra.mxu0 0.0
    %2624 = vmatprep.subr.mxu0 0.0
    %2625 = vmatpush1.xpose.msra.mxu0 0.0
    %2626 = vmatprep.subr.mxu0 0.0
    %2627 = vmatpush1.xpose.msra.mxu0 0.0
    %2628 = vmatprep.subr.mxu0 0.0
    %2629 = vmatpush1.xpose.msra.mxu0 0.0
    %2630 = vmatprep.subr.mxu0 0.0
    %2631 = vmatpush1.xpose.msra.mxu0 0.0
    %2632 = vmatprep.subr.mxu0 0.0
    %2633 = vmatpush1.xpose.msra.mxu0 0.0
    %2634 = vmatprep.subr.mxu0 0.0
    %2635 = vmatpush1.xpose.msra.mxu0 0.0
    %2636 = vmatprep.subr.mxu0 0.0
    %2637 = vmatpush1.xpose.msra.mxu0 0.0
    %2638 = vmatprep.subr.mxu0 0.0
    %2639 = vmatpush1.xpose.msra.mxu0 0.0
    %2640 = vmatprep.subr.mxu0 0.0
    %2641 = vmatpush1.xpose.msra.mxu0 0.0
    %2642 = vmatprep.subr.mxu0 0.0
    %2643 = vmatpush1.xpose.msra.mxu0 0.0
    %2644 = vmatprep.subr.mxu0 0.0
    %2645 = vmatpush1.xpose.msra.mxu0 0.0
    %2646 = vmatprep.subr.mxu0 0.0
    %2647 = vmatpush1.xpose.msra.mxu0 0.0
    %2648 = vmatprep.subr.mxu0 0.0
    %2649 = vmatpush1.xpose.msra.mxu0 0.0
    %2650 = vmatprep.subr.mxu0 0.0
    %2651 = vmatpush1.xpose.msra.mxu0 0.0
    %2652 = vmatprep.subr.mxu0 0.0
    %2653 = vmatpush1.xpose.msra.mxu0 %v2620
    %2654 = vmatprep.subr.mxu0 0.0
    %2655 = vmatpush2.xpose.msra.mxu0 0.0
    %2656 = vmatprep.subr.mxu0 0.0
    %2657 = vmatpush2.xpose.msra.mxu0 0.0
    %2658 = vmatprep.subr.mxu0 0.0
    %2659 = vmatpush2.xpose.msra.mxu0 0.0
    %2660 = vmatprep.subr.mxu0 0.0
    %2661 = vmatpush2.xpose.msra.mxu0 0.0
    %2662 = vmatprep.subr.mxu0 0.0
    %2663 = vmatpush2.xpose.msra.mxu0 0.0
    %2664 = vmatprep.subr.mxu0 0.0
    %2665 = vmatpush2.xpose.msra.mxu0 0.0
    %2666 = vmatprep.subr.mxu0 0.0
    %2667 = vmatpush2.xpose.msra.mxu0 0.0
    %2668 = vmatprep.subr.mxu0 0.0
    %2669 = vmatpush2.xpose.msra.mxu0 0.0
    %2670 = vmatprep.subr.mxu0 0.0
    %2671 = vmatpush2.xpose.msra.mxu0 0.0
    %2672 = vmatprep.subr.mxu0 0.0
    %2673 = vmatpush2.xpose.msra.mxu0 0.0
    %2674 = vmatprep.subr.mxu0 0.0
    %2675 = vmatpush2.xpose.msra.mxu0 0.0
    %2676 = vmatprep.subr.mxu0 0.0
    %2677 = vmatpush2.xpose.msra.mxu0 0.0
    %2678 = vmatprep.subr.mxu0 0.0
    %2679 = vmatpush2.xpose.msra.mxu0 0.0
    %2680 = vmatprep.subr.mxu0 0.0
    %2681 = vmatpush2.xpose.msra.mxu0 0.0
    %2682 = vmatprep.subr.mxu0 0.0
    %2683 = vmatpush2.xpose.msra.mxu0 0.0
    %2684 = vmatprep.subr.mxu0 0.0
    %2685 = vmatpush2.xpose.msra.mxu0 0.0
    %2686 = vmatprep.mubr.f32.mxu0 0.0
    %2687 = vmatmul.mubr.f32.gmra.mxu0 %v2618
    %v2688 = vpop.f32.mrf.mxu0
    %v2689 = vadd.f32 0.0, %v2688
    %v2690 = vpop.f32.mrf.mxu0
    %2691 = vdwg.mxu0
    %2692 = vrot.lane.b32.xlu0 %v2267, 120
    %v2693 = vpop.permute.xlu0 %2692
    %2694 = vrot.lane.b32.xlu0 %v2267, 88
    %v2695 = vpop.permute.xlu0 %2694
    %v2696 = vsel %vm371, %v2693, 0
    %v2698 = vsel %vm371, %v2695, 0
    %2700 = vmatprep.subr.mxu0 0.0
    %2701 = vmatpush1.xpose.msra.mxu0 0.0
    %2702 = vmatprep.subr.mxu0 0.0
    %2703 = vmatpush1.xpose.msra.mxu0 0.0
    %2704 = vmatprep.subr.mxu0 0.0
    %2705 = vmatpush1.xpose.msra.mxu0 0.0
    %2706 = vmatprep.subr.mxu0 0.0
    %2707 = vmatpush1.xpose.msra.mxu0 0.0
    %2708 = vmatprep.subr.mxu0 0.0
    %2709 = vmatpush1.xpose.msra.mxu0 0.0
    %2710 = vmatprep.subr.mxu0 0.0
    %2711 = vmatpush1.xpose.msra.mxu0 0.0
    %2712 = vmatprep.subr.mxu0 0.0
    %2713 = vmatpush1.xpose.msra.mxu0 0.0
    %2714 = vmatprep.subr.mxu0 0.0
    %2715 = vmatpush1.xpose.msra.mxu0 0.0
    %2716 = vmatprep.subr.mxu0 0.0
    %2717 = vmatpush1.xpose.msra.mxu0 0.0
    %2718 = vmatprep.subr.mxu0 0.0
    %2719 = vmatpush1.xpose.msra.mxu0 0.0
    %2720 = vmatprep.subr.mxu0 0.0
    %2721 = vmatpush1.xpose.msra.mxu0 0.0
    %2722 = vmatprep.subr.mxu0 0.0
    %2723 = vmatpush1.xpose.msra.mxu0 0.0
    %2724 = vmatprep.subr.mxu0 0.0
    %2725 = vmatpush1.xpose.msra.mxu0 0.0
    %2726 = vmatprep.subr.mxu0 0.0
    %2727 = vmatpush1.xpose.msra.mxu0 0.0
    %2728 = vmatprep.subr.mxu0 0.0
    %2729 = vmatpush1.xpose.msra.mxu0 0.0
    %2730 = vmatprep.subr.mxu0 0.0
    %2731 = vmatpush1.xpose.msra.mxu0 %v2698
    %2732 = vmatprep.subr.mxu0 0.0
    %2733 = vmatpush2.xpose.msra.mxu0 0.0
    %2734 = vmatprep.subr.mxu0 0.0
    %2735 = vmatpush2.xpose.msra.mxu0 0.0
    %2736 = vmatprep.subr.mxu0 0.0
    %2737 = vmatpush2.xpose.msra.mxu0 0.0
    %2738 = vmatprep.subr.mxu0 0.0
    %2739 = vmatpush2.xpose.msra.mxu0 0.0
    %2740 = vmatprep.subr.mxu0 0.0
    %2741 = vmatpush2.xpose.msra.mxu0 0.0
    %2742 = vmatprep.subr.mxu0 0.0
    %2743 = vmatpush2.xpose.msra.mxu0 0.0
    %2744 = vmatprep.subr.mxu0 0.0
    %2745 = vmatpush2.xpose.msra.mxu0 0.0
    %2746 = vmatprep.subr.mxu0 0.0
    %2747 = vmatpush2.xpose.msra.mxu0 0.0
    %2748 = vmatprep.subr.mxu0 0.0
    %2749 = vmatpush2.xpose.msra.mxu0 0.0
    %2750 = vmatprep.subr.mxu0 0.0
    %2751 = vmatpush2.xpose.msra.mxu0 0.0
    %2752 = vmatprep.subr.mxu0 0.0
    %2753 = vmatpush2.xpose.msra.mxu0 0.0
    %2754 = vmatprep.subr.mxu0 0.0
    %2755 = vmatpush2.xpose.msra.mxu0 0.0
    %2756 = vmatprep.subr.mxu0 0.0
    %2757 = vmatpush2.xpose.msra.mxu0 0.0
    %2758 = vmatprep.subr.mxu0 0.0
    %2759 = vmatpush2.xpose.msra.mxu0 0.0
    %2760 = vmatprep.subr.mxu0 0.0
    %2761 = vmatpush2.xpose.msra.mxu0 0.0
    %2762 = vmatprep.subr.mxu0 0.0
    %2763 = vmatpush2.xpose.msra.mxu0 0.0
    %2764 = vmatprep.mubr.f32.mxu0 0.0
    %2765 = vmatmul.mubr.f32.gmra.mxu0 %v2696
    %v2766 = vpop.f32.mrf.mxu0
    %v2767 = vadd.f32 0.0, %v2766
    %v2768 = vpop.f32.mrf.mxu0
    %2769 = vdwg.mxu0
    %v2770 = vmul.f32 %v2689, 0.35355338
    %v2771 = vmul.f32 %v2767, 0.35355338
    %v2772 = vsel %vm527, %v2770, -1e+30
    %v2773 = vsel %vm527, %v2771, -1e+30
    %v2774 = vsel %vm371, %v2772, -inf
    %2775 = vmax.xlane.f32.xlu0 %v2774
    %v2776 = vpop.xlane.xlu0 %2775
    %v2777 = vsel %vm371, %v2773, -inf
    %2778 = vmax.xlane.f32.xlu0 %v2777
    %v2779 = vpop.xlane.xlu0 %2778
    %v2780 = vmax.f32 %v2776, 0.0
    %v2781 = vmax.f32 %v2779, 0.0
    %v2782 = vsub.f32 %v2772, %v2780
    %v2783 = vsub.f32 %v2773, %v2781
    %v2784 = vmul.f32 %v2782, 1.442695
    %v2785 = vpow.pop %v2784
    %v2786 = vmul.f32 %v2783, 1.442695
    %v2787 = vpow.pop %v2786
    %v2788 = vsel %vm371, %v2785, 0.0
    %2789 = vadd.xlane.f32.xlu0 %v2788
    %v2790 = vpop.xlane.xlu0 %2789
    %v2791 = vsel %vm371, %v2787, 0.0
    %2792 = vadd.xlane.f32.xlu0 %v2791
    %v2793 = vpop.xlane.xlu0 %2792
    %v2794 = vsub.f32 0.0, %v2780
    %v2795 = vsub.f32 0.0, %v2781
    %v2796 = vmul.f32 %v2794, 1.442695
    %v2797 = vpow.pop %v2796
    %v2798 = vmul.f32 %v2795, 1.442695
    %v2799 = vpow.pop %v2798
    %v2800 = vmul.f32 %v2797, 8.0
    %v2801 = vmul.f32 %v2799, 8.0
    %v2802 = vadd.f32 %v2790, %v2800
    %v2803 = vadd.f32 %v2793, %v2801
    %2804 = vrot.lane.b32.xlu0 %v2262, 56
    %v2805 = vpop.permute.xlu0 %2804
    %v2808 = vsel %vm371, %v2785, 0
    %2810 = vmatprep.subr.mxu0 0.0
    %2811 = vmatpush1.msra.mxu0 0.0
    %2812 = vmatprep.subr.mxu0 0.0
    %2813 = vmatpush1.msra.mxu0 0.0
    %2814 = vmatprep.subr.mxu0 0.0
    %2815 = vmatpush1.msra.mxu0 0.0
    %2816 = vmatprep.subr.mxu0 0.0
    %2817 = vmatpush1.msra.mxu0 0.0
    %2818 = vmatprep.subr.mxu0 0.0
    %2819 = vmatpush1.msra.mxu0 0.0
    %2820 = vmatprep.subr.mxu0 0.0
    %2821 = vmatpush1.msra.mxu0 0.0
    %2822 = vmatprep.subr.mxu0 0.0
    %2823 = vmatpush1.msra.mxu0 0.0
    %2824 = vmatprep.subr.mxu0 0.0
    %2825 = vmatpush1.msra.mxu0 0.0
    %2826 = vmatprep.subr.mxu0 0.0
    %2827 = vmatpush1.msra.mxu0 0.0
    %2828 = vmatprep.subr.mxu0 0.0
    %2829 = vmatpush1.msra.mxu0 0.0
    %2830 = vmatprep.subr.mxu0 0.0
    %2831 = vmatpush1.msra.mxu0 0.0
    %2832 = vmatprep.subr.mxu0 0.0
    %2833 = vmatpush1.msra.mxu0 0.0
    %2834 = vmatprep.subr.mxu0 0.0
    %2835 = vmatpush1.msra.mxu0 0.0
    %2836 = vmatprep.subr.mxu0 0.0
    %2837 = vmatpush1.msra.mxu0 0.0
    %2838 = vmatprep.subr.mxu0 0.0
    %2839 = vmatpush1.msra.mxu0 0.0
    %2840 = vmatprep.subr.mxu0 0.0
    %2841 = vmatpush1.msra.mxu0 %v2805
    %2842 = vmatprep.subr.mxu0 0.0
    %2843 = vmatpush2.msra.mxu0 0.0
    %2844 = vmatprep.subr.mxu0 0.0
    %2845 = vmatpush2.msra.mxu0 0.0
    %2846 = vmatprep.subr.mxu0 0.0
    %2847 = vmatpush2.msra.mxu0 0.0
    %2848 = vmatprep.subr.mxu0 0.0
    %2849 = vmatpush2.msra.mxu0 0.0
    %2850 = vmatprep.subr.mxu0 0.0
    %2851 = vmatpush2.msra.mxu0 0.0
    %2852 = vmatprep.subr.mxu0 0.0
    %2853 = vmatpush2.msra.mxu0 0.0
    %2854 = vmatprep.subr.mxu0 0.0
    %2855 = vmatpush2.msra.mxu0 0.0
    %2856 = vmatprep.subr.mxu0 0.0
    %2857 = vmatpush2.msra.mxu0 0.0
    %2858 = vmatprep.subr.mxu0 0.0
    %2859 = vmatpush2.msra.mxu0 0.0
    %2860 = vmatprep.subr.mxu0 0.0
    %2861 = vmatpush2.msra.mxu0 0.0
    %2862 = vmatprep.subr.mxu0 0.0
    %2863 = vmatpush2.msra.mxu0 0.0
    %2864 = vmatprep.subr.mxu0 0.0
    %2865 = vmatpush2.msra.mxu0 0.0
    %2866 = vmatprep.subr.mxu0 0.0
    %2867 = vmatpush2.msra.mxu0 0.0
    %2868 = vmatprep.subr.mxu0 0.0
    %2869 = vmatpush2.msra.mxu0 0.0
    %2870 = vmatprep.subr.mxu0 0.0
    %2871 = vmatpush2.msra.mxu0 0.0
    %2872 = vmatprep.subr.mxu0 0.0
    %2873 = vmatpush2.msra.mxu0 0.0
    %2874 = vmatprep.mubr.f32.mxu0 0.0
    %2875 = vmatmul.mubr.f32.gmra.mxu0 %v2808
    %v2876 = vpop.f32.mrf.mxu0
    %v2877 = vadd.f32 0.0, %v2876
    %v2878 = vpop.f32.mrf.mxu0
    %2879 = vdwg.mxu0
    %2880 = vrot.lane.b32.xlu0 %v2267, 56
    %v2881 = vpop.permute.xlu0 %2880
    %v2884 = vsel %vm371, %v2787, 0
    %2886 = vmatprep.subr.mxu0 0.0
    %2887 = vmatpush1.msra.mxu0 0.0
    %2888 = vmatprep.subr.mxu0 0.0
    %2889 = vmatpush1.msra.mxu0 0.0
    %2890 = vmatprep.subr.mxu0 0.0
    %2891 = vmatpush1.msra.mxu0 0.0
    %2892 = vmatprep.subr.mxu0 0.0
    %2893 = vmatpush1.msra.mxu0 0.0
    %2894 = vmatprep.subr.mxu0 0.0
    %2895 = vmatpush1.msra.mxu0 0.0
    %2896 = vmatprep.subr.mxu0 0.0
    %2897 = vmatpush1.msra.mxu0 0.0
    %2898 = vmatprep.subr.mxu0 0.0
    %2899 = vmatpush1.msra.mxu0 0.0
    %2900 = vmatprep.subr.mxu0 0.0
    %2901 = vmatpush1.msra.mxu0 0.0
    %2902 = vmatprep.subr.mxu0 0.0
    %2903 = vmatpush1.msra.mxu0 0.0
    %2904 = vmatprep.subr.mxu0 0.0
    %2905 = vmatpush1.msra.mxu0 0.0
    %2906 = vmatprep.subr.mxu0 0.0
    %2907 = vmatpush1.msra.mxu0 0.0
    %2908 = vmatprep.subr.mxu0 0.0
    %2909 = vmatpush1.msra.mxu0 0.0
    %2910 = vmatprep.subr.mxu0 0.0
    %2911 = vmatpush1.msra.mxu0 0.0
    %2912 = vmatprep.subr.mxu0 0.0
    %2913 = vmatpush1.msra.mxu0 0.0
    %2914 = vmatprep.subr.mxu0 0.0
    %2915 = vmatpush1.msra.mxu0 0.0
    %2916 = vmatprep.subr.mxu0 0.0
    %2917 = vmatpush1.msra.mxu0 %v2881
    %2918 = vmatprep.subr.mxu0 0.0
    %2919 = vmatpush2.msra.mxu0 0.0
    %2920 = vmatprep.subr.mxu0 0.0
    %2921 = vmatpush2.msra.mxu0 0.0
    %2922 = vmatprep.subr.mxu0 0.0
    %2923 = vmatpush2.msra.mxu0 0.0
    %2924 = vmatprep.subr.mxu0 0.0
    %2925 = vmatpush2.msra.mxu0 0.0
    %2926 = vmatprep.subr.mxu0 0.0
    %2927 = vmatpush2.msra.mxu0 0.0
    %2928 = vmatprep.subr.mxu0 0.0
    %2929 = vmatpush2.msra.mxu0 0.0
    %2930 = vmatprep.subr.mxu0 0.0
    %2931 = vmatpush2.msra.mxu0 0.0
    %2932 = vmatprep.subr.mxu0 0.0
    %2933 = vmatpush2.msra.mxu0 0.0
    %2934 = vmatprep.subr.mxu0 0.0
    %2935 = vmatpush2.msra.mxu0 0.0
    %2936 = vmatprep.subr.mxu0 0.0
    %2937 = vmatpush2.msra.mxu0 0.0
    %2938 = vmatprep.subr.mxu0 0.0
    %2939 = vmatpush2.msra.mxu0 0.0
    %2940 = vmatprep.subr.mxu0 0.0
    %2941 = vmatpush2.msra.mxu0 0.0
    %2942 = vmatprep.subr.mxu0 0.0
    %2943 = vmatpush2.msra.mxu0 0.0
    %2944 = vmatprep.subr.mxu0 0.0
    %2945 = vmatpush2.msra.mxu0 0.0
    %2946 = vmatprep.subr.mxu0 0.0
    %2947 = vmatpush2.msra.mxu0 0.0
    %2948 = vmatprep.subr.mxu0 0.0
    %2949 = vmatpush2.msra.mxu0 0.0
    %2950 = vmatprep.mubr.f32.mxu0 0.0
    %2951 = vmatmul.mubr.f32.gmra.mxu0 %v2884
    %v2952 = vpop.f32.mrf.mxu0
    %v2953 = vadd.f32 0.0, %v2952
    %v2954 = vpop.f32.mrf.mxu0
    %2955 = vdwg.mxu0
    %v2956 = vrcp.pop %v2802
    %v2957 = vmul.f32 %v2877, %v2956
    %v2958 = vrcp.pop %v2803
    %v2959 = vmul.f32 %v2953, %v2958
    %2960 = vrot.lane.b32.xlu0 %v2262, 112
    %v2961 = vpop.permute.xlu0 %2960
    %2962 = vrot.lane.b32.xlu0 %v2262, 80
    %v2963 = vpop.permute.xlu0 %2962
    %v2964 = vsel %vm371, %v2961, 0
    %v2966 = vsel %vm371, %v2963, 0
    %2968 = vmatprep.subr.mxu0 0.0
    %2969 = vmatpush1.xpose.msra.mxu0 0.0
    %2970 = vmatprep.subr.mxu0 0.0
    %2971 = vmatpush1.xpose.msra.mxu0 0.0
    %2972 = vmatprep.subr.mxu0 0.0
    %2973 = vmatpush1.xpose.msra.mxu0 0.0
    %2974 = vmatprep.subr.mxu0 0.0
    %2975 = vmatpush1.xpose.msra.mxu0 0.0
    %2976 = vmatprep.subr.mxu0 0.0
    %2977 = vmatpush1.xpose.msra.mxu0 0.0
    %2978 = vmatprep.subr.mxu0 0.0
    %2979 = vmatpush1.xpose.msra.mxu0 0.0
    %2980 = vmatprep.subr.mxu0 0.0
    %2981 = vmatpush1.xpose.msra.mxu0 0.0
    %2982 = vmatprep.subr.mxu0 0.0
    %2983 = vmatpush1.xpose.msra.mxu0 0.0
    %2984 = vmatprep.subr.mxu0 0.0
    %2985 = vmatpush1.xpose.msra.mxu0 0.0
    %2986 = vmatprep.subr.mxu0 0.0
    %2987 = vmatpush1.xpose.msra.mxu0 0.0
    %2988 = vmatprep.subr.mxu0 0.0
    %2989 = vmatpush1.xpose.msra.mxu0 0.0
    %2990 = vmatprep.subr.mxu0 0.0
    %2991 = vmatpush1.xpose.msra.mxu0 0.0
    %2992 = vmatprep.subr.mxu0 0.0
    %2993 = vmatpush1.xpose.msra.mxu0 0.0
    %2994 = vmatprep.subr.mxu0 0.0
    %2995 = vmatpush1.xpose.msra.mxu0 0.0
    %2996 = vmatprep.subr.mxu0 0.0
    %2997 = vmatpush1.xpose.msra.mxu0 0.0
    %2998 = vmatprep.subr.mxu0 0.0
    %2999 = vmatpush1.xpose.msra.mxu0 %v2966
    %3000 = vmatprep.subr.mxu0 0.0
    %3001 = vmatpush2.xpose.msra.mxu0 0.0
    %3002 = vmatprep.subr.mxu0 0.0
    %3003 = vmatpush2.xpose.msra.mxu0 0.0
    %3004 = vmatprep.subr.mxu0 0.0
    %3005 = vmatpush2.xpose.msra.mxu0 0.0
    %3006 = vmatprep.subr.mxu0 0.0
    %3007 = vmatpush2.xpose.msra.mxu0 0.0
    %3008 = vmatprep.subr.mxu0 0.0
    %3009 = vmatpush2.xpose.msra.mxu0 0.0
    %3010 = vmatprep.subr.mxu0 0.0
    %3011 = vmatpush2.xpose.msra.mxu0 0.0
    %3012 = vmatprep.subr.mxu0 0.0
    %3013 = vmatpush2.xpose.msra.mxu0 0.0
    %3014 = vmatprep.subr.mxu0 0.0
    %3015 = vmatpush2.xpose.msra.mxu0 0.0
    %3016 = vmatprep.subr.mxu0 0.0
    %3017 = vmatpush2.xpose.msra.mxu0 0.0
    %3018 = vmatprep.subr.mxu0 0.0
    %3019 = vmatpush2.xpose.msra.mxu0 0.0
    %3020 = vmatprep.subr.mxu0 0.0
    %3021 = vmatpush2.xpose.msra.mxu0 0.0
    %3022 = vmatprep.subr.mxu0 0.0
    %3023 = vmatpush2.xpose.msra.mxu0 0.0
    %3024 = vmatprep.subr.mxu0 0.0
    %3025 = vmatpush2.xpose.msra.mxu0 0.0
    %3026 = vmatprep.subr.mxu0 0.0
    %3027 = vmatpush2.xpose.msra.mxu0 0.0
    %3028 = vmatprep.subr.mxu0 0.0
    %3029 = vmatpush2.xpose.msra.mxu0 0.0
    %3030 = vmatprep.subr.mxu0 0.0
    %3031 = vmatpush2.xpose.msra.mxu0 0.0
    %3032 = vmatprep.mubr.f32.mxu0 0.0
    %3033 = vmatmul.mubr.f32.gmra.mxu0 %v2964
    %v3034 = vpop.f32.mrf.mxu0
    %v3035 = vadd.f32 0.0, %v3034
    %v3036 = vpop.f32.mrf.mxu0
    %3037 = vdwg.mxu0
    %3038 = vrot.lane.b32.xlu0 %v2267, 112
    %v3039 = vpop.permute.xlu0 %3038
    %3040 = vrot.lane.b32.xlu0 %v2267, 80
    %v3041 = vpop.permute.xlu0 %3040
    %v3042 = vsel %vm371, %v3039, 0
    %v3044 = vsel %vm371, %v3041, 0
    %3046 = vmatprep.subr.mxu0 0.0
    %3047 = vmatpush1.xpose.msra.mxu0 0.0
    %3048 = vmatprep.subr.mxu0 0.0
    %3049 = vmatpush1.xpose.msra.mxu0 0.0
    %3050 = vmatprep.subr.mxu0 0.0
    %3051 = vmatpush1.xpose.msra.mxu0 0.0
    %3052 = vmatprep.subr.mxu0 0.0
    %3053 = vmatpush1.xpose.msra.mxu0 0.0
    %3054 = vmatprep.subr.mxu0 0.0
    %3055 = vmatpush1.xpose.msra.mxu0 0.0
    %3056 = vmatprep.subr.mxu0 0.0
    %3057 = vmatpush1.xpose.msra.mxu0 0.0
    %3058 = vmatprep.subr.mxu0 0.0
    %3059 = vmatpush1.xpose.msra.mxu0 0.0
    %3060 = vmatprep.subr.mxu0 0.0
    %3061 = vmatpush1.xpose.msra.mxu0 0.0
    %3062 = vmatprep.subr.mxu0 0.0
    %3063 = vmatpush1.xpose.msra.mxu0 0.0
    %3064 = vmatprep.subr.mxu0 0.0
    %3065 = vmatpush1.xpose.msra.mxu0 0.0
    %3066 = vmatprep.subr.mxu0 0.0
    %3067 = vmatpush1.xpose.msra.mxu0 0.0
    %3068 = vmatprep.subr.mxu0 0.0
    %3069 = vmatpush1.xpose.msra.mxu0 0.0
    %3070 = vmatprep.subr.mxu0 0.0
    %3071 = vmatpush1.xpose.msra.mxu0 0.0
    %3072 = vmatprep.subr.mxu0 0.0
    %3073 = vmatpush1.xpose.msra.mxu0 0.0
    %3074 = vmatprep.subr.mxu0 0.0
    %3075 = vmatpush1.xpose.msra.mxu0 0.0
    %3076 = vmatprep.subr.mxu0 0.0
    %3077 = vmatpush1.xpose.msra.mxu0 %v3044
    %3078 = vmatprep.subr.mxu0 0.0
    %3079 = vmatpush2.xpose.msra.mxu0 0.0
    %3080 = vmatprep.subr.mxu0 0.0
    %3081 = vmatpush2.xpose.msra.mxu0 0.0
    %3082 = vmatprep.subr.mxu0 0.0
    %3083 = vmatpush2.xpose.msra.mxu0 0.0
    %3084 = vmatprep.subr.mxu0 0.0
    %3085 = vmatpush2.xpose.msra.mxu0 0.0
    %3086 = vmatprep.subr.mxu0 0.0
    %3087 = vmatpush2.xpose.msra.mxu0 0.0
    %3088 = vmatprep.subr.mxu0 0.0
    %3089 = vmatpush2.xpose.msra.mxu0 0.0
    %3090 = vmatprep.subr.mxu0 0.0
    %3091 = vmatpush2.xpose.msra.mxu0 0.0
    %3092 = vmatprep.subr.mxu0 0.0
    %3093 = vmatpush2.xpose.msra.mxu0 0.0
    %3094 = vmatprep.subr.mxu0 0.0
    %3095 = vmatpush2.xpose.msra.mxu0 0.0
    %3096 = vmatprep.subr.mxu0 0.0
    %3097 = vmatpush2.xpose.msra.mxu0 0.0
    %3098 = vmatprep.subr.mxu0 0.0
    %3099 = vmatpush2.xpose.msra.mxu0 0.0
    %3100 = vmatprep.subr.mxu0 0.0
    %3101 = vmatpush2.xpose.msra.mxu0 0.0
    %3102 = vmatprep.subr.mxu0 0.0
    %3103 = vmatpush2.xpose.msra.mxu0 0.0
    %3104 = vmatprep.subr.mxu0 0.0
    %3105 = vmatpush2.xpose.msra.mxu0 0.0
    %3106 = vmatprep.subr.mxu0 0.0
    %3107 = vmatpush2.xpose.msra.mxu0 0.0
    %3108 = vmatprep.subr.mxu0 0.0
    %3109 = vmatpush2.xpose.msra.mxu0 0.0
    %3110 = vmatprep.mubr.f32.mxu0 0.0
    %3111 = vmatmul.mubr.f32.gmra.mxu0 %v3042
    %v3112 = vpop.f32.mrf.mxu0
    %v3113 = vadd.f32 0.0, %v3112
    %v3114 = vpop.f32.mrf.mxu0
    %3115 = vdwg.mxu0
    %v3116 = vmul.f32 %v3035, 0.35355338
    %v3117 = vmul.f32 %v3113, 0.35355338
    %v3118 = vsel %vm527, %v3116, -1e+30
    %v3119 = vsel %vm527, %v3117, -1e+30
    %v3120 = vsel %vm371, %v3118, -inf
    %3121 = vmax.xlane.f32.xlu0 %v3120
    %v3122 = vpop.xlane.xlu0 %3121
    %v3123 = vsel %vm371, %v3119, -inf
    %3124 = vmax.xlane.f32.xlu0 %v3123
    %v3125 = vpop.xlane.xlu0 %3124
    %v3126 = vmax.f32 %v3122, 0.0
    %v3127 = vmax.f32 %v3125, 0.0
    %v3128 = vsub.f32 %v3118, %v3126
    %v3129 = vsub.f32 %v3119, %v3127
    %v3130 = vmul.f32 %v3128, 1.442695
    %v3131 = vpow.pop %v3130
    %v3132 = vmul.f32 %v3129, 1.442695
    %v3133 = vpow.pop %v3132
    %v3134 = vsel %vm371, %v3131, 0.0
    %3135 = vadd.xlane.f32.xlu0 %v3134
    %v3136 = vpop.xlane.xlu0 %3135
    %v3137 = vsel %vm371, %v3133, 0.0
    %3138 = vadd.xlane.f32.xlu0 %v3137
    %v3139 = vpop.xlane.xlu0 %3138
    %v3140 = vsub.f32 0.0, %v3126
    %v3141 = vsub.f32 0.0, %v3127
    %v3142 = vmul.f32 %v3140, 1.442695
    %v3143 = vpow.pop %v3142
    %v3144 = vmul.f32 %v3141, 1.442695
    %v3145 = vpow.pop %v3144
    %v3146 = vmul.f32 %v3143, 8.0
    %v3147 = vmul.f32 %v3145, 8.0
    %v3148 = vadd.f32 %v3136, %v3146
    %v3149 = vadd.f32 %v3139, %v3147
    %3150 = vrot.lane.b32.xlu0 %v2262, 48
    %v3151 = vpop.permute.xlu0 %3150
    %v3154 = vsel %vm371, %v3131, 0
    %3156 = vmatprep.subr.mxu0 0.0
    %3157 = vmatpush1.msra.mxu0 0.0
    %3158 = vmatprep.subr.mxu0 0.0
    %3159 = vmatpush1.msra.mxu0 0.0
    %3160 = vmatprep.subr.mxu0 0.0
    %3161 = vmatpush1.msra.mxu0 0.0
    %3162 = vmatprep.subr.mxu0 0.0
    %3163 = vmatpush1.msra.mxu0 0.0
    %3164 = vmatprep.subr.mxu0 0.0
    %3165 = vmatpush1.msra.mxu0 0.0
    %3166 = vmatprep.subr.mxu0 0.0
    %3167 = vmatpush1.msra.mxu0 0.0
    %3168 = vmatprep.subr.mxu0 0.0
    %3169 = vmatpush1.msra.mxu0 0.0
    %3170 = vmatprep.subr.mxu0 0.0
    %3171 = vmatpush1.msra.mxu0 0.0
    %3172 = vmatprep.subr.mxu0 0.0
    %3173 = vmatpush1.msra.mxu0 0.0
    %3174 = vmatprep.subr.mxu0 0.0
    %3175 = vmatpush1.msra.mxu0 0.0
    %3176 = vmatprep.subr.mxu0 0.0
    %3177 = vmatpush1.msra.mxu0 0.0
    %3178 = vmatprep.subr.mxu0 0.0
    %3179 = vmatpush1.msra.mxu0 0.0
    %3180 = vmatprep.subr.mxu0 0.0
    %3181 = vmatpush1.msra.mxu0 0.0
    %3182 = vmatprep.subr.mxu0 0.0
    %3183 = vmatpush1.msra.mxu0 0.0
    %3184 = vmatprep.subr.mxu0 0.0
    %3185 = vmatpush1.msra.mxu0 0.0
    %3186 = vmatprep.subr.mxu0 0.0
    %3187 = vmatpush1.msra.mxu0 %v3151
    %3188 = vmatprep.subr.mxu0 0.0
    %3189 = vmatpush2.msra.mxu0 0.0
    %3190 = vmatprep.subr.mxu0 0.0
    %3191 = vmatpush2.msra.mxu0 0.0
    %3192 = vmatprep.subr.mxu0 0.0
    %3193 = vmatpush2.msra.mxu0 0.0
    %3194 = vmatprep.subr.mxu0 0.0
    %3195 = vmatpush2.msra.mxu0 0.0
    %3196 = vmatprep.subr.mxu0 0.0
    %3197 = vmatpush2.msra.mxu0 0.0
    %3198 = vmatprep.subr.mxu0 0.0
    %3199 = vmatpush2.msra.mxu0 0.0
    %3200 = vmatprep.subr.mxu0 0.0
    %3201 = vmatpush2.msra.mxu0 0.0
    %3202 = vmatprep.subr.mxu0 0.0
    %3203 = vmatpush2.msra.mxu0 0.0
    %3204 = vmatprep.subr.mxu0 0.0
    %3205 = vmatpush2.msra.mxu0 0.0
    %3206 = vmatprep.subr.mxu0 0.0
    %3207 = vmatpush2.msra.mxu0 0.0
    %3208 = vmatprep.subr.mxu0 0.0
    %3209 = vmatpush2.msra.mxu0 0.0
    %3210 = vmatprep.subr.mxu0 0.0
    %3211 = vmatpush2.msra.mxu0 0.0
    %3212 = vmatprep.subr.mxu0 0.0
    %3213 = vmatpush2.msra.mxu0 0.0
    %3214 = vmatprep.subr.mxu0 0.0
    %3215 = vmatpush2.msra.mxu0 0.0
    %3216 = vmatprep.subr.mxu0 0.0
    %3217 = vmatpush2.msra.mxu0 0.0
    %3218 = vmatprep.subr.mxu0 0.0
    %3219 = vmatpush2.msra.mxu0 0.0
    %3220 = vmatprep.mubr.f32.mxu0 0.0
    %3221 = vmatmul.mubr.f32.gmra.mxu0 %v3154
    %v3222 = vpop.f32.mrf.mxu0
    %v3223 = vadd.f32 0.0, %v3222
    %v3224 = vpop.f32.mrf.mxu0
    %3225 = vdwg.mxu0
    %3226 = vrot.lane.b32.xlu0 %v2267, 48
    %v3227 = vpop.permute.xlu0 %3226
    %v3230 = vsel %vm371, %v3133, 0
    %3232 = vmatprep.subr.mxu0 0.0
    %3233 = vmatpush1.msra.mxu0 0.0
    %3234 = vmatprep.subr.mxu0 0.0
    %3235 = vmatpush1.msra.mxu0 0.0
    %3236 = vmatprep.subr.mxu0 0.0
    %3237 = vmatpush1.msra.mxu0 0.0
    %3238 = vmatprep.subr.mxu0 0.0
    %3239 = vmatpush1.msra.mxu0 0.0
    %3240 = vmatprep.subr.mxu0 0.0
    %3241 = vmatpush1.msra.mxu0 0.0
    %3242 = vmatprep.subr.mxu0 0.0
    %3243 = vmatpush1.msra.mxu0 0.0
    %3244 = vmatprep.subr.mxu0 0.0
    %3245 = vmatpush1.msra.mxu0 0.0
    %3246 = vmatprep.subr.mxu0 0.0
    %3247 = vmatpush1.msra.mxu0 0.0
    %3248 = vmatprep.subr.mxu0 0.0
    %3249 = vmatpush1.msra.mxu0 0.0
    %3250 = vmatprep.subr.mxu0 0.0
    %3251 = vmatpush1.msra.mxu0 0.0
    %3252 = vmatprep.subr.mxu0 0.0
    %3253 = vmatpush1.msra.mxu0 0.0
    %3254 = vmatprep.subr.mxu0 0.0
    %3255 = vmatpush1.msra.mxu0 0.0
    %3256 = vmatprep.subr.mxu0 0.0
    %3257 = vmatpush1.msra.mxu0 0.0
    %3258 = vmatprep.subr.mxu0 0.0
    %3259 = vmatpush1.msra.mxu0 0.0
    %3260 = vmatprep.subr.mxu0 0.0
    %3261 = vmatpush1.msra.mxu0 0.0
    %3262 = vmatprep.subr.mxu0 0.0
    %3263 = vmatpush1.msra.mxu0 %v3227
    %3264 = vmatprep.subr.mxu0 0.0
    %3265 = vmatpush2.msra.mxu0 0.0
    %3266 = vmatprep.subr.mxu0 0.0
    %3267 = vmatpush2.msra.mxu0 0.0
    %3268 = vmatprep.subr.mxu0 0.0
    %3269 = vmatpush2.msra.mxu0 0.0
    %3270 = vmatprep.subr.mxu0 0.0
    %3271 = vmatpush2.msra.mxu0 0.0
    %3272 = vmatprep.subr.mxu0 0.0
    %3273 = vmatpush2.msra.mxu0 0.0
    %3274 = vmatprep.subr.mxu0 0.0
    %3275 = vmatpush2.msra.mxu0 0.0
    %3276 = vmatprep.subr.mxu0 0.0
    %3277 = vmatpush2.msra.mxu0 0.0
    %3278 = vmatprep.subr.mxu0 0.0
    %3279 = vmatpush2.msra.mxu0 0.0
    %3280 = vmatprep.subr.mxu0 0.0
    %3281 = vmatpush2.msra.mxu0 0.0
    %3282 = vmatprep.subr.mxu0 0.0
    %3283 = vmatpush2.msra.mxu0 0.0
    %3284 = vmatprep.subr.mxu0 0.0
    %3285 = vmatpush2.msra.mxu0 0.0
    %3286 = vmatprep.subr.mxu0 0.0
    %3287 = vmatpush2.msra.mxu0 0.0
    %3288 = vmatprep.subr.mxu0 0.0
    %3289 = vmatpush2.msra.mxu0 0.0
    %3290 = vmatprep.subr.mxu0 0.0
    %3291 = vmatpush2.msra.mxu0 0.0
    %3292 = vmatprep.subr.mxu0 0.0
    %3293 = vmatpush2.msra.mxu0 0.0
    %3294 = vmatprep.subr.mxu0 0.0
    %3295 = vmatpush2.msra.mxu0 0.0
    %3296 = vmatprep.mubr.f32.mxu0 0.0
    %3297 = vmatmul.mubr.f32.gmra.mxu0 %v3230
    %v3298 = vpop.f32.mrf.mxu0
    %v3299 = vadd.f32 0.0, %v3298
    %v3300 = vpop.f32.mrf.mxu0
    %3301 = vdwg.mxu0
    %v3302 = vrcp.pop %v3148
    %v3303 = vmul.f32 %v3223, %v3302
    %v3304 = vrcp.pop %v3149
    %v3305 = vmul.f32 %v3299, %v3304
    %3306 = vrot.lane.b32.xlu0 %v2262, 104
    %v3307 = vpop.permute.xlu0 %3306
    %3308 = vrot.lane.b32.xlu0 %v2262, 72
    %v3309 = vpop.permute.xlu0 %3308
    %v3310 = vsel %vm371, %v3307, 0
    %v3312 = vsel %vm371, %v3309, 0
    %3314 = vmatprep.subr.mxu0 0.0
    %3315 = vmatpush1.xpose.msra.mxu0 0.0
    %3316 = vmatprep.subr.mxu0 0.0
    %3317 = vmatpush1.xpose.msra.mxu0 0.0
    %3318 = vmatprep.subr.mxu0 0.0
    %3319 = vmatpush1.xpose.msra.mxu0 0.0
    %3320 = vmatprep.subr.mxu0 0.0
    %3321 = vmatpush1.xpose.msra.mxu0 0.0
    %3322 = vmatprep.subr.mxu0 0.0
    %3323 = vmatpush1.xpose.msra.mxu0 0.0
    %3324 = vmatprep.subr.mxu0 0.0
    %3325 = vmatpush1.xpose.msra.mxu0 0.0
    %3326 = vmatprep.subr.mxu0 0.0
    %3327 = vmatpush1.xpose.msra.mxu0 0.0
    %3328 = vmatprep.subr.mxu0 0.0
    %3329 = vmatpush1.xpose.msra.mxu0 0.0
    %3330 = vmatprep.subr.mxu0 0.0
    %3331 = vmatpush1.xpose.msra.mxu0 0.0
    %3332 = vmatprep.subr.mxu0 0.0
    %3333 = vmatpush1.xpose.msra.mxu0 0.0
    %3334 = vmatprep.subr.mxu0 0.0
    %3335 = vmatpush1.xpose.msra.mxu0 0.0
    %3336 = vmatprep.subr.mxu0 0.0
    %3337 = vmatpush1.xpose.msra.mxu0 0.0
    %3338 = vmatprep.subr.mxu0 0.0
    %3339 = vmatpush1.xpose.msra.mxu0 0.0
    %3340 = vmatprep.subr.mxu0 0.0
    %3341 = vmatpush1.xpose.msra.mxu0 0.0
    %3342 = vmatprep.subr.mxu0 0.0
    %3343 = vmatpush1.xpose.msra.mxu0 0.0
    %3344 = vmatprep.subr.mxu0 0.0
    %3345 = vmatpush1.xpose.msra.mxu0 %v3312
    %3346 = vmatprep.subr.mxu0 0.0
    %3347 = vmatpush2.xpose.msra.mxu0 0.0
    %3348 = vmatprep.subr.mxu0 0.0
    %3349 = vmatpush2.xpose.msra.mxu0 0.0
    %3350 = vmatprep.subr.mxu0 0.0
    %3351 = vmatpush2.xpose.msra.mxu0 0.0
    %3352 = vmatprep.subr.mxu0 0.0
    %3353 = vmatpush2.xpose.msra.mxu0 0.0
    %3354 = vmatprep.subr.mxu0 0.0
    %3355 = vmatpush2.xpose.msra.mxu0 0.0
    %3356 = vmatprep.subr.mxu0 0.0
    %3357 = vmatpush2.xpose.msra.mxu0 0.0
    %3358 = vmatprep.subr.mxu0 0.0
    %3359 = vmatpush2.xpose.msra.mxu0 0.0
    %3360 = vmatprep.subr.mxu0 0.0
    %3361 = vmatpush2.xpose.msra.mxu0 0.0
    %3362 = vmatprep.subr.mxu0 0.0
    %3363 = vmatpush2.xpose.msra.mxu0 0.0
    %3364 = vmatprep.subr.mxu0 0.0
    %3365 = vmatpush2.xpose.msra.mxu0 0.0
    %3366 = vmatprep.subr.mxu0 0.0
    %3367 = vmatpush2.xpose.msra.mxu0 0.0
    %3368 = vmatprep.subr.mxu0 0.0
    %3369 = vmatpush2.xpose.msra.mxu0 0.0
    %3370 = vmatprep.subr.mxu0 0.0
    %3371 = vmatpush2.xpose.msra.mxu0 0.0
    %3372 = vmatprep.subr.mxu0 0.0
    %3373 = vmatpush2.xpose.msra.mxu0 0.0
    %3374 = vmatprep.subr.mxu0 0.0
    %3375 = vmatpush2.xpose.msra.mxu0 0.0
    %3376 = vmatprep.subr.mxu0 0.0
    %3377 = vmatpush2.xpose.msra.mxu0 0.0
    %3378 = vmatprep.mubr.f32.mxu0 0.0
    %3379 = vmatmul.mubr.f32.gmra.mxu0 %v3310
    %v3380 = vpop.f32.mrf.mxu0
    %v3381 = vadd.f32 0.0, %v3380
    %v3382 = vpop.f32.mrf.mxu0
    %3383 = vdwg.mxu0
    %3384 = vrot.lane.b32.xlu0 %v2267, 104
    %v3385 = vpop.permute.xlu0 %3384
    %3386 = vrot.lane.b32.xlu0 %v2267, 72
    %v3387 = vpop.permute.xlu0 %3386
    %v3388 = vsel %vm371, %v3385, 0
    %v3390 = vsel %vm371, %v3387, 0
    %3392 = vmatprep.subr.mxu0 0.0
    %3393 = vmatpush1.xpose.msra.mxu0 0.0
    %3394 = vmatprep.subr.mxu0 0.0
    %3395 = vmatpush1.xpose.msra.mxu0 0.0
    %3396 = vmatprep.subr.mxu0 0.0
    %3397 = vmatpush1.xpose.msra.mxu0 0.0
    %3398 = vmatprep.subr.mxu0 0.0
    %3399 = vmatpush1.xpose.msra.mxu0 0.0
    %3400 = vmatprep.subr.mxu0 0.0
    %3401 = vmatpush1.xpose.msra.mxu0 0.0
    %3402 = vmatprep.subr.mxu0 0.0
    %3403 = vmatpush1.xpose.msra.mxu0 0.0
    %3404 = vmatprep.subr.mxu0 0.0
    %3405 = vmatpush1.xpose.msra.mxu0 0.0
    %3406 = vmatprep.subr.mxu0 0.0
    %3407 = vmatpush1.xpose.msra.mxu0 0.0
    %3408 = vmatprep.subr.mxu0 0.0
    %3409 = vmatpush1.xpose.msra.mxu0 0.0
    %3410 = vmatprep.subr.mxu0 0.0
    %3411 = vmatpush1.xpose.msra.mxu0 0.0
    %3412 = vmatprep.subr.mxu0 0.0
    %3413 = vmatpush1.xpose.msra.mxu0 0.0
    %3414 = vmatprep.subr.mxu0 0.0
    %3415 = vmatpush1.xpose.msra.mxu0 0.0
    %3416 = vmatprep.subr.mxu0 0.0
    %3417 = vmatpush1.xpose.msra.mxu0 0.0
    %3418 = vmatprep.subr.mxu0 0.0
    %3419 = vmatpush1.xpose.msra.mxu0 0.0
    %3420 = vmatprep.subr.mxu0 0.0
    %3421 = vmatpush1.xpose.msra.mxu0 0.0
    %3422 = vmatprep.subr.mxu0 0.0
    %3423 = vmatpush1.xpose.msra.mxu0 %v3390
    %3424 = vmatprep.subr.mxu0 0.0
    %3425 = vmatpush2.xpose.msra.mxu0 0.0
    %3426 = vmatprep.subr.mxu0 0.0
    %3427 = vmatpush2.xpose.msra.mxu0 0.0
    %3428 = vmatprep.subr.mxu0 0.0
    %3429 = vmatpush2.xpose.msra.mxu0 0.0
    %3430 = vmatprep.subr.mxu0 0.0
    %3431 = vmatpush2.xpose.msra.mxu0 0.0
    %3432 = vmatprep.subr.mxu0 0.0
    %3433 = vmatpush2.xpose.msra.mxu0 0.0
    %3434 = vmatprep.subr.mxu0 0.0
    %3435 = vmatpush2.xpose.msra.mxu0 0.0
    %3436 = vmatprep.subr.mxu0 0.0
    %3437 = vmatpush2.xpose.msra.mxu0 0.0
    %3438 = vmatprep.subr.mxu0 0.0
    %3439 = vmatpush2.xpose.msra.mxu0 0.0
    %3440 = vmatprep.subr.mxu0 0.0
    %3441 = vmatpush2.xpose.msra.mxu0 0.0
    %3442 = vmatprep.subr.mxu0 0.0
    %3443 = vmatpush2.xpose.msra.mxu0 0.0
    %3444 = vmatprep.subr.mxu0 0.0
    %3445 = vmatpush2.xpose.msra.mxu0 0.0
    %3446 = vmatprep.subr.mxu0 0.0
    %3447 = vmatpush2.xpose.msra.mxu0 0.0
    %3448 = vmatprep.subr.mxu0 0.0
    %3449 = vmatpush2.xpose.msra.mxu0 0.0
    %3450 = vmatprep.subr.mxu0 0.0
    %3451 = vmatpush2.xpose.msra.mxu0 0.0
    %3452 = vmatprep.subr.mxu0 0.0
    %3453 = vmatpush2.xpose.msra.mxu0 0.0
    %3454 = vmatprep.subr.mxu0 0.0
    %3455 = vmatpush2.xpose.msra.mxu0 0.0
    %3456 = vmatprep.mubr.f32.mxu0 0.0
    %3457 = vmatmul.mubr.f32.gmra.mxu0 %v3388
    %v3458 = vpop.f32.mrf.mxu0
    %v3459 = vadd.f32 0.0, %v3458
    %v3460 = vpop.f32.mrf.mxu0
    %3461 = vdwg.mxu0
    %v3462 = vmul.f32 %v3381, 0.35355338
    %v3463 = vmul.f32 %v3459, 0.35355338
    %v3464 = vsel %vm527, %v3462, -1e+30
    %v3465 = vsel %vm527, %v3463, -1e+30
    %v3466 = vsel %vm371, %v3464, -inf
    %3467 = vmax.xlane.f32.xlu0 %v3466
    %v3468 = vpop.xlane.xlu0 %3467
    %v3469 = vsel %vm371, %v3465, -inf
    %3470 = vmax.xlane.f32.xlu0 %v3469
    %v3471 = vpop.xlane.xlu0 %3470
    %v3472 = vmax.f32 %v3468, 0.0
    %v3473 = vmax.f32 %v3471, 0.0
    %v3474 = vsub.f32 %v3464, %v3472
    %v3475 = vsub.f32 %v3465, %v3473
    %v3476 = vmul.f32 %v3474, 1.442695
    %v3477 = vpow.pop %v3476
    %v3478 = vmul.f32 %v3475, 1.442695
    %v3479 = vpow.pop %v3478
    %v3480 = vsel %vm371, %v3477, 0.0
    %3481 = vadd.xlane.f32.xlu0 %v3480
    %v3482 = vpop.xlane.xlu0 %3481
    %v3483 = vsel %vm371, %v3479, 0.0
    %3484 = vadd.xlane.f32.xlu0 %v3483
    %v3485 = vpop.xlane.xlu0 %3484
    %v3486 = vsub.f32 0.0, %v3472
    %v3487 = vsub.f32 0.0, %v3473
    %v3488 = vmul.f32 %v3486, 1.442695
    %v3489 = vpow.pop %v3488
    %v3490 = vmul.f32 %v3487, 1.442695
    %v3491 = vpow.pop %v3490
    %v3492 = vmul.f32 %v3489, 8.0
    %v3493 = vmul.f32 %v3491, 8.0
    %v3494 = vadd.f32 %v3482, %v3492
    %v3495 = vadd.f32 %v3485, %v3493
    %3496 = vrot.lane.b32.xlu0 %v2262, 40
    %v3497 = vpop.permute.xlu0 %3496
    %v3500 = vsel %vm371, %v3477, 0
    %3502 = vmatprep.subr.mxu0 0.0
    %3503 = vmatpush1.msra.mxu0 0.0
    %3504 = vmatprep.subr.mxu0 0.0
    %3505 = vmatpush1.msra.mxu0 0.0
    %3506 = vmatprep.subr.mxu0 0.0
    %3507 = vmatpush1.msra.mxu0 0.0
    %3508 = vmatprep.subr.mxu0 0.0
    %3509 = vmatpush1.msra.mxu0 0.0
    %3510 = vmatprep.subr.mxu0 0.0
    %3511 = vmatpush1.msra.mxu0 0.0
    %3512 = vmatprep.subr.mxu0 0.0
    %3513 = vmatpush1.msra.mxu0 0.0
    %3514 = vmatprep.subr.mxu0 0.0
    %3515 = vmatpush1.msra.mxu0 0.0
    %3516 = vmatprep.subr.mxu0 0.0
    %3517 = vmatpush1.msra.mxu0 0.0
    %3518 = vmatprep.subr.mxu0 0.0
    %3519 = vmatpush1.msra.mxu0 0.0
    %3520 = vmatprep.subr.mxu0 0.0
    %3521 = vmatpush1.msra.mxu0 0.0
    %3522 = vmatprep.subr.mxu0 0.0
    %3523 = vmatpush1.msra.mxu0 0.0
    %3524 = vmatprep.subr.mxu0 0.0
    %3525 = vmatpush1.msra.mxu0 0.0
    %3526 = vmatprep.subr.mxu0 0.0
    %3527 = vmatpush1.msra.mxu0 0.0
    %3528 = vmatprep.subr.mxu0 0.0
    %3529 = vmatpush1.msra.mxu0 0.0
    %3530 = vmatprep.subr.mxu0 0.0
    %3531 = vmatpush1.msra.mxu0 0.0
    %3532 = vmatprep.subr.mxu0 0.0
    %3533 = vmatpush1.msra.mxu0 %v3497
    %3534 = vmatprep.subr.mxu0 0.0
    %3535 = vmatpush2.msra.mxu0 0.0
    %3536 = vmatprep.subr.mxu0 0.0
    %3537 = vmatpush2.msra.mxu0 0.0
    %3538 = vmatprep.subr.mxu0 0.0
    %3539 = vmatpush2.msra.mxu0 0.0
    %3540 = vmatprep.subr.mxu0 0.0
    %3541 = vmatpush2.msra.mxu0 0.0
    %3542 = vmatprep.subr.mxu0 0.0
    %3543 = vmatpush2.msra.mxu0 0.0
    %3544 = vmatprep.subr.mxu0 0.0
    %3545 = vmatpush2.msra.mxu0 0.0
    %3546 = vmatprep.subr.mxu0 0.0
    %3547 = vmatpush2.msra.mxu0 0.0
    %3548 = vmatprep.subr.mxu0 0.0
    %3549 = vmatpush2.msra.mxu0 0.0
    %3550 = vmatprep.subr.mxu0 0.0
    %3551 = vmatpush2.msra.mxu0 0.0
    %3552 = vmatprep.subr.mxu0 0.0
    %3553 = vmatpush2.msra.mxu0 0.0
    %3554 = vmatprep.subr.mxu0 0.0
    %3555 = vmatpush2.msra.mxu0 0.0
    %3556 = vmatprep.subr.mxu0 0.0
    %3557 = vmatpush2.msra.mxu0 0.0
    %3558 = vmatprep.subr.mxu0 0.0
    %3559 = vmatpush2.msra.mxu0 0.0
    %3560 = vmatprep.subr.mxu0 0.0
    %3561 = vmatpush2.msra.mxu0 0.0
    %3562 = vmatprep.subr.mxu0 0.0
    %3563 = vmatpush2.msra.mxu0 0.0
    %3564 = vmatprep.subr.mxu0 0.0
    %3565 = vmatpush2.msra.mxu0 0.0
    %3566 = vmatprep.mubr.f32.mxu0 0.0
    %3567 = vmatmul.mubr.f32.gmra.mxu0 %v3500
    %v3568 = vpop.f32.mrf.mxu0
    %v3569 = vadd.f32 0.0, %v3568
    %v3570 = vpop.f32.mrf.mxu0
    %3571 = vdwg.mxu0
    %3572 = vrot.lane.b32.xlu0 %v2267, 40
    %v3573 = vpop.permute.xlu0 %3572
    %v3576 = vsel %vm371, %v3479, 0
    %3578 = vmatprep.subr.mxu0 0.0
    %3579 = vmatpush1.msra.mxu0 0.0
    %3580 = vmatprep.subr.mxu0 0.0
    %3581 = vmatpush1.msra.mxu0 0.0
    %3582 = vmatprep.subr.mxu0 0.0
    %3583 = vmatpush1.msra.mxu0 0.0
    %3584 = vmatprep.subr.mxu0 0.0
    %3585 = vmatpush1.msra.mxu0 0.0
    %3586 = vmatprep.subr.mxu0 0.0
    %3587 = vmatpush1.msra.mxu0 0.0
    %3588 = vmatprep.subr.mxu0 0.0
    %3589 = vmatpush1.msra.mxu0 0.0
    %3590 = vmatprep.subr.mxu0 0.0
    %3591 = vmatpush1.msra.mxu0 0.0
    %3592 = vmatprep.subr.mxu0 0.0
    %3593 = vmatpush1.msra.mxu0 0.0
    %3594 = vmatprep.subr.mxu0 0.0
    %3595 = vmatpush1.msra.mxu0 0.0
    %3596 = vmatprep.subr.mxu0 0.0
    %3597 = vmatpush1.msra.mxu0 0.0
    %3598 = vmatprep.subr.mxu0 0.0
    %3599 = vmatpush1.msra.mxu0 0.0
    %3600 = vmatprep.subr.mxu0 0.0
    %3601 = vmatpush1.msra.mxu0 0.0
    %3602 = vmatprep.subr.mxu0 0.0
    %3603 = vmatpush1.msra.mxu0 0.0
    %3604 = vmatprep.subr.mxu0 0.0
    %3605 = vmatpush1.msra.mxu0 0.0
    %3606 = vmatprep.subr.mxu0 0.0
    %3607 = vmatpush1.msra.mxu0 0.0
    %3608 = vmatprep.subr.mxu0 0.0
    %3609 = vmatpush1.msra.mxu0 %v3573
    %3610 = vmatprep.subr.mxu0 0.0
    %3611 = vmatpush2.msra.mxu0 0.0
    %3612 = vmatprep.subr.mxu0 0.0
    %3613 = vmatpush2.msra.mxu0 0.0
    %3614 = vmatprep.subr.mxu0 0.0
    %3615 = vmatpush2.msra.mxu0 0.0
    %3616 = vmatprep.subr.mxu0 0.0
    %3617 = vmatpush2.msra.mxu0 0.0
    %3618 = vmatprep.subr.mxu0 0.0
    %3619 = vmatpush2.msra.mxu0 0.0
    %3620 = vmatprep.subr.mxu0 0.0
    %3621 = vmatpush2.msra.mxu0 0.0
    %3622 = vmatprep.subr.mxu0 0.0
    %3623 = vmatpush2.msra.mxu0 0.0
    %3624 = vmatprep.subr.mxu0 0.0
    %3625 = vmatpush2.msra.mxu0 0.0
    %3626 = vmatprep.subr.mxu0 0.0
    %3627 = vmatpush2.msra.mxu0 0.0
    %3628 = vmatprep.subr.mxu0 0.0
    %3629 = vmatpush2.msra.mxu0 0.0
    %3630 = vmatprep.subr.mxu0 0.0
    %3631 = vmatpush2.msra.mxu0 0.0
    %3632 = vmatprep.subr.mxu0 0.0
    %3633 = vmatpush2.msra.mxu0 0.0
    %3634 = vmatprep.subr.mxu0 0.0
    %3635 = vmatpush2.msra.mxu0 0.0
    %3636 = vmatprep.subr.mxu0 0.0
    %3637 = vmatpush2.msra.mxu0 0.0
    %3638 = vmatprep.subr.mxu0 0.0
    %3639 = vmatpush2.msra.mxu0 0.0
    %3640 = vmatprep.subr.mxu0 0.0
    %3641 = vmatpush2.msra.mxu0 0.0
    %3642 = vmatprep.mubr.f32.mxu0 0.0
    %3643 = vmatmul.mubr.f32.gmra.mxu0 %v3576
    %v3644 = vpop.f32.mrf.mxu0
    %v3645 = vadd.f32 0.0, %v3644
    %v3646 = vpop.f32.mrf.mxu0
    %3647 = vdwg.mxu0
    %v3648 = vrcp.pop %v3494
    %v3649 = vmul.f32 %v3569, %v3648
    %v3650 = vrcp.pop %v3495
    %v3651 = vmul.f32 %v3645, %v3650
    %3654 = vrot.lane.b32.xlu0 %v2957, 8
    %v3655 = vpop.permute.xlu0 %3654
    %3656 = vrot.lane.b32.xlu0 %v2959, 8
    %v3657 = vpop.permute.xlu0 %3656
    %3662 = vrot.lane.b32.xlu0 %v3303, 16
    %v3663 = vpop.permute.xlu0 %3662
    %3664 = vrot.lane.b32.xlu0 %v3305, 16
    %v3665 = vpop.permute.xlu0 %3664
    %3670 = vrot.lane.b32.xlu0 %v3649, 24
    %v3671 = vpop.permute.xlu0 %3670
    %3672 = vrot.lane.b32.xlu0 %v3651, 24
    %v3673 = vpop.permute.xlu0 %3672
    %v3676 = vsel %vm371, %v2611, %v3655
    %v3677 = vsel %vm371, %v2613, %v3657
    %v3678 = vsel %vm1780, %v3676, %v3663
    %v3679 = vsel %vm1780, %v3677, %v3665
    %v3680 = vsel %vm1783, %v3678, %v3671
    %v3681 = vsel %vm1783, %v3679, %v3673
    %v3682 = vld [vmem:[%s39] sm:$0xff]
    %v3683 = vld [vmem:[%s39 + $0x8] sm:$0xff]
    %v3684 = vld [vmem:[%s39 + $0x10] sm:$0xff]
    %v3685 = vld [vmem:[%s39 + $0x18] sm:$0xff]
    %v3686 = vld [vmem:[%s41] sm:$0x1]
    %v3688 = vlaneseq
    %v3689 = vshrl.u32 %v3688, 7
    %v3690 = vsub.s32 0, %v3689
    %v3691 = vrot.slane %v3686, %v3690
    %v3694 = vsel %vm230, %v3680, 0
    %v3697 = vsel %vm230, %v3681, 0
    %3699 = vmatprep.subr.mxu0 0.0
    %3700 = vmatpush1.msra.mxu0 0.0
    %3701 = vmatprep.subr.mxu0 0.0
    %3702 = vmatpush1.msra.mxu0 0.0
    %3703 = vmatprep.subr.mxu0 0.0
    %3704 = vmatpush1.msra.mxu0 0.0
    %3705 = vmatprep.subr.mxu0 0.0
    %3706 = vmatpush1.msra.mxu0 0.0
    %3707 = vmatprep.subr.mxu0 0.0
    %3708 = vmatpush1.msra.mxu0 0.0
    %3709 = vmatprep.subr.mxu0 0.0
    %3710 = vmatpush1.msra.mxu0 0.0
    %3711 = vmatprep.subr.mxu0 0.0
    %3712 = vmatpush1.msra.mxu0 0.0
    %3713 = vmatprep.subr.mxu0 0.0
    %3714 = vmatpush1.msra.mxu0 0.0
    %3715 = vmatprep.subr.mxu0 0.0
    %3716 = vmatpush1.msra.mxu0 0.0
    %3717 = vmatprep.subr.mxu0 0.0
    %3718 = vmatpush1.msra.mxu0 0.0
    %3719 = vmatprep.subr.mxu0 0.0
    %3720 = vmatpush1.msra.mxu0 0.0
    %3721 = vmatprep.subr.mxu0 0.0
    %3722 = vmatpush1.msra.mxu0 0.0
    %3723 = vmatprep.subr.mxu0 0.0
    %3724 = vmatpush1.msra.mxu0 %v3685
    %3725 = vmatprep.subr.mxu0 0.0
    %3726 = vmatpush1.msra.mxu0 %v3684
    %3727 = vmatprep.subr.mxu0 0.0
    %3728 = vmatpush1.msra.mxu0 %v3683
    %3729 = vmatprep.subr.mxu0 0.0
    %3730 = vmatpush1.msra.mxu0 %v3682
    %3731 = vmatprep.subr.mxu0 0.0
    %3732 = vmatpush2.msra.mxu0 0.0
    %3733 = vmatprep.subr.mxu0 0.0
    %3734 = vmatpush2.msra.mxu0 0.0
    %3735 = vmatprep.subr.mxu0 0.0
    %3736 = vmatpush2.msra.mxu0 0.0
    %3737 = vmatprep.subr.mxu0 0.0
    %3738 = vmatpush2.msra.mxu0 0.0
    %3739 = vmatprep.subr.mxu0 0.0
    %3740 = vmatpush2.msra.mxu0 0.0
    %3741 = vmatprep.subr.mxu0 0.0
    %3742 = vmatpush2.msra.mxu0 0.0
    %3743 = vmatprep.subr.mxu0 0.0
    %3744 = vmatpush2.msra.mxu0 0.0
    %3745 = vmatprep.subr.mxu0 0.0
    %3746 = vmatpush2.msra.mxu0 0.0
    %3747 = vmatprep.subr.mxu0 0.0
    %3748 = vmatpush2.msra.mxu0 0.0
    %3749 = vmatprep.subr.mxu0 0.0
    %3750 = vmatpush2.msra.mxu0 0.0
    %3751 = vmatprep.subr.mxu0 0.0
    %3752 = vmatpush2.msra.mxu0 0.0
    %3753 = vmatprep.subr.mxu0 0.0
    %3754 = vmatpush2.msra.mxu0 0.0
    %3755 = vmatprep.subr.mxu0 0.0
    %3756 = vmatpush2.msra.mxu0 0.0
    %3757 = vmatprep.subr.mxu0 0.0
    %3758 = vmatpush2.msra.mxu0 0.0
    %3759 = vmatprep.subr.mxu0 0.0
    %3760 = vmatpush2.msra.mxu0 0.0
    %3761 = vmatprep.subr.mxu0 0.0
    %3762 = vmatpush2.msra.mxu0 0.0
    %3763 = vmatprep.mubr.f32.mxu0 0.0
    %3764 = vmatmul.mubr.f32.gmra.mxu0 %v3694
    %v3765 = vpop.f32.mrf.mxu0
    %v3766 = vadd.f32 %v3691, %v3765
    %v3767 = vpop.f32.mrf.mxu0
    %3768 = vmatprep.mubr.f32.mxu0 0.0
    %3769 = vmatmul.mubr.f32.gmra.mxu0 %v3697
    %v3770 = vpop.f32.mrf.mxu0
    %v3771 = vadd.f32 %v3691, %v3770
    %v3772 = vpop.f32.mrf.mxu0
    %3773 = vdwg.mxu0
    %v3774 = vadd.f32 %v2132, %v3766
    %v3775 = vadd.f32 %v2133, %v3771
    %v3776 = vsel %vm230, %v3774, 0.0
    %3777 = vadd.xlane.f32.xlu0 %v3776
    %v3778 = vpop.xlane.xlu0 %3777
    %v3779 = vsel %vm230, %v3775, 0.0
    %3780 = vadd.xlane.f32.xlu0 %v3779
    %v3781 = vpop.xlane.xlu0 %3780
    %v3782 = vmul.f32 %v3778, %v237
    %v3783 = vmul.f32 %v3781, %v237
    %v3784 = vsub.f32 %v3774, %v3782
    %v3785 = vsub.f32 %v3775, %v3783
    %v3786 = vmul.f32 %v3784, %v3784
    %v3787 = vmul.f32 %v3785, %v3785
    %v3788 = vsel %vm230, %v3786, 0.0
    %3789 = vadd.xlane.f32.xlu0 %v3788
    %v3790 = vpop.xlane.xlu0 %3789
    %v3791 = vsel %vm230, %v3787, 0.0
    %3792 = vadd.xlane.f32.xlu0 %v3791
    %v3793 = vpop.xlane.xlu0 %3792
    %v3794 = vmul.f32 %v3790, %v237
    %v3795 = vmul.f32 %v3793, %v237
    %v3796 = vadd.f32 %v3794, 1e-05
    %v3797 = vadd.f32 %v3795, 1e-05
    %v3798 = vrsqrt.pop %v3796
    %v3799 = vrsqrt.pop %v3797
    %v3800 = vmul.f32 %v3784, %v3798
    %v3801 = vmul.f32 %v3785, %v3799
    %v3802 = vld [vmem:[%s43] sm:$0x1]
    %v3804 = vlaneseq
    %v3805 = vshrl.u32 %v3804, 7
    %v3806 = vsub.s32 0, %v3805
    %v3807 = vrot.slane %v3802, %v3806
    %v3809 = vmul.f32 %v3800, %v3807
    %v3810 = vmul.f32 %v3801, %v3807
    %v3811 = vld [vmem:[%s45] sm:$0x1]
    %v3813 = vlaneseq
    %v3814 = vshrl.u32 %v3813, 7
    %v3815 = vsub.s32 0, %v3814
    %v3816 = vrot.slane %v3811, %v3815
    %v3818 = vadd.f32 %v3809, %v3816
    %v3819 = vadd.f32 %v3810, %v3816
    %v3820 = vld [vmem:[%s47] sm:$0xff]
    %v3821 = vld [vmem:[%s47 + $0x8] sm:$0xff]
    %v3822 = vld [vmem:[%s47 + $0x10] sm:$0xff]
    %v3823 = vld [vmem:[%s47 + $0x18] sm:$0xff]
    %v3824 = vld [vmem:[%s49] sm:$0x1]
    %v3826 = vlaneseq
    %v3827 = vshrl.u32 %v3826, 7
    %v3828 = vsub.s32 0, %v3827
    %v3829 = vrot.slane %v3824, %v3828
    %v3832 = vsel %vm230, %v3818, 0
    %v3835 = vsel %vm230, %v3819, 0
    %3837 = vmatprep.subr.mxu0 0.0
    %3838 = vmatpush1.msra.mxu0 0.0
    %3839 = vmatprep.subr.mxu0 0.0
    %3840 = vmatpush1.msra.mxu0 0.0
    %3841 = vmatprep.subr.mxu0 0.0
    %3842 = vmatpush1.msra.mxu0 0.0
    %3843 = vmatprep.subr.mxu0 0.0
    %3844 = vmatpush1.msra.mxu0 0.0
    %3845 = vmatprep.subr.mxu0 0.0
    %3846 = vmatpush1.msra.mxu0 0.0
    %3847 = vmatprep.subr.mxu0 0.0
    %3848 = vmatpush1.msra.mxu0 0.0
    %3849 = vmatprep.subr.mxu0 0.0
    %3850 = vmatpush1.msra.mxu0 0.0
    %3851 = vmatprep.subr.mxu0 0.0
    %3852 = vmatpush1.msra.mxu0 0.0
    %3853 = vmatprep.subr.mxu0 0.0
    %3854 = vmatpush1.msra.mxu0 0.0
    %3855 = vmatprep.subr.mxu0 0.0
    %3856 = vmatpush1.msra.mxu0 0.0
    %3857 = vmatprep.subr.mxu0 0.0
    %3858 = vmatpush1.msra.mxu0 0.0
    %3859 = vmatprep.subr.mxu0 0.0
    %3860 = vmatpush1.msra.mxu0 0.0
    %3861 = vmatprep.subr.mxu0 0.0
    %3862 = vmatpush1.msra.mxu0 %v3823
    %3863 = vmatprep.subr.mxu0 0.0
    %3864 = vmatpush1.msra.mxu0 %v3822
    %3865 = vmatprep.subr.mxu0 0.0
    %3866 = vmatpush1.msra.mxu0 %v3821
    %3867 = vmatprep.subr.mxu0 0.0
    %3868 = vmatpush1.msra.mxu0 %v3820
    %3869 = vmatprep.subr.mxu0 0.0
    %3870 = vmatpush2.msra.mxu0 0.0
    %3871 = vmatprep.subr.mxu0 0.0
    %3872 = vmatpush2.msra.mxu0 0.0
    %3873 = vmatprep.subr.mxu0 0.0
    %3874 = vmatpush2.msra.mxu0 0.0
    %3875 = vmatprep.subr.mxu0 0.0
    %3876 = vmatpush2.msra.mxu0 0.0
    %3877 = vmatprep.subr.mxu0 0.0
    %3878 = vmatpush2.msra.mxu0 0.0
    %3879 = vmatprep.subr.mxu0 0.0
    %3880 = vmatpush2.msra.mxu0 0.0
    %3881 = vmatprep.subr.mxu0 0.0
    %3882 = vmatpush2.msra.mxu0 0.0
    %3883 = vmatprep.subr.mxu0 0.0
    %3884 = vmatpush2.msra.mxu0 0.0
    %3885 = vmatprep.subr.mxu0 0.0
    %3886 = vmatpush2.msra.mxu0 0.0
    %3887 = vmatprep.subr.mxu0 0.0
    %3888 = vmatpush2.msra.mxu0 0.0
    %3889 = vmatprep.subr.mxu0 0.0
    %3890 = vmatpush2.msra.mxu0 0.0
    %3891 = vmatprep.subr.mxu0 0.0
    %3892 = vmatpush2.msra.mxu0 0.0
    %3893 = vmatprep.subr.mxu0 0.0
    %3894 = vmatpush2.msra.mxu0 0.0
    %3895 = vmatprep.subr.mxu0 0.0
    %3896 = vmatpush2.msra.mxu0 0.0
    %3897 = vmatprep.subr.mxu0 0.0
    %3898 = vmatpush2.msra.mxu0 0.0
    %3899 = vmatprep.subr.mxu0 0.0
    %3900 = vmatpush2.msra.mxu0 0.0
    %3901 = vmatprep.mubr.f32.mxu0 0.0
    %3902 = vmatmul.mubr.f32.gmra.mxu0 %v3832
    %v3903 = vpop.f32.mrf.mxu0
    %v3904 = vadd.f32 %v3829, %v3903
    %v3905 = vpop.f32.mrf.mxu0
    %3906 = vmatprep.mubr.f32.mxu0 0.0
    %3907 = vmatmul.mubr.f32.gmra.mxu0 %v3835
    %v3908 = vpop.f32.mrf.mxu0
    %v3909 = vadd.f32 %v3829, %v3908
    %v3910 = vpop.f32.mrf.mxu0
    %3911 = vdwg.mxu0
    %v3912 = vmul.f32 %v3904, 0.5
    %v3913 = vmul.f32 %v3909, 0.5
    %v3914 = vmul.f32 %v3904, 0.044715
    %v3915 = vmul.f32 %v3909, 0.044715
    %v3916 = vmul.f32 %v3914, %v3904
    %v3917 = vmul.f32 %v3915, %v3909
    %v3918 = vmul.f32 %v3916, %v3904
    %v3919 = vmul.f32 %v3917, %v3909
    %v3920 = vadd.f32 %v3904, %v3918
    %v3921 = vadd.f32 %v3909, %v3919
    %v3922 = vmul.f32 %v3920, 0.7978846
    %v3923 = vmul.f32 %v3921, 0.7978846
    %v3924 = vtanh.pop %v3922
    %v3925 = vtanh.pop %v3923
    %v3926 = vadd.f32 %v3924, 1.0
    %v3927 = vadd.f32 %v3925, 1.0
    %v3928 = vmul.f32 %v3912, %v3926
    %v3929 = vmul.f32 %v3913, %v3927
    %v3930 = vld [vmem:[%s51] sm:$0xff]
    %v3931 = vld [vmem:[%s51 + $0x8] sm:$0xff]
    %v3932 = vld [vmem:[%s51 + $0x10] sm:$0xff]
    %v3933 = vld [vmem:[%s51 + $0x18] sm:$0xff]
    %v3934 = vld [vmem:[%s51 + $0x20] sm:$0xff]
    %v3935 = vld [vmem:[%s51 + $0x28] sm:$0xff]
    %v3936 = vld [vmem:[%s51 + $0x30] sm:$0xff]
    %v3937 = vld [vmem:[%s51 + $0x38] sm:$0xff]
    %v3938 = vld [vmem:[%s51 + $0x40] sm:$0xff]
    %v3939 = vld [vmem:[%s51 + $0x48] sm:$0xff]
    %v3940 = vld [vmem:[%s51 + $0x50] sm:$0xff]
    %v3941 = vld [vmem:[%s51 + $0x58] sm:$0xff]
    %v3942 = vld [vmem:[%s51 + $0x60] sm:$0xff]
    %v3943 = vld [vmem:[%s51 + $0x68] sm:$0xff]
    %v3944 = vld [vmem:[%s51 + $0x70] sm:$0xff]
    %v3945 = vld [vmem:[%s51 + $0x78] sm:$0xff]
    %v3946 = vld [vmem:[%s53] sm:$0x1]
    %v3948 = vlaneseq
    %v3949 = vshrl.u32 %v3948, 7
    %v3950 = vsub.s32 0, %v3949
    %v3951 = vrot.slane %v3946, %v3950
    %3953 = vmatprep.subr.mxu0 0.0
    %3954 = vmatpush1.msra.mxu0 %v3945
    %3955 = vmatprep.subr.mxu0 0.0
    %3956 = vmatpush1.msra.mxu0 %v3944
    %3957 = vmatprep.subr.mxu0 0.0
    %3958 = vmatpush1.msra.mxu0 %v3943
    %3959 = vmatprep.subr.mxu0 0.0
    %3960 = vmatpush1.msra.mxu0 %v3942
    %3961 = vmatprep.subr.mxu0 0.0
    %3962 = vmatpush1.msra.mxu0 %v3941
    %3963 = vmatprep.subr.mxu0 0.0
    %3964 = vmatpush1.msra.mxu0 %v3940
    %3965 = vmatprep.subr.mxu0 0.0
    %3966 = vmatpush1.msra.mxu0 %v3939
    %3967 = vmatprep.subr.mxu0 0.0
    %3968 = vmatpush1.msra.mxu0 %v3938
    %3969 = vmatprep.subr.mxu0 0.0
    %3970 = vmatpush1.msra.mxu0 %v3937
    %3971 = vmatprep.subr.mxu0 0.0
    %3972 = vmatpush1.msra.mxu0 %v3936
    %3973 = vmatprep.subr.mxu0 0.0
    %3974 = vmatpush1.msra.mxu0 %v3935
    %3975 = vmatprep.subr.mxu0 0.0
    %3976 = vmatpush1.msra.mxu0 %v3934
    %3977 = vmatprep.subr.mxu0 0.0
    %3978 = vmatpush1.msra.mxu0 %v3933
    %3979 = vmatprep.subr.mxu0 0.0
    %3980 = vmatpush1.msra.mxu0 %v3932
    %3981 = vmatprep.subr.mxu0 0.0
    %3982 = vmatpush1.msra.mxu0 %v3931
    %3983 = vmatprep.subr.mxu0 0.0
    %3984 = vmatpush1.msra.mxu0 %v3930
    %3985 = vmatprep.subr.mxu0 0.0
    %3986 = vmatpush2.msra.mxu0 0.0
    %3987 = vmatprep.subr.mxu0 0.0
    %3988 = vmatpush2.msra.mxu0 0.0
    %3989 = vmatprep.subr.mxu0 0.0
    %3990 = vmatpush2.msra.mxu0 0.0
    %3991 = vmatprep.subr.mxu0 0.0
    %3992 = vmatpush2.msra.mxu0 0.0
    %3993 = vmatprep.subr.mxu0 0.0
    %3994 = vmatpush2.msra.mxu0 0.0
    %3995 = vmatprep.subr.mxu0 0.0
    %3996 = vmatpush2.msra.mxu0 0.0
    %3997 = vmatprep.subr.mxu0 0.0
    %3998 = vmatpush2.msra.mxu0 0.0
    %3999 = vmatprep.subr.mxu0 0.0
    %4000 = vmatpush2.msra.mxu0 0.0
    %4001 = vmatprep.subr.mxu0 0.0
    %4002 = vmatpush2.msra.mxu0 0.0
    %4003 = vmatprep.subr.mxu0 0.0
    %4004 = vmatpush2.msra.mxu0 0.0
    %4005 = vmatprep.subr.mxu0 0.0
    %4006 = vmatpush2.msra.mxu0 0.0
    %4007 = vmatprep.subr.mxu0 0.0
    %4008 = vmatpush2.msra.mxu0 0.0
    %4009 = vmatprep.subr.mxu0 0.0
    %4010 = vmatpush2.msra.mxu0 0.0
    %4011 = vmatprep.subr.mxu0 0.0
    %4012 = vmatpush2.msra.mxu0 0.0
    %4013 = vmatprep.subr.mxu0 0.0
    %4014 = vmatpush2.msra.mxu0 0.0
    %4015 = vmatprep.subr.mxu0 0.0
    %4016 = vmatpush2.msra.mxu0 0.0
    %4017 = vmatprep.mubr.f32.mxu0 0.0
    %4018 = vmatmul.mubr.f32.gmra.mxu0 %v3928
    %v4019 = vpop.f32.mrf.mxu0
    %v4020 = vadd.f32 %v3951, %v4019
    %v4021 = vpop.f32.mrf.mxu0
    %4022 = vmatprep.mubr.f32.mxu0 0.0
    %4023 = vmatmul.mubr.f32.gmra.mxu0 %v3929
    %v4024 = vpop.f32.mrf.mxu0
    %v4025 = vadd.f32 %v3951, %v4024
    %v4026 = vpop.f32.mrf.mxu0
    %4027 = vdwg.mxu0
    %v4028 = vadd.f32 %v3774, %v4020
    %v4029 = vadd.f32 %v3775, %v4025
    %v4030 = vsel %vm230, %v4028, 0.0
    %4031 = vadd.xlane.f32.xlu0 %v4030
    %v4032 = vpop.xlane.xlu0 %4031
    %v4033 = vsel %vm230, %v4029, 0.0
    %4034 = vadd.xlane.f32.xlu0 %v4033
    %v4035 = vpop.xlane.xlu0 %4034
    %v4036 = vmul.f32 %v4032, %v237
    %v4037 = vmul.f32 %v4035, %v237
    %v4038 = vsub.f32 %v4028, %v4036
    %v4039 = vsub.f32 %v4029, %v4037
    %v4040 = vmul.f32 %v4038, %v4038
    %v4041 = vmul.f32 %v4039, %v4039
    %v4042 = vsel %vm230, %v4040, 0.0
    %4043 = vadd.xlane.f32.xlu0 %v4042
    %v4044 = vpop.xlane.xlu0 %4043
    %v4045 = vsel %vm230, %v4041, 0.0
    %4046 = vadd.xlane.f32.xlu0 %v4045
    %v4047 = vpop.xlane.xlu0 %4046
    %v4048 = vmul.f32 %v4044, %v237
    %v4049 = vmul.f32 %v4047, %v237
    %v4050 = vadd.f32 %v4048, 1e-05
    %v4051 = vadd.f32 %v4049, 1e-05
    %v4052 = vrsqrt.pop %v4050
    %v4053 = vrsqrt.pop %v4051
    %v4054 = vmul.f32 %v4038, %v4052
    %v4055 = vmul.f32 %v4039, %v4053
    %v4056 = vld [vmem:[%s55] sm:$0x1]
    %v4058 = vlaneseq
    %v4059 = vshrl.u32 %v4058, 7
    %v4060 = vsub.s32 0, %v4059
    %v4061 = vrot.slane %v4056, %v4060
    %v4063 = vmul.f32 %v4054, %v4061
    %v4064 = vmul.f32 %v4055, %v4061
    %v4065 = vld [vmem:[%s57] sm:$0x1]
    %v4067 = vlaneseq
    %v4068 = vshrl.u32 %v4067, 7
    %v4069 = vsub.s32 0, %v4068
    %v4070 = vrot.slane %v4065, %v4069
    %v4072 = vadd.f32 %v4063, %v4070
    %v4073 = vadd.f32 %v4064, %v4070
    %v4074 = vld [vmem:[%s3] sm:$0xff]
    %v4075 = vld [vmem:[%s3 + $0x8] sm:$0xff]
    %v4076 = vld [vmem:[%s3 + $0x10] sm:$0xff]
    %v4077 = vld [vmem:[%s3 + $0x18] sm:$0xff]
    %v4078 = vld [vmem:[%s3 + $0x20] sm:$0xff]
    %v4079 = vld [vmem:[%s3 + $0x28] sm:$0xff]
    %v4080 = vld [vmem:[%s3 + $0x30] sm:$0xff]
    %v4081 = vld [vmem:[%s3 + $0x38] sm:$0xff]
    %v4083 = vsel %vm230, %v4072, 0
    %v4086 = vsel %vm230, %v4073, 0
    %v4089 = vsel %vm230, %v4074, 0
    %v4092 = vsel %vm230, %v4075, 0
    %v4095 = vsel %vm230, %v4076, 0
    %v4098 = vsel %vm230, %v4077, 0
    %v4101 = vsel %vm230, %v4078, 0
    %v4104 = vsel %vm230, %v4079, 0
    %v4107 = vsel %vm230, %v4080, 0
    %v4110 = vsel %vm230, %v4081, 0
    %4112 = vmatprep.subr.mxu0 0.0
    %4113 = vmatpush1.xpose.msra.mxu0 0.0
    %4114 = vmatprep.subr.mxu0 0.0
    %4115 = vmatpush1.xpose.msra.mxu0 0.0
    %4116 = vmatprep.subr.mxu0 0.0
    %4117 = vmatpush1.xpose.msra.mxu0 0.0
    %4118 = vmatprep.subr.mxu0 0.0
    %4119 = vmatpush1.xpose.msra.mxu0 0.0
    %4120 = vmatprep.subr.mxu0 0.0
    %4121 = vmatpush1.xpose.msra.mxu0 0.0
    %4122 = vmatprep.subr.mxu0 0.0
    %4123 = vmatpush1.xpose.msra.mxu0 0.0
    %4124 = vmatprep.subr.mxu0 0.0
    %4125 = vmatpush1.xpose.msra.mxu0 0.0
    %4126 = vmatprep.subr.mxu0 0.0
    %4127 = vmatpush1.xpose.msra.mxu0 0.0
    %4128 = vmatprep.subr.mxu0 0.0
    %4129 = vmatpush1.xpose.msra.mxu0 %v4110
    %4130 = vmatprep.subr.mxu0 0.0
    %4131 = vmatpush1.xpose.msra.mxu0 %v4107
    %4132 = vmatprep.subr.mxu0 0.0
    %4133 = vmatpush1.xpose.msra.mxu0 %v4104
    %4134 = vmatprep.subr.mxu0 0.0
    %4135 = vmatpush1.xpose.msra.mxu0 %v4101
    %4136 = vmatprep.subr.mxu0 0.0
    %4137 = vmatpush1.xpose.msra.mxu0 %v4098
    %4138 = vmatprep.subr.mxu0 0.0
    %4139 = vmatpush1.xpose.msra.mxu0 %v4095
    %4140 = vmatprep.subr.mxu0 0.0
    %4141 = vmatpush1.xpose.msra.mxu0 %v4092
    %4142 = vmatprep.subr.mxu0 0.0
    %4143 = vmatpush1.xpose.msra.mxu0 %v4089
    %4144 = vmatprep.subr.mxu0 0.0
    %4145 = vmatpush2.xpose.msra.mxu0 0.0
    %4146 = vmatprep.subr.mxu0 0.0
    %4147 = vmatpush2.xpose.msra.mxu0 0.0
    %4148 = vmatprep.subr.mxu0 0.0
    %4149 = vmatpush2.xpose.msra.mxu0 0.0
    %4150 = vmatprep.subr.mxu0 0.0
    %4151 = vmatpush2.xpose.msra.mxu0 0.0
    %4152 = vmatprep.subr.mxu0 0.0
    %4153 = vmatpush2.xpose.msra.mxu0 0.0
    %4154 = vmatprep.subr.mxu0 0.0
    %4155 = vmatpush2.xpose.msra.mxu0 0.0
    %4156 = vmatprep.subr.mxu0 0.0
    %4157 = vmatpush2.xpose.msra.mxu0 0.0
    %4158 = vmatprep.subr.mxu0 0.0
    %4159 = vmatpush2.xpose.msra.mxu0 0.0
    %4160 = vmatprep.subr.mxu0 0.0
    %4161 = vmatpush2.xpose.msra.mxu0 0.0
    %4162 = vmatprep.subr.mxu0 0.0
    %4163 = vmatpush2.xpose.msra.mxu0 0.0
    %4164 = vmatprep.subr.mxu0 0.0
    %4165 = vmatpush2.xpose.msra.mxu0 0.0
    %4166 = vmatprep.subr.mxu0 0.0
    %4167 = vmatpush2.xpose.msra.mxu0 0.0
    %4168 = vmatprep.subr.mxu0 0.0
    %4169 = vmatpush2.xpose.msra.mxu0 0.0
    %4170 = vmatprep.subr.mxu0 0.0
    %4171 = vmatpush2.xpose.msra.mxu0 0.0
    %4172 = vmatprep.subr.mxu0 0.0
    %4173 = vmatpush2.xpose.msra.mxu0 0.0
    %4174 = vmatprep.subr.mxu0 0.0
    %4175 = vmatpush2.xpose.msra.mxu0 0.0
    %4176 = vmatprep.mubr.f32.mxu0 0.0
    %4177 = vmatmul.mubr.f32.gmra.mxu0 %v4083
    %v4178 = vpop.f32.mrf.mxu0
    %v4179 = vadd.f32 0.0, %v4178
    %v4180 = vpop.f32.mrf.mxu0
    %4181 = vmatprep.mubr.f32.mxu0 0.0
    %4182 = vmatmul.mubr.f32.gmra.mxu0 %v4086
    %v4183 = vpop.f32.mrf.mxu0
    %v4184 = vadd.f32 0.0, %v4183
    %v4185 = vpop.f32.mrf.mxu0
    %4186 = vdwg.mxu0
    %4187 = vst.msk [vmem:[#allocation2] sm:$0xff] %vm148, %v4179
    %4188 = vst.msk [vmem:[#allocation2 + $0x8] sm:$0xff] %vm148, %v4184
    // Predicated region
    $region118: #{tpu_custom_call.1} parent=1 // pred_check
      _
    $region119: #{tpu_custom_call.1} parent=1 // pred_check_branch
      %4190 = sbr.rel (0) target = $region121
    $region120: #{tpu_custom_call.1} parent=1 // pred_region
      %s4192 = ssub.s32 256, 256
      %4193 = vsyncadd [#allocation3], %s4192
      %s4194 = sshll.u32 [#allocation2], 4
      %s4195 = int_to_ptr.vmem [resolvable:$true] %s4194
      %4200 = dma.vmem_to_hbm [thread:$0]  %s4195, 256, %s59, [#allocation3], 128, 128, 8
    $region121: #{tpu_custom_call.1} parent=1 // pred_fallthru
      _
    // Predicated region
    $region122: #{tpu_custom_call.1} parent=1 // pred_check
      _
    $region123: #{tpu_custom_call.1} parent=1 // pred_check_branch
      %4202 = sbr.rel (0) target = $region125
    $region124: #{tpu_custom_call.1} parent=1 // pred_region
      %4203 = dma.done [#allocation3], 256
    $region125: #{tpu_custom_call.1} parent=1 // pred_fallthru
      _
    %4204 = vsyncpa [#allocation3], 1

</llo_original>
